<compile_context>
chip_gen: v5e
topology: v5e:2x2
jax: 0.10.0
libtpu: 0.0.40
codegen_flags: <defaults>
</compile_context>

<pallas_src>
import jax
import jax.numpy as jnp
from jax import lax
from jax.experimental import pallas as pl
from jax.experimental.pallas import tpu as pltpu

EPS = 1e-5
F32 = jnp.float32
BF16 = jnp.bfloat16


def _round_up(x, m):
    return (x + m - 1) // m * m


def _tap_offsets(wp):
    """Flattened-spatial offsets of the 9 taps of a 3x3 conv on a Wp-wide grid."""
    return [(ky - 1) * wp + (kx - 1) for ky in range(3) for kx in range(3)]


# ------------------------ pass 1: conv1 + fused 1x1 shortcut ------------------
def _make_pass1(cin, cout, mg, wp, s1p, nb):
    taps = _tap_offsets(wp)

    def kernel(x_ref, w_ref, mrow_ref, y1_ref, s_ref, q_ref):
        # x_ref : (NB, Cin, S0P) bf16   margined, zero-padded input images
        # w_ref : (2*Cout, 9*Cin) bf16  [conv1 ; shortcut-in-center-tap] weights
        # mrow  : (1, S1P) f32          1.0 at true (non-pad) pixels
        # y1_ref: (NB, Cout, S1P) bf16  raw conv1 output (pre-BN)
        # s/q   : (2*Cout, 1) f32       batch sum / sum-sq [conv1 ; shortcut]
        @pl.when(pl.program_id(0) == 0)
        def _init():
            s_ref[...] = jnp.zeros_like(s_ref)
            q_ref[...] = jnp.zeros_like(q_ref)

        mrow = mrow_ref[...]
        for n in range(nb):
            acc = None
            for t, off in enumerate(taps):
                part = jnp.dot(w_ref[:, t * cin:(t + 1) * cin],
                               x_ref[n, :, mg + off: mg + off + s1p],
                               preferred_element_type=F32)
                acc = part if acc is None else acc + part
            masked = acc * mrow
            # TODO(synk): these reductions could move onto the idle MXU as
            # dot(acc, mask_col) once small-N matmul lowering is verified.
            s_ref[...] += jnp.sum(masked, axis=1, keepdims=True)
            q_ref[...] += jnp.sum(masked * acc, axis=1, keepdims=True)
            y1_ref[n] = acc[:cout].astype(BF16)

    return kernel


# ------------------------ pass 2: bn1 + relu + conv2 --------------------------
def _make_pass2(cout, mg, wp, sp, s1p, nb):
    taps = _tap_offsets(wp)

    def kernel(y1_ref, w2_ref, a1_ref, b1_ref, mrow1_ref, mrow2_ref,
               y2_ref, s_ref, q_ref, z_ref):
        # y1_ref : (NB, Cout, S1P) bf16   raw conv1 output
        # w2_ref : (Cout, 9*Cout) bf16    conv2 weights (HWIO-flattened)
        # a1/b1  : (Cout, 1) f32          fused BN1 scale / shift (batch stats)
        # mrow1  : (1, S1P) f32 ; mrow2 : (1, SP) f32  valid-pixel masks
        # y2_ref : (NB, Cout, SP) bf16    raw conv2 output (pre-BN)
        # s/q    : (Cout, 1) f32          BN2 stat accumulators
        # z_ref  : (Cout, S1P) bf16       scratch: relu(bn1(y1)), zero at pads
        @pl.when(pl.program_id(0) == 0)
        def _init():
            s_ref[...] = jnp.zeros_like(s_ref)
            q_ref[...] = jnp.zeros_like(q_ref)

        a1 = a1_ref[...]
        b1 = b1_ref[...]
        mrow1 = mrow1_ref[...]
        mrow2 = mrow2_ref[...]
        for n in range(nb):
            z = jnp.maximum(y1_ref[n].astype(F32) * a1 + b1, 0.0) * mrow1
            z_ref[...] = z.astype(BF16)
            acc = None
            for t, off in enumerate(taps):
                part = jnp.dot(w2_ref[:, t * cout:(t + 1) * cout],
                               z_ref[:, mg + off: mg + off + sp],
                               preferred_element_type=F32)
                acc = part if acc is None else acc + part
            masked = acc * mrow2
            s_ref[...] += jnp.sum(masked, axis=1, keepdims=True)
            q_ref[...] += jnp.sum(masked * acc, axis=1, keepdims=True)
            y2_ref[n] = acc.astype(BF16)

    return kernel


# -------------- pass 3: bn2 + recomputed shortcut + bn_sc + add + relu --------
def _make_pass3(mg, sp, nb):
    def kernel(y2_ref, x_ref, ws_ref, a2_ref, b2_ref, as_ref, bs_ref, out_ref):
        for n in range(nb):
            sc = jnp.dot(ws_ref[...], x_ref[n, :, 2 * mg: 2 * mg + sp],
                         preferred_element_type=F32)
            out = (y2_ref[n].astype(F32) * a2_ref[...] + b2_ref[...]
                   + sc * as_ref[...] + bs_ref[...])
            out_ref[n] = jnp.maximum(out, 0.0).astype(out_ref.dtype)

    return kernel


# --------------------------------- wrapper ------------------------------------
def _bn_affine(s, q, gamma, beta, count):
    mean = s / count
    var = q / count - mean * mean              # biased variance (training BN)
    scale = gamma * lax.rsqrt(var + EPS)
    return scale, beta - mean * scale


@jax.jit
def basic_block_forward(x_nchw, params):
    N, Cin, H, W = x_nchw.shape
    Cout = params["ws"].shape[0]
    Hp, Wp = H + 2, W + 2
    S = Hp * Wp                       # padded spatial extent (flattened)
    MG = Wp + 1                       # largest 3x3 tap shift
    SP = _round_up(S, 128)            # conv2-output / shortcut / output extent
    S1P = _round_up(SP + 2 * MG, 128)  # conv1-output / conv2-input extent
    S0P = _round_up(S1P + 2 * MG, 128)  # conv1-input extent
    count = N * H * W

    NB = 1                            # images per grid step (amortize overhead)
    for cand in (4, 2):
        if N % cand == 0:
            NB = cand
            break
    G = N // NB

    # glue: NCHW -> channel-major, flattened spatial, zero ring + lane-dense
    # margins.  TODO(synk): fold this pad into pass 1 with manual row DMAs.
    xp = jnp.pad(x_nchw, ((0, 0), (0, 0), (1, 1), (1, 1))).reshape(N, Cin, S)
    xp = jnp.pad(xp, ((0, 0), (0, 0), (2 * MG, S0P - 2 * MG - S))).astype(BF16)

    mrow1 = jnp.pad(
        jnp.pad(jnp.ones((H, W), F32), ((1, 1), (1, 1))).reshape(1, S),
        ((0, 0), (MG, S1P - MG - S)))                       # (1, S1P)
    mrow2 = mrow1[:, MG:MG + SP]                            # (1, SP)

    # weights: HWIO-flattened bf16; shortcut fused as extra output rows of w1.
    w1f = jnp.transpose(params["w1"], (0, 2, 3, 1)).reshape(Cout, 9 * Cin)
    wsf = params["ws"].reshape(Cout, Cin)
    ws_rows = jnp.zeros((Cout, 9 * Cin), F32).at[:, 4 * Cin:5 * Cin].set(wsf)
    w_fused = jnp.concatenate([w1f, ws_rows], axis=0).astype(BF16)
    w2f = (jnp.transpose(params["w2"], (0, 2, 3, 1))
           .reshape(Cout, 9 * Cout).astype(BF16))
    ws_b = wsf.astype(BF16)

    img = lambda C, L: pl.BlockSpec((NB, C, L), lambda i: (i, 0, 0))
    rep = lambda r, c: pl.BlockSpec((r, c), lambda i: (0, 0))
    arb = pltpu.CompilerParams(dimension_semantics=("arbitrary",))

    # ---- pass 1: conv1 + fused 1x1 shortcut + BN stats (batch-accumulated) --
    y1, s1q, q1q = pl.pallas_call(
        _make_pass1(Cin, Cout, MG, Wp, S1P, NB),
        grid=(G,),
        in_specs=[img(Cin, S0P), rep(2 * Cout, 9 * Cin), rep(1, S1P)],
        out_specs=[img(Cout, S1P), rep(2 * Cout, 1), rep(2 * Cout, 1)],
        out_shape=(jax.ShapeDtypeStruct((N, Cout, S1P), BF16),
                   jax.ShapeDtypeStruct((2 * Cout, 1), F32),
                   jax.ShapeDtypeStruct((2 * Cout, 1), F32)),
        compiler_params=arb,
        cost_estimate=pl.CostEstimate(
            flops=2 * N * 2 * Cout * 9 * Cin * S1P,
            transcendentals=0,
            bytes_accessed=2 * N * (Cin * S0P + Cout * S1P)),
    )(xp, w_fused, mrow1)

    gpar = lambda k: params[k].reshape(Cout, 1).astype(F32)
    a1, b1 = _bn_affine(s1q[:Cout], q1q[:Cout], gpar("g1"), gpar("b1"), count)
    as_, bs_ = _bn_affine(s1q[Cout:], q1q[Cout:], gpar("gs"), gpar("bs"), count)

    # ---- pass 2: bn1 + relu + conv2 + BN2 stats ------------------------------
    y2, s2, q2 = pl.pallas_call(
        _make_pass2(Cout, MG, Wp, SP, S1P, NB),
        grid=(G,),
        in_specs=[img(Cout, S1P), rep(Cout, 9 * Cout), rep(Cout, 1),
                  rep(Cout, 1), rep(1, S1P), rep(1, SP)],
        out_specs=[img(Cout, SP), rep(Cout, 1), rep(Cout, 1)],
        out_shape=(jax.ShapeDtypeStruct((N, Cout, SP), BF16),
                   jax.ShapeDtypeStruct((Cout, 1), F32),
                   jax.ShapeDtypeStruct((Cout, 1), F32)),
        scratch_shapes=[pltpu.VMEM((Cout, S1P), BF16)],
        compiler_params=arb,
        cost_estimate=pl.CostEstimate(
            flops=2 * N * Cout * 9 * Cout * SP,
            transcendentals=0,
            bytes_accessed=2 * N * Cout * (S1P + SP)),
    )(y1, w2f, a1, b1, mrow1, mrow2)

    a2, b2 = _bn_affine(s2, q2, gpar("g2"), gpar("b2"), count)

    # ---- pass 3: bn2 + recomputed shortcut + bn_sc + residual add + relu -----
    out = pl.pallas_call(
        _make_pass3(MG, SP, NB),
        grid=(G,),
        in_specs=[img(Cout, SP), img(Cin, S0P), rep(Cout, Cin)]
                 + [rep(Cout, 1)] * 4,
        out_specs=img(Cout, SP),
        out_shape=jax.ShapeDtypeStruct((N, Cout, SP), BF16),
        compiler_params=pltpu.CompilerParams(
            dimension_semantics=("parallel",)),
        cost_estimate=pl.CostEstimate(
            flops=2 * N * Cout * Cin * SP + 8 * N * Cout * SP,
            transcendentals=0,
            bytes_accessed=2 * N * (2 * Cout * SP + Cin * S0P)),
    )(y2, xp, ws_b, a2, b2, as_, bs_)

    # drop the lane padding and the zero ring; return f32 NCHW.
    out = out[:, :, :S].reshape(N, Cout, Hp, Wp)[:, :, 1:H + 1, 1:W + 1]
    return out.astype(F32)


# ------------------------- pure-JAX reference (NCHW) --------------------------
def _bn_ref(x, gamma, beta):
    mean = jnp.mean(x, axis=(0, 2, 3), keepdims=True)
    var = jnp.mean((x - mean) ** 2, axis=(0, 2, 3), keepdims=True)
    return ((x - mean) * lax.rsqrt(var + EPS)
            * gamma.reshape(1, -1, 1, 1) + beta.reshape(1, -1, 1, 1))


def _conv_ref(x, w_oihw, pad):
    return lax.conv_general_dilated(
        x, w_oihw, (1, 1), ((pad, pad), (pad, pad)),
        dimension_numbers=("NCHW", "OIHW", "NCHW"),
        precision=lax.Precision.HIGHEST)


def reference_forward(x, w1, w2, ws):
    Cout = w1.shape[0]
    g = jnp.ones((Cout,), jnp.float32)
    b = jnp.zeros((Cout,), jnp.float32)
    out = jax.nn.relu(_bn_ref(_conv_ref(x, w1, 1), g, b))
    out = _bn_ref(_conv_ref(out, w2, 1), g, b)
    out = out + _bn_ref(_conv_ref(x, ws, 0), g, b)
    return jax.nn.relu(out)


if __name__ == "__main__":
    key = jax.random.PRNGKey(0)
    N, Cin, H, W = 2, 4, 16, 16
    Cout = 8    # planes != in_planes -> 1x1-conv + BN shortcut path exercised

    ks = jax.random.split(key, 4)
    x = jax.random.normal(ks[0], (N, Cin, H, W), jnp.float32)      # NCHW
    w1 = 0.1 * jax.random.normal(ks[1], (Cout, Cin, 3, 3), jnp.float32)
    w2 = 0.1 * jax.random.normal(ks[2], (Cout, Cout, 3, 3), jnp.float32)
    ws = 0.1 * jax.random.normal(ks[3], (Cout, Cin, 1, 1), jnp.float32)

    params = dict(
        w1=w1, w2=w2, ws=ws,
        # nn.BatchNorm2d defaults: weight=1, bias=0 (training-mode batch stats)
        g1=jnp.ones((Cout,), jnp.float32), b1=jnp.zeros((Cout,), jnp.float32),
        g2=jnp.ones((Cout,), jnp.float32), b2=jnp.zeros((Cout,), jnp.float32),
        gs=jnp.ones((Cout,), jnp.float32), bs=jnp.zeros((Cout,), jnp.float32),
    )

    out = jax.block_until_ready(basic_block_forward(x, params))
    ref = reference_forward(x, w1, w2, ws)
    assert out.shape == ref.shape == (N, Cout, H, W)
    # Tolerance re-validated for bf16 weights + bf16 inter-pass activations
    # (one extra bf16 rounding vs the f32 HIGHEST-precision reference).
    err = float(jnp.max(jnp.abs(out - ref)))
    assert bool(jnp.allclose(out, ref, atol=3e-2, rtol=3e-2)), \
        f"mismatch vs JAX reference (max abs err {err})"

    print("KERNEL_OK")
</pallas_src>

<mosaic_0001>
module attributes {stable_mosaic.version = 11 : i64} {
  func.func @kernel(%arg0: i32, %arg1: memref<2x8x512xbf16, #tpu.memory_space<vmem>>, %arg2: memref<8x72xbf16, #tpu.memory_space<vmem>>, %arg3: memref<8x1xf32, #tpu.memory_space<vmem>>, %arg4: memref<8x1xf32, #tpu.memory_space<vmem>>, %arg5: memref<1x512xf32, #tpu.memory_space<vmem>>, %arg6: memref<1x384xf32, #tpu.memory_space<vmem>>, %arg7: memref<2x8x384xbf16, #tpu.memory_space<vmem>>, %arg8: memref<8x1xf32, #tpu.memory_space<vmem>>, %arg9: memref<8x1xf32, #tpu.memory_space<vmem>>, %arg10: memref<8x512xbf16, #tpu.memory_space<vmem>>) attributes {dimension_semantics = [#tpu.dimension_semantics<arbitrary>], iteration_bounds = array<i64: 1>, scalar_prefetch = 0 : i64, scratch_operands = 1 : i64, tpu.core_type = #tpu.core_type<tc>, window_params = [{transform_indices = @transform_0, window_bounds = array<i64: 2, 8, 512>}, {pipeline_mode = #tpu.pipeline_mode<synchronous>, transform_indices = @transform_1, window_bounds = array<i64: 8, 72>}, {pipeline_mode = #tpu.pipeline_mode<synchronous>, transform_indices = @transform_2, window_bounds = array<i64: 8, 1>}, {pipeline_mode = #tpu.pipeline_mode<synchronous>, transform_indices = @transform_3, window_bounds = array<i64: 8, 1>}, {pipeline_mode = #tpu.pipeline_mode<synchronous>, transform_indices = @transform_4, window_bounds = array<i64: 1, 512>}, {pipeline_mode = #tpu.pipeline_mode<synchronous>, transform_indices = @transform_5, window_bounds = array<i64: 1, 384>}, {transform_indices = @transform_6, window_bounds = array<i64: 2, 8, 384>}, {pipeline_mode = #tpu.pipeline_mode<synchronous>, transform_indices = @transform_7, window_bounds = array<i64: 8, 1>}, {pipeline_mode = #tpu.pipeline_mode<synchronous>, transform_indices = @transform_8, window_bounds = array<i64: 8, 1>}]} {
    %c0_i32 = arith.constant 0 : i32
    %0 = arith.cmpi eq, %arg0, %c0_i32 : i32
    %1 = arith.extui %0 : i1 to i32
    %c0_i32_0 = arith.constant 0 : i32
    %2 = arith.cmpi ne, %1, %c0_i32_0 : i32
    scf.if %2 {
      %cst_119 = arith.constant 0.000000e+00 : f32
      %137 = vector.broadcast %cst_119 : f32 to vector<8x1xf32>
      %c0_120 = arith.constant 0 : index
      %c0_121 = arith.constant 0 : index
      %138 = vector.load %arg8[%c0_120, %c0_121] : memref<8x1xf32, #tpu.memory_space<vmem>>, vector<8x1xf32>
      tpu.vector_store %arg8[%c0_120, %c0_121], %137 {strides = array<i32>} : memref<8x1xf32, #tpu.memory_space<vmem>>, vector<8x1xf32>,
      %cst_122 = arith.constant 0.000000e+00 : f32
      %139 = vector.broadcast %cst_122 : f32 to vector<8x1xf32>
      %c0_123 = arith.constant 0 : index
      %c0_124 = arith.constant 0 : index
      %140 = vector.load %arg9[%c0_123, %c0_124] : memref<8x1xf32, #tpu.memory_space<vmem>>, vector<8x1xf32>
      tpu.vector_store %arg9[%c0_123, %c0_124], %139 {strides = array<i32>} : memref<8x1xf32, #tpu.memory_space<vmem>>, vector<8x1xf32>,
    } else {
    }
    %c0 = arith.constant 0 : index
    %c0_1 = arith.constant 0 : index
    %3 = vector.load %arg3[%c0, %c0_1] : memref<8x1xf32, #tpu.memory_space<vmem>>, vector<8x1xf32>
    %c0_2 = arith.constant 0 : index
    %c0_3 = arith.constant 0 : index
    %4 = vector.load %arg4[%c0_2, %c0_3] : memref<8x1xf32, #tpu.memory_space<vmem>>, vector<8x1xf32>
    %c0_4 = arith.constant 0 : index
    %c0_5 = arith.constant 0 : index
    %5 = vector.load %arg5[%c0_4, %c0_5] : memref<1x512xf32, #tpu.memory_space<vmem>>, vector<1x512xf32>
    %c0_6 = arith.constant 0 : index
    %c0_7 = arith.constant 0 : index
    %6 = vector.load %arg6[%c0_6, %c0_7] : memref<1x384xf32, #tpu.memory_space<vmem>>, vector<1x384xf32>
    %c0_8 = arith.constant 0 : index
    %c0_9 = arith.constant 0 : index
    %c0_10 = arith.constant 0 : index
    %7 = vector.load %arg1[%c0_8, %c0_9, %c0_10] : memref<2x8x512xbf16, #tpu.memory_space<vmem>>, vector<1x8x512xbf16>
    %8 = vector.shape_cast %7 : vector<1x8x512xbf16> to vector<8x512xbf16>
    %9 = arith.extf %8 : vector<8x512xbf16> to vector<8x512xf32>
    %10 = vector.broadcast %3 : vector<8x1xf32> to vector<8x512xf32>
    %11 = arith.mulf %9, %10 : vector<8x512xf32>
    %12 = vector.broadcast %4 : vector<8x1xf32> to vector<8x512xf32>
    %13 = arith.addf %11, %12 : vector<8x512xf32>
    %cst = arith.constant 0.000000e+00 : f32
    %14 = vector.broadcast %cst : f32 to vector<8x512xf32>
    %15 = arith.maximumf %13, %14 : vector<8x512xf32>
    %16 = vector.broadcast %5 : vector<1x512xf32> to vector<8x512xf32>
    %17 = arith.mulf %15, %16 : vector<8x512xf32>
    %18 = arith.truncf %17 : vector<8x512xf32> to vector<8x512xbf16>
    %c0_11 = arith.constant 0 : index
    %c0_12 = arith.constant 0 : index
    %19 = vector.load %arg10[%c0_11, %c0_12] : memref<8x512xbf16, #tpu.memory_space<vmem>>, vector<8x512xbf16>
    tpu.vector_store %arg10[%c0_11, %c0_12], %18 {strides = array<i32>} : memref<8x512xbf16, #tpu.memory_space<vmem>>, vector<8x512xbf16>,
    %c0_13 = arith.constant 0 : index
    %c0_14 = arith.constant 0 : index
    %20 = vector.load %arg2[%c0_13, %c0_14] : memref<8x72xbf16, #tpu.memory_space<vmem>>, vector<8x8xbf16>
    %c0_15 = arith.constant 0 : index
    %c0_16 = arith.constant 0 : index
    %21 = vector.load %arg10[%c0_15, %c0_16] : memref<8x512xbf16, #tpu.memory_space<vmem>>, vector<8x384xbf16>
    %cst_17 = arith.constant dense<0.000000e+00> : vector<8x384xf32>
    %22 = tpu.matmul %20, %21, %cst_17 {dimension_numbers = #tpu.dot_dimension_numbers<[1], [0], [0], [1], [0, 0, 1, 1], [], []>} : vector<8x8xbf16>, vector<8x384xbf16>, vector<8x384xf32> -> vector<8x384xf32>
    %c0_18 = arith.constant 0 : index
    %c8 = arith.constant 8 : index
    %23 = vector.load %arg2[%c0_18, %c8] : memref<8x72xbf16, #tpu.memory_space<vmem>>, vector<8x8xbf16>
    %c0_19 = arith.constant 0 : index
    %c1 = arith.constant 1 : index
    %24 = vector.load %arg10[%c0_19, %c1] : memref<8x512xbf16, #tpu.memory_space<vmem>>, vector<8x384xbf16>
    %cst_20 = arith.constant dense<0.000000e+00> : vector<8x384xf32>
    %25 = tpu.matmul %23, %24, %cst_20 {dimension_numbers = #tpu.dot_dimension_numbers<[1], [0], [0], [1], [0, 0, 1, 1], [], []>} : vector<8x8xbf16>, vector<8x384xbf16>, vector<8x384xf32> -> vector<8x384xf32>
    %26 = arith.addf %22, %25 : vector<8x384xf32>
    %c0_21 = arith.constant 0 : index
    %c16 = arith.constant 16 : index
    %27 = vector.load %arg2[%c0_21, %c16] : memref<8x72xbf16, #tpu.memory_space<vmem>>, vector<8x8xbf16>
    %c0_22 = arith.constant 0 : index
    %c2 = arith.constant 2 : index
    %28 = vector.load %arg10[%c0_22, %c2] : memref<8x512xbf16, #tpu.memory_space<vmem>>, vector<8x384xbf16>
    %cst_23 = arith.constant dense<0.000000e+00> : vector<8x384xf32>
    %29 = tpu.matmul %27, %28, %cst_23 {dimension_numbers = #tpu.dot_dimension_numbers<[1], [0], [0], [1], [0, 0, 1, 1], [], []>} : vector<8x8xbf16>, vector<8x384xbf16>, vector<8x384xf32> -> vector<8x384xf32>
    %30 = arith.addf %26, %29 : vector<8x384xf32>
    %c0_24 = arith.constant 0 : index
    %c24 = arith.constant 24 : index
    %31 = vector.load %arg2[%c0_24, %c24] : memref<8x72xbf16, #tpu.memory_space<vmem>>, vector<8x8xbf16>
    %c0_25 = arith.constant 0 : index
    %c18 = arith.constant 18 : index
    %32 = vector.load %arg10[%c0_25, %c18] : memref<8x512xbf16, #tpu.memory_space<vmem>>, vector<8x384xbf16>
    %cst_26 = arith.constant dense<0.000000e+00> : vector<8x384xf32>
    %33 = tpu.matmul %31, %32, %cst_26 {dimension_numbers = #tpu.dot_dimension_numbers<[1], [0], [0], [1], [0, 0, 1, 1], [], []>} : vector<8x8xbf16>, vector<8x384xbf16>, vector<8x384xf32> -> vector<8x384xf32>
    %34 = arith.addf %30, %33 : vector<8x384xf32>
    %c0_27 = arith.constant 0 : index
    %c32 = arith.constant 32 : index
    %35 = vector.load %arg2[%c0_27, %c32] : memref<8x72xbf16, #tpu.memory_space<vmem>>, vector<8x8xbf16>
    %c0_28 = arith.constant 0 : index
    %c19 = arith.constant 19 : index
    %36 = vector.load %arg10[%c0_28, %c19] : memref<8x512xbf16, #tpu.memory_space<vmem>>, vector<8x384xbf16>
    %cst_29 = arith.constant dense<0.000000e+00> : vector<8x384xf32>
    %37 = tpu.matmul %35, %36, %cst_29 {dimension_numbers = #tpu.dot_dimension_numbers<[1], [0], [0], [1], [0, 0, 1, 1], [], []>} : vector<8x8xbf16>, vector<8x384xbf16>, vector<8x384xf32> -> vector<8x384xf32>
    %38 = arith.addf %34, %37 : vector<8x384xf32>
    %c0_30 = arith.constant 0 : index
    %c40 = arith.constant 40 : index
    %39 = vector.load %arg2[%c0_30, %c40] : memref<8x72xbf16, #tpu.memory_space<vmem>>, vector<8x8xbf16>
    %c0_31 = arith.constant 0 : index
    %c20 = arith.constant 20 : index
    %40 = vector.load %arg10[%c0_31, %c20] : memref<8x512xbf16, #tpu.memory_space<vmem>>, vector<8x384xbf16>
    %cst_32 = arith.constant dense<0.000000e+00> : vector<8x384xf32>
    %41 = tpu.matmul %39, %40, %cst_32 {dimension_numbers = #tpu.dot_dimension_numbers<[1], [0], [0], [1], [0, 0, 1, 1], [], []>} : vector<8x8xbf16>, vector<8x384xbf16>, vector<8x384xf32> -> vector<8x384xf32>
    %42 = arith.addf %38, %41 : vector<8x384xf32>
    %c0_33 = arith.constant 0 : index
    %c48 = arith.constant 48 : index
    %43 = vector.load %arg2[%c0_33, %c48] : memref<8x72xbf16, #tpu.memory_space<vmem>>, vector<8x8xbf16>
    %c0_34 = arith.constant 0 : index
    %c36 = arith.constant 36 : index
    %44 = vector.load %arg10[%c0_34, %c36] : memref<8x512xbf16, #tpu.memory_space<vmem>>, vector<8x384xbf16>
    %cst_35 = arith.constant dense<0.000000e+00> : vector<8x384xf32>
    %45 = tpu.matmul %43, %44, %cst_35 {dimension_numbers = #tpu.dot_dimension_numbers<[1], [0], [0], [1], [0, 0, 1, 1], [], []>} : vector<8x8xbf16>, vector<8x384xbf16>, vector<8x384xf32> -> vector<8x384xf32>
    %46 = arith.addf %42, %45 : vector<8x384xf32>
    %c0_36 = arith.constant 0 : index
    %c56 = arith.constant 56 : index
    %47 = vector.load %arg2[%c0_36, %c56] : memref<8x72xbf16, #tpu.memory_space<vmem>>, vector<8x8xbf16>
    %c0_37 = arith.constant 0 : index
    %c37 = arith.constant 37 : index
    %48 = vector.load %arg10[%c0_37, %c37] : memref<8x512xbf16, #tpu.memory_space<vmem>>, vector<8x384xbf16>
    %cst_38 = arith.constant dense<0.000000e+00> : vector<8x384xf32>
    %49 = tpu.matmul %47, %48, %cst_38 {dimension_numbers = #tpu.dot_dimension_numbers<[1], [0], [0], [1], [0, 0, 1, 1], [], []>} : vector<8x8xbf16>, vector<8x384xbf16>, vector<8x384xf32> -> vector<8x384xf32>
    %50 = arith.addf %46, %49 : vector<8x384xf32>
    %c0_39 = arith.constant 0 : index
    %c64 = arith.constant 64 : index
    %51 = vector.load %arg2[%c0_39, %c64] : memref<8x72xbf16, #tpu.memory_space<vmem>>, vector<8x8xbf16>
    %c0_40 = arith.constant 0 : index
    %c38 = arith.constant 38 : index
    %52 = vector.load %arg10[%c0_40, %c38] : memref<8x512xbf16, #tpu.memory_space<vmem>>, vector<8x384xbf16>
    %cst_41 = arith.constant dense<0.000000e+00> : vector<8x384xf32>
    %53 = tpu.matmul %51, %52, %cst_41 {dimension_numbers = #tpu.dot_dimension_numbers<[1], [0], [0], [1], [0, 0, 1, 1], [], []>} : vector<8x8xbf16>, vector<8x384xbf16>, vector<8x384xf32> -> vector<8x384xf32>
    %54 = arith.addf %50, %53 : vector<8x384xf32>
    %55 = vector.broadcast %6 : vector<1x384xf32> to vector<8x384xf32>
    %56 = arith.mulf %54, %55 : vector<8x384xf32>
    %c0_42 = arith.constant 0 : index
    %c0_43 = arith.constant 0 : index
    %57 = vector.load %arg8[%c0_42, %c0_43] : memref<8x1xf32, #tpu.memory_space<vmem>>, vector<8x1xf32>
    %cst_44 = arith.constant dense<0.000000e+00> : vector<8xf32>
    %58 = vector.multi_reduction <add>, %56, %cst_44 [1] : vector<8x384xf32> to vector<8xf32>
    %59 = vector.shape_cast %58 : vector<8xf32> to vector<8x1xf32>
    %60 = arith.addf %57, %59 : vector<8x1xf32>
    %c0_45 = arith.constant 0 : index
    %c0_46 = arith.constant 0 : index
    %61 = vector.load %arg8[%c0_45, %c0_46] : memref<8x1xf32, #tpu.memory_space<vmem>>, vector<8x1xf32>
    tpu.vector_store %arg8[%c0_45, %c0_46], %60 {strides = array<i32>} : memref<8x1xf32, #tpu.memory_space<vmem>>, vector<8x1xf32>,
    %c0_47 = arith.constant 0 : index
    %c0_48 = arith.constant 0 : index
    %62 = vector.load %arg9[%c0_47, %c0_48] : memref<8x1xf32, #tpu.memory_space<vmem>>, vector<8x1xf32>
    %63 = arith.mulf %56, %54 : vector<8x384xf32>
    %cst_49 = arith.constant dense<0.000000e+00> : vector<8xf32>
    %64 = vector.multi_reduction <add>, %63, %cst_49 [1] : vector<8x384xf32> to vector<8xf32>
    %65 = vector.shape_cast %64 : vector<8xf32> to vector<8x1xf32>
    %66 = arith.addf %62, %65 : vector<8x1xf32>
    %c0_50 = arith.constant 0 : index
    %c0_51 = arith.constant 0 : index
    %67 = vector.load %arg9[%c0_50, %c0_51] : memref<8x1xf32, #tpu.memory_space<vmem>>, vector<8x1xf32>
    tpu.vector_store %arg9[%c0_50, %c0_51], %66 {strides = array<i32>} : memref<8x1xf32, #tpu.memory_space<vmem>>, vector<8x1xf32>,
    %68 = arith.truncf %54 : vector<8x384xf32> to vector<8x384xbf16>
    %c0_52 = arith.constant 0 : index
    %c0_53 = arith.constant 0 : index
    %c0_54 = arith.constant 0 : index
    %69 = vector.load %arg7[%c0_52, %c0_53, %c0_54] : memref<2x8x384xbf16, #tpu.memory_space<vmem>>, vector<1x8x384xbf16>
    %70 = vector.shape_cast %69 : vector<1x8x384xbf16> to vector<8x384xbf16>
    %71 = vector.shape_cast %68 : vector<8x384xbf16> to vector<1x8x384xbf16>
    tpu.vector_store %arg7[%c0_52, %c0_53, %c0_54], %71 {strides = array<i32>} : memref<2x8x384xbf16, #tpu.memory_space<vmem>>, vector<1x8x384xbf16>,
    %c1_55 = arith.constant 1 : index
    %c0_56 = arith.constant 0 : index
    %c0_57 = arith.constant 0 : index
    %72 = vector.load %arg1[%c1_55, %c0_56, %c0_57] : memref<2x8x512xbf16, #tpu.memory_space<vmem>>, vector<1x8x512xbf16>
    %73 = vector.shape_cast %72 : vector<1x8x512xbf16> to vector<8x512xbf16>
    %74 = arith.extf %73 : vector<8x512xbf16> to vector<8x512xf32>
    %75 = vector.broadcast %3 : vector<8x1xf32> to vector<8x512xf32>
    %76 = arith.mulf %74, %75 : vector<8x512xf32>
    %77 = vector.broadcast %4 : vector<8x1xf32> to vector<8x512xf32>
    %78 = arith.addf %76, %77 : vector<8x512xf32>
    %cst_58 = arith.constant 0.000000e+00 : f32
    %79 = vector.broadcast %cst_58 : f32 to vector<8x512xf32>
    %80 = arith.maximumf %78, %79 : vector<8x512xf32>
    %81 = vector.broadcast %5 : vector<1x512xf32> to vector<8x512xf32>
    %82 = arith.mulf %80, %81 : vector<8x512xf32>
    %83 = arith.truncf %82 : vector<8x512xf32> to vector<8x512xbf16>
    %c0_59 = arith.constant 0 : index
    %c0_60 = arith.constant 0 : index
    %84 = vector.load %arg10[%c0_59, %c0_60] : memref<8x512xbf16, #tpu.memory_space<vmem>>, vector<8x512xbf16>
    tpu.vector_store %arg10[%c0_59, %c0_60], %83 {strides = array<i32>} : memref<8x512xbf16, #tpu.memory_space<vmem>>, vector<8x512xbf16>,
    %c0_61 = arith.constant 0 : index
    %c0_62 = arith.constant 0 : index
    %85 = vector.load %arg2[%c0_61, %c0_62] : memref<8x72xbf16, #tpu.memory_space<vmem>>, vector<8x8xbf16>
    %c0_63 = arith.constant 0 : index
    %c0_64 = arith.constant 0 : index
    %86 = vector.load %arg10[%c0_63, %c0_64] : memref<8x512xbf16, #tpu.memory_space<vmem>>, vector<8x384xbf16>
    %cst_65 = arith.constant dense<0.000000e+00> : vector<8x384xf32>
    %87 = tpu.matmul %85, %86, %cst_65 {dimension_numbers = #tpu.dot_dimension_numbers<[1], [0], [0], [1], [0, 0, 1, 1], [], []>} : vector<8x8xbf16>, vector<8x384xbf16>, vector<8x384xf32> -> vector<8x384xf32>
    %c0_66 = arith.constant 0 : index
    %c8_67 = arith.constant 8 : index
    %88 = vector.load %arg2[%c0_66, %c8_67] : memref<8x72xbf16, #tpu.memory_space<vmem>>, vector<8x8xbf16>
    %c0_68 = arith.constant 0 : index
    %c1_69 = arith.constant 1 : index
    %89 = vector.load %arg10[%c0_68, %c1_69] : memref<8x512xbf16, #tpu.memory_space<vmem>>, vector<8x384xbf16>
    %cst_70 = arith.constant dense<0.000000e+00> : vector<8x384xf32>
    %90 = tpu.matmul %88, %89, %cst_70 {dimension_numbers = #tpu.dot_dimension_numbers<[1], [0], [0], [1], [0, 0, 1, 1], [], []>} : vector<8x8xbf16>, vector<8x384xbf16>, vector<8x384xf32> -> vector<8x384xf32>
    %91 = arith.addf %87, %90 : vector<8x384xf32>
    %c0_71 = arith.constant 0 : index
    %c16_72 = arith.constant 16 : index
    %92 = vector.load %arg2[%c0_71, %c16_72] : memref<8x72xbf16, #tpu.memory_space<vmem>>, vector<8x8xbf16>
    %c0_73 = arith.constant 0 : index
    %c2_74 = arith.constant 2 : index
    %93 = vector.load %arg10[%c0_73, %c2_74] : memref<8x512xbf16, #tpu.memory_space<vmem>>, vector<8x384xbf16>
    %cst_75 = arith.constant dense<0.000000e+00> : vector<8x384xf32>
    %94 = tpu.matmul %92, %93, %cst_75 {dimension_numbers = #tpu.dot_dimension_numbers<[1], [0], [0], [1], [0, 0, 1, 1], [], []>} : vector<8x8xbf16>, vector<8x384xbf16>, vector<8x384xf32> -> vector<8x384xf32>
    %95 = arith.addf %91, %94 : vector<8x384xf32>
    %c0_76 = arith.constant 0 : index
    %c24_77 = arith.constant 24 : index
    %96 = vector.load %arg2[%c0_76, %c24_77] : memref<8x72xbf16, #tpu.memory_space<vmem>>, vector<8x8xbf16>
    %c0_78 = arith.constant 0 : index
    %c18_79 = arith.constant 18 : index
    %97 = vector.load %arg10[%c0_78, %c18_79] : memref<8x512xbf16, #tpu.memory_space<vmem>>, vector<8x384xbf16>
    %cst_80 = arith.constant dense<0.000000e+00> : vector<8x384xf32>
    %98 = tpu.matmul %96, %97, %cst_80 {dimension_numbers = #tpu.dot_dimension_numbers<[1], [0], [0], [1], [0, 0, 1, 1], [], []>} : vector<8x8xbf16>, vector<8x384xbf16>, vector<8x384xf32> -> vector<8x384xf32>
    %99 = arith.addf %95, %98 : vector<8x384xf32>
    %c0_81 = arith.constant 0 : index
    %c32_82 = arith.constant 32 : index
    %100 = vector.load %arg2[%c0_81, %c32_82] : memref<8x72xbf16, #tpu.memory_space<vmem>>, vector<8x8xbf16>
    %c0_83 = arith.constant 0 : index
    %c19_84 = arith.constant 19 : index
    %101 = vector.load %arg10[%c0_83, %c19_84] : memref<8x512xbf16, #tpu.memory_space<vmem>>, vector<8x384xbf16>
    %cst_85 = arith.constant dense<0.000000e+00> : vector<8x384xf32>
    %102 = tpu.matmul %100, %101, %cst_85 {dimension_numbers = #tpu.dot_dimension_numbers<[1], [0], [0], [1], [0, 0, 1, 1], [], []>} : vector<8x8xbf16>, vector<8x384xbf16>, vector<8x384xf32> -> vector<8x384xf32>
    %103 = arith.addf %99, %102 : vector<8x384xf32>
    %c0_86 = arith.constant 0 : index
    %c40_87 = arith.constant 40 : index
    %104 = vector.load %arg2[%c0_86, %c40_87] : memref<8x72xbf16, #tpu.memory_space<vmem>>, vector<8x8xbf16>
    %c0_88 = arith.constant 0 : index
    %c20_89 = arith.constant 20 : index
    %105 = vector.load %arg10[%c0_88, %c20_89] : memref<8x512xbf16, #tpu.memory_space<vmem>>, vector<8x384xbf16>
    %cst_90 = arith.constant dense<0.000000e+00> : vector<8x384xf32>
    %106 = tpu.matmul %104, %105, %cst_90 {dimension_numbers = #tpu.dot_dimension_numbers<[1], [0], [0], [1], [0, 0, 1, 1], [], []>} : vector<8x8xbf16>, vector<8x384xbf16>, vector<8x384xf32> -> vector<8x384xf32>
    %107 = arith.addf %103, %106 : vector<8x384xf32>
    %c0_91 = arith.constant 0 : index
    %c48_92 = arith.constant 48 : index
    %108 = vector.load %arg2[%c0_91, %c48_92] : memref<8x72xbf16, #tpu.memory_space<vmem>>, vector<8x8xbf16>
    %c0_93 = arith.constant 0 : index
    %c36_94 = arith.constant 36 : index
    %109 = vector.load %arg10[%c0_93, %c36_94] : memref<8x512xbf16, #tpu.memory_space<vmem>>, vector<8x384xbf16>
    %cst_95 = arith.constant dense<0.000000e+00> : vector<8x384xf32>
    %110 = tpu.matmul %108, %109, %cst_95 {dimension_numbers = #tpu.dot_dimension_numbers<[1], [0], [0], [1], [0, 0, 1, 1], [], []>} : vector<8x8xbf16>, vector<8x384xbf16>, vector<8x384xf32> -> vector<8x384xf32>
    %111 = arith.addf %107, %110 : vector<8x384xf32>
    %c0_96 = arith.constant 0 : index
    %c56_97 = arith.constant 56 : index
    %112 = vector.load %arg2[%c0_96, %c56_97] : memref<8x72xbf16, #tpu.memory_space<vmem>>, vector<8x8xbf16>
    %c0_98 = arith.constant 0 : index
    %c37_99 = arith.constant 37 : index
    %113 = vector.load %arg10[%c0_98, %c37_99] : memref<8x512xbf16, #tpu.memory_space<vmem>>, vector<8x384xbf16>
    %cst_100 = arith.constant dense<0.000000e+00> : vector<8x384xf32>
    %114 = tpu.matmul %112, %113, %cst_100 {dimension_numbers = #tpu.dot_dimension_numbers<[1], [0], [0], [1], [0, 0, 1, 1], [], []>} : vector<8x8xbf16>, vector<8x384xbf16>, vector<8x384xf32> -> vector<8x384xf32>
    %115 = arith.addf %111, %114 : vector<8x384xf32>
    %c0_101 = arith.constant 0 : index
    %c64_102 = arith.constant 64 : index
    %116 = vector.load %arg2[%c0_101, %c64_102] : memref<8x72xbf16, #tpu.memory_space<vmem>>, vector<8x8xbf16>
    %c0_103 = arith.constant 0 : index
    %c38_104 = arith.constant 38 : index
    %117 = vector.load %arg10[%c0_103, %c38_104] : memref<8x512xbf16, #tpu.memory_space<vmem>>, vector<8x384xbf16>
    %cst_105 = arith.constant dense<0.000000e+00> : vector<8x384xf32>
    %118 = tpu.matmul %116, %117, %cst_105 {dimension_numbers = #tpu.dot_dimension_numbers<[1], [0], [0], [1], [0, 0, 1, 1], [], []>} : vector<8x8xbf16>, vector<8x384xbf16>, vector<8x384xf32> -> vector<8x384xf32>
    %119 = arith.addf %115, %118 : vector<8x384xf32>
    %120 = vector.broadcast %6 : vector<1x384xf32> to vector<8x384xf32>
    %121 = arith.mulf %119, %120 : vector<8x384xf32>
    %c0_106 = arith.constant 0 : index
    %c0_107 = arith.constant 0 : index
    %122 = vector.load %arg8[%c0_106, %c0_107] : memref<8x1xf32, #tpu.memory_space<vmem>>, vector<8x1xf32>
    %cst_108 = arith.constant dense<0.000000e+00> : vector<8xf32>
    %123 = vector.multi_reduction <add>, %121, %cst_108 [1] : vector<8x384xf32> to vector<8xf32>
    %124 = vector.shape_cast %123 : vector<8xf32> to vector<8x1xf32>
    %125 = arith.addf %122, %124 : vector<8x1xf32>
    %c0_109 = arith.constant 0 : index
    %c0_110 = arith.constant 0 : index
    %126 = vector.load %arg8[%c0_109, %c0_110] : memref<8x1xf32, #tpu.memory_space<vmem>>, vector<8x1xf32>
    tpu.vector_store %arg8[%c0_109, %c0_110], %125 {strides = array<i32>} : memref<8x1xf32, #tpu.memory_space<vmem>>, vector<8x1xf32>,
    %c0_111 = arith.constant 0 : index
    %c0_112 = arith.constant 0 : index
    %127 = vector.load %arg9[%c0_111, %c0_112] : memref<8x1xf32, #tpu.memory_space<vmem>>, vector<8x1xf32>
    %128 = arith.mulf %121, %119 : vector<8x384xf32>
    %cst_113 = arith.constant dense<0.000000e+00> : vector<8xf32>
    %129 = vector.multi_reduction <add>, %128, %cst_113 [1] : vector<8x384xf32> to vector<8xf32>
    %130 = vector.shape_cast %129 : vector<8xf32> to vector<8x1xf32>
    %131 = arith.addf %127, %130 : vector<8x1xf32>
    %c0_114 = arith.constant 0 : index
    %c0_115 = arith.constant 0 : index
    %132 = vector.load %arg9[%c0_114, %c0_115] : memref<8x1xf32, #tpu.memory_space<vmem>>, vector<8x1xf32>
    tpu.vector_store %arg9[%c0_114, %c0_115], %131 {strides = array<i32>} : memref<8x1xf32, #tpu.memory_space<vmem>>, vector<8x1xf32>,
    %133 = arith.truncf %119 : vector<8x384xf32> to vector<8x384xbf16>
    %c1_116 = arith.constant 1 : index
    %c0_117 = arith.constant 0 : index
    %c0_118 = arith.constant 0 : index
    %134 = vector.load %arg7[%c1_116, %c0_117, %c0_118] : memref<2x8x384xbf16, #tpu.memory_space<vmem>>, vector<1x8x384xbf16>
    %135 = vector.shape_cast %134 : vector<1x8x384xbf16> to vector<8x384xbf16>
    %136 = vector.shape_cast %133 : vector<8x384xbf16> to vector<1x8x384xbf16>
    tpu.vector_store %arg7[%c1_116, %c0_117, %c0_118], %136 {strides = array<i32>} : memref<2x8x384xbf16, #tpu.memory_space<vmem>>, vector<1x8x384xbf16>,
    return
  }
  func.func @transform_0(%arg0: i32) -> (i32, i32, i32) {
    %c0_i32 = arith.constant 0 : i32
    %c0_i32_0 = arith.constant 0 : i32
    %c0_i32_1 = arith.constant 0 : i32
    return %arg0, %c0_i32, %c0_i32_0 : i32, i32, i32
  }
  func.func @transform_1(%arg0: i32) -> (i32, i32) {
    %c0_i32 = arith.constant 0 : i32
    %c0_i32_0 = arith.constant 0 : i32
    %c0_i32_1 = arith.constant 0 : i32
    return %c0_i32, %c0_i32_0 : i32, i32
  }
  func.func @transform_2(%arg0: i32) -> (i32, i32) {
    %c0_i32 = arith.constant 0 : i32
    %c0_i32_0 = arith.constant 0 : i32
    %c0_i32_1 = arith.constant 0 : i32
    return %c0_i32, %c0_i32_0 : i32, i32
  }
  func.func @transform_3(%arg0: i32) -> (i32, i32) {
    %c0_i32 = arith.constant 0 : i32
    %c0_i32_0 = arith.constant 0 : i32
    %c0_i32_1 = arith.constant 0 : i32
    return %c0_i32, %c0_i32_0 : i32, i32
  }
  func.func @transform_4(%arg0: i32) -> (i32, i32) {
    %c0_i32 = arith.constant 0 : i32
    %c0_i32_0 = arith.constant 0 : i32
    %c0_i32_1 = arith.constant 0 : i32
    return %c0_i32, %c0_i32_0 : i32, i32
  }
  func.func @transform_5(%arg0: i32) -> (i32, i32) {
    %c0_i32 = arith.constant 0 : i32
    %c0_i32_0 = arith.constant 0 : i32
    %c0_i32_1 = arith.constant 0 : i32
    return %c0_i32, %c0_i32_0 : i32, i32
  }
  func.func @transform_6(%arg0: i32) -> (i32, i32, i32) {
    %c0_i32 = arith.constant 0 : i32
    %c0_i32_0 = arith.constant 0 : i32
    %c0_i32_1 = arith.constant 0 : i32
    return %arg0, %c0_i32, %c0_i32_0 : i32, i32, i32
  }
  func.func @transform_7(%arg0: i32) -> (i32, i32) {
    %c0_i32 = arith.constant 0 : i32
    %c0_i32_0 = arith.constant 0 : i32
    %c0_i32_1 = arith.constant 0 : i32
    return %c0_i32, %c0_i32_0 : i32, i32
  }
  func.func @transform_8(%arg0: i32) -> (i32, i32) {
    %c0_i32 = arith.constant 0 : i32
    %c0_i32_0 = arith.constant 0 : i32
    %c0_i32_1 = arith.constant 0 : i32
    return %c0_i32, %c0_i32_0 : i32, i32
  }
}

module attributes {stable_mosaic.version = 11 : i64} {
  func.func @kernel(%arg0: i32, %arg1: memref<2x4x640xbf16, #tpu.memory_space<vmem>>, %arg2: memref<16x36xbf16, #tpu.memory_space<vmem>>, %arg3: memref<1x512xf32, #tpu.memory_space<vmem>>, %arg4: memref<2x8x512xbf16, #tpu.memory_space<vmem>>, %arg5: memref<16x1xf32, #tpu.memory_space<vmem>>, %arg6: memref<16x1xf32, #tpu.memory_space<vmem>>) attributes {dimension_semantics = [#tpu.dimension_semantics<arbitrary>], iteration_bounds = array<i64: 1>, scalar_prefetch = 0 : i64, scratch_operands = 0 : i64, tpu.core_type = #tpu.core_type<tc>, window_params = [{transform_indices = @transform_0, window_bounds = array<i64: 2, 4, 640>}, {pipeline_mode = #tpu.pipeline_mode<synchronous>, transform_indices = @transform_1, window_bounds = array<i64: 16, 36>}, {pipeline_mode = #tpu.pipeline_mode<synchronous>, transform_indices = @transform_2, window_bounds = array<i64: 1, 512>}, {transform_indices = @transform_3, window_bounds = array<i64: 2, 8, 512>}, {pipeline_mode = #tpu.pipeline_mode<synchronous>, transform_indices = @transform_4, window_bounds = array<i64: 16, 1>}, {pipeline_mode = #tpu.pipeline_mode<synchronous>, transform_indices = @transform_5, window_bounds = array<i64: 16, 1>}]} {
    %c0_i32 = arith.constant 0 : i32
    %0 = arith.cmpi eq, %arg0, %c0_i32 : i32
    %1 = arith.extui %0 : i1 to i32
    %c0_i32_0 = arith.constant 0 : i32
    %2 = arith.cmpi ne, %1, %c0_i32_0 : i32
    scf.if %2 {
      %cst_120 = arith.constant 0.000000e+00 : f32
      %128 = vector.broadcast %cst_120 : f32 to vector<16x1xf32>
      %c0_121 = arith.constant 0 : index
      %c0_122 = arith.constant 0 : index
      %129 = vector.load %arg5[%c0_121, %c0_122] : memref<16x1xf32, #tpu.memory_space<vmem>>, vector<16x1xf32>
      tpu.vector_store %arg5[%c0_121, %c0_122], %128 {strides = array<i32>} : memref<16x1xf32, #tpu.memory_space<vmem>>, vector<16x1xf32>,
      %cst_123 = arith.constant 0.000000e+00 : f32
      %130 = vector.broadcast %cst_123 : f32 to vector<16x1xf32>
      %c0_124 = arith.constant 0 : index
      %c0_125 = arith.constant 0 : index
      %131 = vector.load %arg6[%c0_124, %c0_125] : memref<16x1xf32, #tpu.memory_space<vmem>>, vector<16x1xf32>
      tpu.vector_store %arg6[%c0_124, %c0_125], %130 {strides = array<i32>} : memref<16x1xf32, #tpu.memory_space<vmem>>, vector<16x1xf32>,
    } else {
    }
    %c0 = arith.constant 0 : index
    %c0_1 = arith.constant 0 : index
    %3 = vector.load %arg3[%c0, %c0_1] : memref<1x512xf32, #tpu.memory_space<vmem>>, vector<1x512xf32>
    %c0_2 = arith.constant 0 : index
    %c0_3 = arith.constant 0 : index
    %4 = vector.load %arg2[%c0_2, %c0_3] : memref<16x36xbf16, #tpu.memory_space<vmem>>, vector<16x4xbf16>
    %c0_4 = arith.constant 0 : index
    %c0_5 = arith.constant 0 : index
    %c0_6 = arith.constant 0 : index
    %5 = vector.load %arg1[%c0_4, %c0_5, %c0_6] : memref<2x4x640xbf16, #tpu.memory_space<vmem>>, vector<1x4x512xbf16>
    %6 = vector.shape_cast %5 : vector<1x4x512xbf16> to vector<4x512xbf16>
    %cst = arith.constant dense<0.000000e+00> : vector<16x512xf32>
    %7 = tpu.matmul %4, %6, %cst {dimension_numbers = #tpu.dot_dimension_numbers<[1], [0], [0], [1], [0, 0, 1, 1], [], []>} : vector<16x4xbf16>, vector<4x512xbf16>, vector<16x512xf32> -> vector<16x512xf32>
    %c0_7 = arith.constant 0 : index
    %c4 = arith.constant 4 : index
    %8 = vector.load %arg2[%c0_7, %c4] : memref<16x36xbf16, #tpu.memory_space<vmem>>, vector<16x4xbf16>
    %c0_8 = arith.constant 0 : index
    %c0_9 = arith.constant 0 : index
    %c1 = arith.constant 1 : index
    %9 = vector.load %arg1[%c0_8, %c0_9, %c1] : memref<2x4x640xbf16, #tpu.memory_space<vmem>>, vector<1x4x512xbf16>
    %10 = vector.shape_cast %9 : vector<1x4x512xbf16> to vector<4x512xbf16>
    %cst_10 = arith.constant dense<0.000000e+00> : vector<16x512xf32>
    %11 = tpu.matmul %8, %10, %cst_10 {dimension_numbers = #tpu.dot_dimension_numbers<[1], [0], [0], [1], [0, 0, 1, 1], [], []>} : vector<16x4xbf16>, vector<4x512xbf16>, vector<16x512xf32> -> vector<16x512xf32>
    %12 = arith.addf %7, %11 : vector<16x512xf32>
    %c0_11 = arith.constant 0 : index
    %c8 = arith.constant 8 : index
    %13 = vector.load %arg2[%c0_11, %c8] : memref<16x36xbf16, #tpu.memory_space<vmem>>, vector<16x4xbf16>
    %c0_12 = arith.constant 0 : index
    %c0_13 = arith.constant 0 : index
    %c2 = arith.constant 2 : index
    %14 = vector.load %arg1[%c0_12, %c0_13, %c2] : memref<2x4x640xbf16, #tpu.memory_space<vmem>>, vector<1x4x512xbf16>
    %15 = vector.shape_cast %14 : vector<1x4x512xbf16> to vector<4x512xbf16>
    %cst_14 = arith.constant dense<0.000000e+00> : vector<16x512xf32>
    %16 = tpu.matmul %13, %15, %cst_14 {dimension_numbers = #tpu.dot_dimension_numbers<[1], [0], [0], [1], [0, 0, 1, 1], [], []>} : vector<16x4xbf16>, vector<4x512xbf16>, vector<16x512xf32> -> vector<16x512xf32>
    %17 = arith.addf %12, %16 : vector<16x512xf32>
    %c0_15 = arith.constant 0 : index
    %c12 = arith.constant 12 : index
    %18 = vector.load %arg2[%c0_15, %c12] : memref<16x36xbf16, #tpu.memory_space<vmem>>, vector<16x4xbf16>
    %c0_16 = arith.constant 0 : index
    %c0_17 = arith.constant 0 : index
    %c18 = arith.constant 18 : index
    %19 = vector.load %arg1[%c0_16, %c0_17, %c18] : memref<2x4x640xbf16, #tpu.memory_space<vmem>>, vector<1x4x512xbf16>
    %20 = vector.shape_cast %19 : vector<1x4x512xbf16> to vector<4x512xbf16>
    %cst_18 = arith.constant dense<0.000000e+00> : vector<16x512xf32>
    %21 = tpu.matmul %18, %20, %cst_18 {dimension_numbers = #tpu.dot_dimension_numbers<[1], [0], [0], [1], [0, 0, 1, 1], [], []>} : vector<16x4xbf16>, vector<4x512xbf16>, vector<16x512xf32> -> vector<16x512xf32>
    %22 = arith.addf %17, %21 : vector<16x512xf32>
    %c0_19 = arith.constant 0 : index
    %c16 = arith.constant 16 : index
    %23 = vector.load %arg2[%c0_19, %c16] : memref<16x36xbf16, #tpu.memory_space<vmem>>, vector<16x4xbf16>
    %c0_20 = arith.constant 0 : index
    %c0_21 = arith.constant 0 : index
    %c19 = arith.constant 19 : index
    %24 = vector.load %arg1[%c0_20, %c0_21, %c19] : memref<2x4x640xbf16, #tpu.memory_space<vmem>>, vector<1x4x512xbf16>
    %25 = vector.shape_cast %24 : vector<1x4x512xbf16> to vector<4x512xbf16>
    %cst_22 = arith.constant dense<0.000000e+00> : vector<16x512xf32>
    %26 = tpu.matmul %23, %25, %cst_22 {dimension_numbers = #tpu.dot_dimension_numbers<[1], [0], [0], [1], [0, 0, 1, 1], [], []>} : vector<16x4xbf16>, vector<4x512xbf16>, vector<16x512xf32> -> vector<16x512xf32>
    %27 = arith.addf %22, %26 : vector<16x512xf32>
    %c0_23 = arith.constant 0 : index
    %c20 = arith.constant 20 : index
    %28 = vector.load %arg2[%c0_23, %c20] : memref<16x36xbf16, #tpu.memory_space<vmem>>, vector<16x4xbf16>
    %c0_24 = arith.constant 0 : index
    %c0_25 = arith.constant 0 : index
    %c20_26 = arith.constant 20 : index
    %29 = vector.load %arg1[%c0_24, %c0_25, %c20_26] : memref<2x4x640xbf16, #tpu.memory_space<vmem>>, vector<1x4x512xbf16>
    %30 = vector.shape_cast %29 : vector<1x4x512xbf16> to vector<4x512xbf16>
    %cst_27 = arith.constant dense<0.000000e+00> : vector<16x512xf32>
    %31 = tpu.matmul %28, %30, %cst_27 {dimension_numbers = #tpu.dot_dimension_numbers<[1], [0], [0], [1], [0, 0, 1, 1], [], []>} : vector<16x4xbf16>, vector<4x512xbf16>, vector<16x512xf32> -> vector<16x512xf32>
    %32 = arith.addf %27, %31 : vector<16x512xf32>
    %c0_28 = arith.constant 0 : index
    %c24 = arith.constant 24 : index
    %33 = vector.load %arg2[%c0_28, %c24] : memref<16x36xbf16, #tpu.memory_space<vmem>>, vector<16x4xbf16>
    %c0_29 = arith.constant 0 : index
    %c0_30 = arith.constant 0 : index
    %c36 = arith.constant 36 : index
    %34 = vector.load %arg1[%c0_29, %c0_30, %c36] : memref<2x4x640xbf16, #tpu.memory_space<vmem>>, vector<1x4x512xbf16>
    %35 = vector.shape_cast %34 : vector<1x4x512xbf16> to vector<4x512xbf16>
    %cst_31 = arith.constant dense<0.000000e+00> : vector<16x512xf32>
    %36 = tpu.matmul %33, %35, %cst_31 {dimension_numbers = #tpu.dot_dimension_numbers<[1], [0], [0], [1], [0, 0, 1, 1], [], []>} : vector<16x4xbf16>, vector<4x512xbf16>, vector<16x512xf32> -> vector<16x512xf32>
    %37 = arith.addf %32, %36 : vector<16x512xf32>
    %c0_32 = arith.constant 0 : index
    %c28 = arith.constant 28 : index
    %38 = vector.load %arg2[%c0_32, %c28] : memref<16x36xbf16, #tpu.memory_space<vmem>>, vector<16x4xbf16>
    %c0_33 = arith.constant 0 : index
    %c0_34 = arith.constant 0 : index
    %c37 = arith.constant 37 : index
    %39 = vector.load %arg1[%c0_33, %c0_34, %c37] : memref<2x4x640xbf16, #tpu.memory_space<vmem>>, vector<1x4x512xbf16>
    %40 = vector.shape_cast %39 : vector<1x4x512xbf16> to vector<4x512xbf16>
    %cst_35 = arith.constant dense<0.000000e+00> : vector<16x512xf32>
    %41 = tpu.matmul %38, %40, %cst_35 {dimension_numbers = #tpu.dot_dimension_numbers<[1], [0], [0], [1], [0, 0, 1, 1], [], []>} : vector<16x4xbf16>, vector<4x512xbf16>, vector<16x512xf32> -> vector<16x512xf32>
    %42 = arith.addf %37, %41 : vector<16x512xf32>
    %c0_36 = arith.constant 0 : index
    %c32 = arith.constant 32 : index
    %43 = vector.load %arg2[%c0_36, %c32] : memref<16x36xbf16, #tpu.memory_space<vmem>>, vector<16x4xbf16>
    %c0_37 = arith.constant 0 : index
    %c0_38 = arith.constant 0 : index
    %c38 = arith.constant 38 : index
    %44 = vector.load %arg1[%c0_37, %c0_38, %c38] : memref<2x4x640xbf16, #tpu.memory_space<vmem>>, vector<1x4x512xbf16>
    %45 = vector.shape_cast %44 : vector<1x4x512xbf16> to vector<4x512xbf16>
    %cst_39 = arith.constant dense<0.000000e+00> : vector<16x512xf32>
    %46 = tpu.matmul %43, %45, %cst_39 {dimension_numbers = #tpu.dot_dimension_numbers<[1], [0], [0], [1], [0, 0, 1, 1], [], []>} : vector<16x4xbf16>, vector<4x512xbf16>, vector<16x512xf32> -> vector<16x512xf32>
    %47 = arith.addf %42, %46 : vector<16x512xf32>
    %48 = vector.broadcast %3 : vector<1x512xf32> to vector<16x512xf32>
    %49 = arith.mulf %47, %48 : vector<16x512xf32>
    %c0_40 = arith.constant 0 : index
    %c0_41 = arith.constant 0 : index
    %50 = vector.load %arg5[%c0_40, %c0_41] : memref<16x1xf32, #tpu.memory_space<vmem>>, vector<16x1xf32>
    %cst_42 = arith.constant dense<0.000000e+00> : vector<16xf32>
    %51 = vector.multi_reduction <add>, %49, %cst_42 [1] : vector<16x512xf32> to vector<16xf32>
    %52 = vector.shape_cast %51 : vector<16xf32> to vector<16x1xf32>
    %53 = arith.addf %50, %52 : vector<16x1xf32>
    %c0_43 = arith.constant 0 : index
    %c0_44 = arith.constant 0 : index
    %54 = vector.load %arg5[%c0_43, %c0_44] : memref<16x1xf32, #tpu.memory_space<vmem>>, vector<16x1xf32>
    tpu.vector_store %arg5[%c0_43, %c0_44], %53 {strides = array<i32>} : memref<16x1xf32, #tpu.memory_space<vmem>>, vector<16x1xf32>,
    %c0_45 = arith.constant 0 : index
    %c0_46 = arith.constant 0 : index
    %55 = vector.load %arg6[%c0_45, %c0_46] : memref<16x1xf32, #tpu.memory_space<vmem>>, vector<16x1xf32>
    %56 = arith.mulf %49, %47 : vector<16x512xf32>
    %cst_47 = arith.constant dense<0.000000e+00> : vector<16xf32>
    %57 = vector.multi_reduction <add>, %56, %cst_47 [1] : vector<16x512xf32> to vector<16xf32>
    %58 = vector.shape_cast %57 : vector<16xf32> to vector<16x1xf32>
    %59 = arith.addf %55, %58 : vector<16x1xf32>
    %c0_48 = arith.constant 0 : index
    %c0_49 = arith.constant 0 : index
    %60 = vector.load %arg6[%c0_48, %c0_49] : memref<16x1xf32, #tpu.memory_space<vmem>>, vector<16x1xf32>
    tpu.vector_store %arg6[%c0_48, %c0_49], %59 {strides = array<i32>} : memref<16x1xf32, #tpu.memory_space<vmem>>, vector<16x1xf32>,
    %61 = vector.extract_strided_slice %47 {offsets = [0, 0], sizes = [8, 512], strides = [1, 1]} : vector<16x512xf32> to vector<8x512xf32>
    %62 = arith.truncf %61 : vector<8x512xf32> to vector<8x512xbf16>
    %c0_50 = arith.constant 0 : index
    %c0_51 = arith.constant 0 : index
    %c0_52 = arith.constant 0 : index
    %63 = vector.load %arg4[%c0_50, %c0_51, %c0_52] : memref<2x8x512xbf16, #tpu.memory_space<vmem>>, vector<1x8x512xbf16>
    %64 = vector.shape_cast %63 : vector<1x8x512xbf16> to vector<8x512xbf16>
    %65 = vector.shape_cast %62 : vector<8x512xbf16> to vector<1x8x512xbf16>
    tpu.vector_store %arg4[%c0_50, %c0_51, %c0_52], %65 {strides = array<i32>} : memref<2x8x512xbf16, #tpu.memory_space<vmem>>, vector<1x8x512xbf16>,
    %c0_53 = arith.constant 0 : index
    %c0_54 = arith.constant 0 : index
    %66 = vector.load %arg2[%c0_53, %c0_54] : memref<16x36xbf16, #tpu.memory_space<vmem>>, vector<16x4xbf16>
    %c1_55 = arith.constant 1 : index
    %c0_56 = arith.constant 0 : index
    %c0_57 = arith.constant 0 : index
    %67 = vector.load %arg1[%c1_55, %c0_56, %c0_57] : memref<2x4x640xbf16, #tpu.memory_space<vmem>>, vector<1x4x512xbf16>
    %68 = vector.shape_cast %67 : vector<1x4x512xbf16> to vector<4x512xbf16>
    %cst_58 = arith.constant dense<0.000000e+00> : vector<16x512xf32>
    %69 = tpu.matmul %66, %68, %cst_58 {dimension_numbers = #tpu.dot_dimension_numbers<[1], [0], [0], [1], [0, 0, 1, 1], [], []>} : vector<16x4xbf16>, vector<4x512xbf16>, vector<16x512xf32> -> vector<16x512xf32>
    %c0_59 = arith.constant 0 : index
    %c4_60 = arith.constant 4 : index
    %70 = vector.load %arg2[%c0_59, %c4_60] : memref<16x36xbf16, #tpu.memory_space<vmem>>, vector<16x4xbf16>
    %c1_61 = arith.constant 1 : index
    %c0_62 = arith.constant 0 : index
    %c1_63 = arith.constant 1 : index
    %71 = vector.load %arg1[%c1_61, %c0_62, %c1_63] : memref<2x4x640xbf16, #tpu.memory_space<vmem>>, vector<1x4x512xbf16>
    %72 = vector.shape_cast %71 : vector<1x4x512xbf16> to vector<4x512xbf16>
    %cst_64 = arith.constant dense<0.000000e+00> : vector<16x512xf32>
    %73 = tpu.matmul %70, %72, %cst_64 {dimension_numbers = #tpu.dot_dimension_numbers<[1], [0], [0], [1], [0, 0, 1, 1], [], []>} : vector<16x4xbf16>, vector<4x512xbf16>, vector<16x512xf32> -> vector<16x512xf32>
    %74 = arith.addf %69, %73 : vector<16x512xf32>
    %c0_65 = arith.constant 0 : index
    %c8_66 = arith.constant 8 : index
    %75 = vector.load %arg2[%c0_65, %c8_66] : memref<16x36xbf16, #tpu.memory_space<vmem>>, vector<16x4xbf16>
    %c1_67 = arith.constant 1 : index
    %c0_68 = arith.constant 0 : index
    %c2_69 = arith.constant 2 : index
    %76 = vector.load %arg1[%c1_67, %c0_68, %c2_69] : memref<2x4x640xbf16, #tpu.memory_space<vmem>>, vector<1x4x512xbf16>
    %77 = vector.shape_cast %76 : vector<1x4x512xbf16> to vector<4x512xbf16>
    %cst_70 = arith.constant dense<0.000000e+00> : vector<16x512xf32>
    %78 = tpu.matmul %75, %77, %cst_70 {dimension_numbers = #tpu.dot_dimension_numbers<[1], [0], [0], [1], [0, 0, 1, 1], [], []>} : vector<16x4xbf16>, vector<4x512xbf16>, vector<16x512xf32> -> vector<16x512xf32>
    %79 = arith.addf %74, %78 : vector<16x512xf32>
    %c0_71 = arith.constant 0 : index
    %c12_72 = arith.constant 12 : index
    %80 = vector.load %arg2[%c0_71, %c12_72] : memref<16x36xbf16, #tpu.memory_space<vmem>>, vector<16x4xbf16>
    %c1_73 = arith.constant 1 : index
    %c0_74 = arith.constant 0 : index
    %c18_75 = arith.constant 18 : index
    %81 = vector.load %arg1[%c1_73, %c0_74, %c18_75] : memref<2x4x640xbf16, #tpu.memory_space<vmem>>, vector<1x4x512xbf16>
    %82 = vector.shape_cast %81 : vector<1x4x512xbf16> to vector<4x512xbf16>
    %cst_76 = arith.constant dense<0.000000e+00> : vector<16x512xf32>
    %83 = tpu.matmul %80, %82, %cst_76 {dimension_numbers = #tpu.dot_dimension_numbers<[1], [0], [0], [1], [0, 0, 1, 1], [], []>} : vector<16x4xbf16>, vector<4x512xbf16>, vector<16x512xf32> -> vector<16x512xf32>
    %84 = arith.addf %79, %83 : vector<16x512xf32>
    %c0_77 = arith.constant 0 : index
    %c16_78 = arith.constant 16 : index
    %85 = vector.load %arg2[%c0_77, %c16_78] : memref<16x36xbf16, #tpu.memory_space<vmem>>, vector<16x4xbf16>
    %c1_79 = arith.constant 1 : index
    %c0_80 = arith.constant 0 : index
    %c19_81 = arith.constant 19 : index
    %86 = vector.load %arg1[%c1_79, %c0_80, %c19_81] : memref<2x4x640xbf16, #tpu.memory_space<vmem>>, vector<1x4x512xbf16>
    %87 = vector.shape_cast %86 : vector<1x4x512xbf16> to vector<4x512xbf16>
    %cst_82 = arith.constant dense<0.000000e+00> : vector<16x512xf32>
    %88 = tpu.matmul %85, %87, %cst_82 {dimension_numbers = #tpu.dot_dimension_numbers<[1], [0], [0], [1], [0, 0, 1, 1], [], []>} : vector<16x4xbf16>, vector<4x512xbf16>, vector<16x512xf32> -> vector<16x512xf32>
    %89 = arith.addf %84, %88 : vector<16x512xf32>
    %c0_83 = arith.constant 0 : index
    %c20_84 = arith.constant 20 : index
    %90 = vector.load %arg2[%c0_83, %c20_84] : memref<16x36xbf16, #tpu.memory_space<vmem>>, vector<16x4xbf16>
    %c1_85 = arith.constant 1 : index
    %c0_86 = arith.constant 0 : index
    %c20_87 = arith.constant 20 : index
    %91 = vector.load %arg1[%c1_85, %c0_86, %c20_87] : memref<2x4x640xbf16, #tpu.memory_space<vmem>>, vector<1x4x512xbf16>
    %92 = vector.shape_cast %91 : vector<1x4x512xbf16> to vector<4x512xbf16>
    %cst_88 = arith.constant dense<0.000000e+00> : vector<16x512xf32>
    %93 = tpu.matmul %90, %92, %cst_88 {dimension_numbers = #tpu.dot_dimension_numbers<[1], [0], [0], [1], [0, 0, 1, 1], [], []>} : vector<16x4xbf16>, vector<4x512xbf16>, vector<16x512xf32> -> vector<16x512xf32>
    %94 = arith.addf %89, %93 : vector<16x512xf32>
    %c0_89 = arith.constant 0 : index
    %c24_90 = arith.constant 24 : index
    %95 = vector.load %arg2[%c0_89, %c24_90] : memref<16x36xbf16, #tpu.memory_space<vmem>>, vector<16x4xbf16>
    %c1_91 = arith.constant 1 : index
    %c0_92 = arith.constant 0 : index
    %c36_93 = arith.constant 36 : index
    %96 = vector.load %arg1[%c1_91, %c0_92, %c36_93] : memref<2x4x640xbf16, #tpu.memory_space<vmem>>, vector<1x4x512xbf16>
    %97 = vector.shape_cast %96 : vector<1x4x512xbf16> to vector<4x512xbf16>
    %cst_94 = arith.constant dense<0.000000e+00> : vector<16x512xf32>
    %98 = tpu.matmul %95, %97, %cst_94 {dimension_numbers = #tpu.dot_dimension_numbers<[1], [0], [0], [1], [0, 0, 1, 1], [], []>} : vector<16x4xbf16>, vector<4x512xbf16>, vector<16x512xf32> -> vector<16x512xf32>
    %99 = arith.addf %94, %98 : vector<16x512xf32>
    %c0_95 = arith.constant 0 : index
    %c28_96 = arith.constant 28 : index
    %100 = vector.load %arg2[%c0_95, %c28_96] : memref<16x36xbf16, #tpu.memory_space<vmem>>, vector<16x4xbf16>
    %c1_97 = arith.constant 1 : index
    %c0_98 = arith.constant 0 : index
    %c37_99 = arith.constant 37 : index
    %101 = vector.load %arg1[%c1_97, %c0_98, %c37_99] : memref<2x4x640xbf16, #tpu.memory_space<vmem>>, vector<1x4x512xbf16>
    %102 = vector.shape_cast %101 : vector<1x4x512xbf16> to vector<4x512xbf16>
    %cst_100 = arith.constant dense<0.000000e+00> : vector<16x512xf32>
    %103 = tpu.matmul %100, %102, %cst_100 {dimension_numbers = #tpu.dot_dimension_numbers<[1], [0], [0], [1], [0, 0, 1, 1], [], []>} : vector<16x4xbf16>, vector<4x512xbf16>, vector<16x512xf32> -> vector<16x512xf32>
    %104 = arith.addf %99, %103 : vector<16x512xf32>
    %c0_101 = arith.constant 0 : index
    %c32_102 = arith.constant 32 : index
    %105 = vector.load %arg2[%c0_101, %c32_102] : memref<16x36xbf16, #tpu.memory_space<vmem>>, vector<16x4xbf16>
    %c1_103 = arith.constant 1 : index
    %c0_104 = arith.constant 0 : index
    %c38_105 = arith.constant 38 : index
    %106 = vector.load %arg1[%c1_103, %c0_104, %c38_105] : memref<2x4x640xbf16, #tpu.memory_space<vmem>>, vector<1x4x512xbf16>
    %107 = vector.shape_cast %106 : vector<1x4x512xbf16> to vector<4x512xbf16>
    %cst_106 = arith.constant dense<0.000000e+00> : vector<16x512xf32>
    %108 = tpu.matmul %105, %107, %cst_106 {dimension_numbers = #tpu.dot_dimension_numbers<[1], [0], [0], [1], [0, 0, 1, 1], [], []>} : vector<16x4xbf16>, vector<4x512xbf16>, vector<16x512xf32> -> vector<16x512xf32>
    %109 = arith.addf %104, %108 : vector<16x512xf32>
    %110 = vector.broadcast %3 : vector<1x512xf32> to vector<16x512xf32>
    %111 = arith.mulf %109, %110 : vector<16x512xf32>
    %c0_107 = arith.constant 0 : index
    %c0_108 = arith.constant 0 : index
    %112 = vector.load %arg5[%c0_107, %c0_108] : memref<16x1xf32, #tpu.memory_space<vmem>>, vector<16x1xf32>
    %cst_109 = arith.constant dense<0.000000e+00> : vector<16xf32>
    %113 = vector.multi_reduction <add>, %111, %cst_109 [1] : vector<16x512xf32> to vector<16xf32>
    %114 = vector.shape_cast %113 : vector<16xf32> to vector<16x1xf32>
    %115 = arith.addf %112, %114 : vector<16x1xf32>
    %c0_110 = arith.constant 0 : index
    %c0_111 = arith.constant 0 : index
    %116 = vector.load %arg5[%c0_110, %c0_111] : memref<16x1xf32, #tpu.memory_space<vmem>>, vector<16x1xf32>
    tpu.vector_store %arg5[%c0_110, %c0_111], %115 {strides = array<i32>} : memref<16x1xf32, #tpu.memory_space<vmem>>, vector<16x1xf32>,
    %c0_112 = arith.constant 0 : index
    %c0_113 = arith.constant 0 : index
    %117 = vector.load %arg6[%c0_112, %c0_113] : memref<16x1xf32, #tpu.memory_space<vmem>>, vector<16x1xf32>
    %118 = arith.mulf %111, %109 : vector<16x512xf32>
    %cst_114 = arith.constant dense<0.000000e+00> : vector<16xf32>
    %119 = vector.multi_reduction <add>, %118, %cst_114 [1] : vector<16x512xf32> to vector<16xf32>
    %120 = vector.shape_cast %119 : vector<16xf32> to vector<16x1xf32>
    %121 = arith.addf %117, %120 : vector<16x1xf32>
    %c0_115 = arith.constant 0 : index
    %c0_116 = arith.constant 0 : index
    %122 = vector.load %arg6[%c0_115, %c0_116] : memref<16x1xf32, #tpu.memory_space<vmem>>, vector<16x1xf32>
    tpu.vector_store %arg6[%c0_115, %c0_116], %121 {strides = array<i32>} : memref<16x1xf32, #tpu.memory_space<vmem>>, vector<16x1xf32>,
    %123 = vector.extract_strided_slice %109 {offsets = [0, 0], sizes = [8, 512], strides = [1, 1]} : vector<16x512xf32> to vector<8x512xf32>
    %124 = arith.truncf %123 : vector<8x512xf32> to vector<8x512xbf16>
    %c1_117 = arith.constant 1 : index
    %c0_118 = arith.constant 0 : index
    %c0_119 = arith.constant 0 : index
    %125 = vector.load %arg4[%c1_117, %c0_118, %c0_119] : memref<2x8x512xbf16, #tpu.memory_space<vmem>>, vector<1x8x512xbf16>
    %126 = vector.shape_cast %125 : vector<1x8x512xbf16> to vector<8x512xbf16>
    %127 = vector.shape_cast %124 : vector<8x512xbf16> to vector<1x8x512xbf16>
    tpu.vector_store %arg4[%c1_117, %c0_118, %c0_119], %127 {strides = array<i32>} : memref<2x8x512xbf16, #tpu.memory_space<vmem>>, vector<1x8x512xbf16>,
    return
  }
  func.func @transform_0(%arg0: i32) -> (i32, i32, i32) {
    %c0_i32 = arith.constant 0 : i32
    %c0_i32_0 = arith.constant 0 : i32
    %c0_i32_1 = arith.constant 0 : i32
    return %arg0, %c0_i32, %c0_i32_0 : i32, i32, i32
  }
  func.func @transform_1(%arg0: i32) -> (i32, i32) {
    %c0_i32 = arith.constant 0 : i32
    %c0_i32_0 = arith.constant 0 : i32
    %c0_i32_1 = arith.constant 0 : i32
    return %c0_i32, %c0_i32_0 : i32, i32
  }
  func.func @transform_2(%arg0: i32) -> (i32, i32) {
    %c0_i32 = arith.constant 0 : i32
    %c0_i32_0 = arith.constant 0 : i32
    %c0_i32_1 = arith.constant 0 : i32
    return %c0_i32, %c0_i32_0 : i32, i32
  }
  func.func @transform_3(%arg0: i32) -> (i32, i32, i32) {
    %c0_i32 = arith.constant 0 : i32
    %c0_i32_0 = arith.constant 0 : i32
    %c0_i32_1 = arith.constant 0 : i32
    return %arg0, %c0_i32, %c0_i32_0 : i32, i32, i32
  }
  func.func @transform_4(%arg0: i32) -> (i32, i32) {
    %c0_i32 = arith.constant 0 : i32
    %c0_i32_0 = arith.constant 0 : i32
    %c0_i32_1 = arith.constant 0 : i32
    return %c0_i32, %c0_i32_0 : i32, i32
  }
  func.func @transform_5(%arg0: i32) -> (i32, i32) {
    %c0_i32 = arith.constant 0 : i32
    %c0_i32_0 = arith.constant 0 : i32
    %c0_i32_1 = arith.constant 0 : i32
    return %c0_i32, %c0_i32_0 : i32, i32
  }
}

module attributes {stable_mosaic.version = 11 : i64} {
  func.func @kernel(%arg0: i32, %arg1: memref<2x8x384xbf16, #tpu.memory_space<vmem>>, %arg2: memref<2x4x640xbf16, #tpu.memory_space<vmem>>, %arg3: memref<8x4xbf16, #tpu.memory_space<vmem>>, %arg4: memref<8x1xf32, #tpu.memory_space<vmem>>, %arg5: memref<8x1xf32, #tpu.memory_space<vmem>>, %arg6: memref<8x1xf32, #tpu.memory_space<vmem>>, %arg7: memref<8x1xf32, #tpu.memory_space<vmem>>, %arg8: memref<2x8x384xbf16, #tpu.memory_space<vmem>>) attributes {dimension_semantics = [#tpu.dimension_semantics<parallel>], iteration_bounds = array<i64: 1>, scalar_prefetch = 0 : i64, scratch_operands = 0 : i64, tpu.core_type = #tpu.core_type<tc>, window_params = [{transform_indices = @transform_0, window_bounds = array<i64: 2, 8, 384>}, {transform_indices = @transform_1, window_bounds = array<i64: 2, 4, 640>}, {pipeline_mode = #tpu.pipeline_mode<synchronous>, transform_indices = @transform_2, window_bounds = array<i64: 8, 4>}, {pipeline_mode = #tpu.pipeline_mode<synchronous>, transform_indices = @transform_3, window_bounds = array<i64: 8, 1>}, {pipeline_mode = #tpu.pipeline_mode<synchronous>, transform_indices = @transform_4, window_bounds = array<i64: 8, 1>}, {pipeline_mode = #tpu.pipeline_mode<synchronous>, transform_indices = @transform_5, window_bounds = array<i64: 8, 1>}, {pipeline_mode = #tpu.pipeline_mode<synchronous>, transform_indices = @transform_6, window_bounds = array<i64: 8, 1>}, {transform_indices = @transform_7, window_bounds = array<i64: 2, 8, 384>}]} {
    %c0 = arith.constant 0 : index
    %c0_0 = arith.constant 0 : index
    %0 = vector.load %arg3[%c0, %c0_0] : memref<8x4xbf16, #tpu.memory_space<vmem>>, vector<8x4xbf16>
    %c0_1 = arith.constant 0 : index
    %c0_2 = arith.constant 0 : index
    %c38 = arith.constant 38 : index
    %1 = vector.load %arg2[%c0_1, %c0_2, %c38] : memref<2x4x640xbf16, #tpu.memory_space<vmem>>, vector<1x4x384xbf16>
    %2 = vector.shape_cast %1 : vector<1x4x384xbf16> to vector<4x384xbf16>
    %cst = arith.constant dense<0.000000e+00> : vector<8x384xf32>
    %3 = tpu.matmul %0, %2, %cst {dimension_numbers = #tpu.dot_dimension_numbers<[1], [0], [0], [1], [0, 0, 1, 1], [], []>} : vector<8x4xbf16>, vector<4x384xbf16>, vector<8x384xf32> -> vector<8x384xf32>
    %c0_3 = arith.constant 0 : index
    %c0_4 = arith.constant 0 : index
    %c0_5 = arith.constant 0 : index
    %4 = vector.load %arg1[%c0_3, %c0_4, %c0_5] : memref<2x8x384xbf16, #tpu.memory_space<vmem>>, vector<1x8x384xbf16>
    %5 = vector.shape_cast %4 : vector<1x8x384xbf16> to vector<8x384xbf16>
    %6 = arith.extf %5 : vector<8x384xbf16> to vector<8x384xf32>
    %c0_6 = arith.constant 0 : index
    %c0_7 = arith.constant 0 : index
    %7 = vector.load %arg4[%c0_6, %c0_7] : memref<8x1xf32, #tpu.memory_space<vmem>>, vector<8x1xf32>
    %8 = vector.broadcast %7 : vector<8x1xf32> to vector<8x384xf32>
    %9 = arith.mulf %6, %8 : vector<8x384xf32>
    %c0_8 = arith.constant 0 : index
    %c0_9 = arith.constant 0 : index
    %10 = vector.load %arg5[%c0_8, %c0_9] : memref<8x1xf32, #tpu.memory_space<vmem>>, vector<8x1xf32>
    %11 = vector.broadcast %10 : vector<8x1xf32> to vector<8x384xf32>
    %12 = arith.addf %9, %11 : vector<8x384xf32>
    %c0_10 = arith.constant 0 : index
    %c0_11 = arith.constant 0 : index
    %13 = vector.load %arg6[%c0_10, %c0_11] : memref<8x1xf32, #tpu.memory_space<vmem>>, vector<8x1xf32>
    %14 = vector.broadcast %13 : vector<8x1xf32> to vector<8x384xf32>
    %15 = arith.mulf %3, %14 : vector<8x384xf32>
    %16 = arith.addf %12, %15 : vector<8x384xf32>
    %c0_12 = arith.constant 0 : index
    %c0_13 = arith.constant 0 : index
    %17 = vector.load %arg7[%c0_12, %c0_13] : memref<8x1xf32, #tpu.memory_space<vmem>>, vector<8x1xf32>
    %18 = vector.broadcast %17 : vector<8x1xf32> to vector<8x384xf32>
    %19 = arith.addf %16, %18 : vector<8x384xf32>
    %cst_14 = arith.constant 0.000000e+00 : f32
    %20 = vector.broadcast %cst_14 : f32 to vector<8x384xf32>
    %21 = arith.maximumf %19, %20 : vector<8x384xf32>
    %22 = arith.truncf %21 : vector<8x384xf32> to vector<8x384xbf16>
    %c0_15 = arith.constant 0 : index
    %c0_16 = arith.constant 0 : index
    %c0_17 = arith.constant 0 : index
    %23 = vector.load %arg8[%c0_15, %c0_16, %c0_17] : memref<2x8x384xbf16, #tpu.memory_space<vmem>>, vector<1x8x384xbf16>
    %24 = vector.shape_cast %23 : vector<1x8x384xbf16> to vector<8x384xbf16>
    %25 = vector.shape_cast %22 : vector<8x384xbf16> to vector<1x8x384xbf16>
    tpu.vector_store %arg8[%c0_15, %c0_16, %c0_17], %25 {strides = array<i32>} : memref<2x8x384xbf16, #tpu.memory_space<vmem>>, vector<1x8x384xbf16>,
    %c0_18 = arith.constant 0 : index
    %c0_19 = arith.constant 0 : index
    %26 = vector.load %arg3[%c0_18, %c0_19] : memref<8x4xbf16, #tpu.memory_space<vmem>>, vector<8x4xbf16>
    %c1 = arith.constant 1 : index
    %c0_20 = arith.constant 0 : index
    %c38_21 = arith.constant 38 : index
    %27 = vector.load %arg2[%c1, %c0_20, %c38_21] : memref<2x4x640xbf16, #tpu.memory_space<vmem>>, vector<1x4x384xbf16>
    %28 = vector.shape_cast %27 : vector<1x4x384xbf16> to vector<4x384xbf16>
    %cst_22 = arith.constant dense<0.000000e+00> : vector<8x384xf32>
    %29 = tpu.matmul %26, %28, %cst_22 {dimension_numbers = #tpu.dot_dimension_numbers<[1], [0], [0], [1], [0, 0, 1, 1], [], []>} : vector<8x4xbf16>, vector<4x384xbf16>, vector<8x384xf32> -> vector<8x384xf32>
    %c1_23 = arith.constant 1 : index
    %c0_24 = arith.constant 0 : index
    %c0_25 = arith.constant 0 : index
    %30 = vector.load %arg1[%c1_23, %c0_24, %c0_25] : memref<2x8x384xbf16, #tpu.memory_space<vmem>>, vector<1x8x384xbf16>
    %31 = vector.shape_cast %30 : vector<1x8x384xbf16> to vector<8x384xbf16>
    %32 = arith.extf %31 : vector<8x384xbf16> to vector<8x384xf32>
    %c0_26 = arith.constant 0 : index
    %c0_27 = arith.constant 0 : index
    %33 = vector.load %arg4[%c0_26, %c0_27] : memref<8x1xf32, #tpu.memory_space<vmem>>, vector<8x1xf32>
    %34 = vector.broadcast %33 : vector<8x1xf32> to vector<8x384xf32>
    %35 = arith.mulf %32, %34 : vector<8x384xf32>
    %c0_28 = arith.constant 0 : index
    %c0_29 = arith.constant 0 : index
    %36 = vector.load %arg5[%c0_28, %c0_29] : memref<8x1xf32, #tpu.memory_space<vmem>>, vector<8x1xf32>
    %37 = vector.broadcast %36 : vector<8x1xf32> to vector<8x384xf32>
    %38 = arith.addf %35, %37 : vector<8x384xf32>
    %c0_30 = arith.constant 0 : index
    %c0_31 = arith.constant 0 : index
    %39 = vector.load %arg6[%c0_30, %c0_31] : memref<8x1xf32, #tpu.memory_space<vmem>>, vector<8x1xf32>
    %40 = vector.broadcast %39 : vector<8x1xf32> to vector<8x384xf32>
    %41 = arith.mulf %29, %40 : vector<8x384xf32>
    %42 = arith.addf %38, %41 : vector<8x384xf32>
    %c0_32 = arith.constant 0 : index
    %c0_33 = arith.constant 0 : index
    %43 = vector.load %arg7[%c0_32, %c0_33] : memref<8x1xf32, #tpu.memory_space<vmem>>, vector<8x1xf32>
    %44 = vector.broadcast %43 : vector<8x1xf32> to vector<8x384xf32>
    %45 = arith.addf %42, %44 : vector<8x384xf32>
    %cst_34 = arith.constant 0.000000e+00 : f32
    %46 = vector.broadcast %cst_34 : f32 to vector<8x384xf32>
    %47 = arith.maximumf %45, %46 : vector<8x384xf32>
    %48 = arith.truncf %47 : vector<8x384xf32> to vector<8x384xbf16>
    %c1_35 = arith.constant 1 : index
    %c0_36 = arith.constant 0 : index
    %c0_37 = arith.constant 0 : index
    %49 = vector.load %arg8[%c1_35, %c0_36, %c0_37] : memref<2x8x384xbf16, #tpu.memory_space<vmem>>, vector<1x8x384xbf16>
    %50 = vector.shape_cast %49 : vector<1x8x384xbf16> to vector<8x384xbf16>
    %51 = vector.shape_cast %48 : vector<8x384xbf16> to vector<1x8x384xbf16>
    tpu.vector_store %arg8[%c1_35, %c0_36, %c0_37], %51 {strides = array<i32>} : memref<2x8x384xbf16, #tpu.memory_space<vmem>>, vector<1x8x384xbf16>,
    return
  }
  func.func @transform_0(%arg0: i32) -> (i32, i32, i32) {
    %c0_i32 = arith.constant 0 : i32
    %c0_i32_0 = arith.constant 0 : i32
    %c0_i32_1 = arith.constant 0 : i32
    return %arg0, %c0_i32, %c0_i32_0 : i32, i32, i32
  }
  func.func @transform_1(%arg0: i32) -> (i32, i32, i32) {
    %c0_i32 = arith.constant 0 : i32
    %c0_i32_0 = arith.constant 0 : i32
    %c0_i32_1 = arith.constant 0 : i32
    return %arg0, %c0_i32, %c0_i32_0 : i32, i32, i32
  }
  func.func @transform_2(%arg0: i32) -> (i32, i32) {
    %c0_i32 = arith.constant 0 : i32
    %c0_i32_0 = arith.constant 0 : i32
    %c0_i32_1 = arith.constant 0 : i32
    return %c0_i32, %c0_i32_0 : i32, i32
  }
  func.func @transform_3(%arg0: i32) -> (i32, i32) {
    %c0_i32 = arith.constant 0 : i32
    %c0_i32_0 = arith.constant 0 : i32
    %c0_i32_1 = arith.constant 0 : i32
    return %c0_i32, %c0_i32_0 : i32, i32
  }
  func.func @transform_4(%arg0: i32) -> (i32, i32) {
    %c0_i32 = arith.constant 0 : i32
    %c0_i32_0 = arith.constant 0 : i32
    %c0_i32_1 = arith.constant 0 : i32
    return %c0_i32, %c0_i32_0 : i32, i32
  }
  func.func @transform_5(%arg0: i32) -> (i32, i32) {
    %c0_i32 = arith.constant 0 : i32
    %c0_i32_0 = arith.constant 0 : i32
    %c0_i32_1 = arith.constant 0 : i32
    return %c0_i32, %c0_i32_0 : i32, i32
  }
  func.func @transform_6(%arg0: i32) -> (i32, i32) {
    %c0_i32 = arith.constant 0 : i32
    %c0_i32_0 = arith.constant 0 : i32
    %c0_i32_1 = arith.constant 0 : i32
    return %c0_i32, %c0_i32_0 : i32, i32
  }
  func.func @transform_7(%arg0: i32) -> (i32, i32, i32) {
    %c0_i32 = arith.constant 0 : i32
    %c0_i32_0 = arith.constant 0 : i32
    %c0_i32_1 = arith.constant 0 : i32
    return %arg0, %c0_i32, %c0_i32_0 : i32, i32, i32
  }
}

</mosaic_0001>

<llo_original>
// kernel: basic_block_forward.5
$region0: #{basic_block_forward.5}
  #allocation0 [shape = 'u32[]', space=smem, size = 0x4, offset = 0x4, fixed_abs, tag = 'smem constant byte address 0x4 - core index']
  #allocation1 [shape = 'u32[72,128]{1,0:T(1,128)}', space=vmem, size = 0x9000, scoped, tag = 'internal scratch']
  %s0 = inlined_call_operand.vmem [shape: bf16[2,8,384], index: 0, kind: input, shape index: {}]
  %s1 = inlined_call_operand.vmem [shape: bf16[2,4,640], index: 1, kind: input, shape index: {}]
  %s2 = inlined_call_operand.vmem [shape: bf16[8,4], index: 2, kind: input, shape index: {}]
  %s3 = inlined_call_operand.vmem [shape: f32[8,1], index: 3, kind: input, shape index: {}]
  %s4 = inlined_call_operand.vmem [shape: f32[8,1], index: 4, kind: input, shape index: {}]
  %s5 = inlined_call_operand.vmem [shape: f32[8,1], index: 5, kind: input, shape index: {}]
  %s6 = inlined_call_operand.vmem [shape: f32[8,1], index: 6, kind: input, shape index: {}]
  %s7 = inlined_call_operand.vmem [shape: bf16[2,8,384], index: 7, kind: output, shape index: {}]
  %s8 = sld [smem:[#allocation0]]
  $region38: #{basic_block_forward.5} parent=0
    _
  %s10 = ssub.s32 1, %s8
  %s11 = scalar_select 0, %s10, %s8
  // Predicated region
  $region2: #{basic_block_forward.5} parent=0 // pred_check
    _
  $region3: #{basic_block_forward.5} parent=0 // pred_check_branch
    %13 = sbr.rel (0) target = $region5
  $region4: #{basic_block_forward.5} parent=0 // pred_region
    _
  $region5: #{basic_block_forward.5} parent=0 // pred_fallthru
    _
  // Predicated region
  $region6: #{basic_block_forward.5} parent=0 // pred_check
    _
  $region7: #{basic_block_forward.5} parent=0 // pred_check_branch
    %15 = sbr.rel (0) target = $region9
  $region8: #{basic_block_forward.5} parent=0 // pred_region
    _
  $region9: #{basic_block_forward.5} parent=0 // pred_fallthru
    _
  // Predicated region
  $region10: #{basic_block_forward.5} parent=0 // pred_check
    _
  $region11: #{basic_block_forward.5} parent=0 // pred_check_branch
    %17 = sbr.rel (0) target = $region13
  $region12: #{basic_block_forward.5} parent=0 // pred_region
    _
  $region13: #{basic_block_forward.5} parent=0 // pred_fallthru
    _
  // Predicated region
  $region14: #{basic_block_forward.5} parent=0 // pred_check
    _
  $region15: #{basic_block_forward.5} parent=0 // pred_check_branch
    %19 = sbr.rel (0) target = $region17
  $region16: #{basic_block_forward.5} parent=0 // pred_region
    _
  $region17: #{basic_block_forward.5} parent=0 // pred_fallthru
    _
  // Predicated region
  $region18: #{basic_block_forward.5} parent=0 // pred_check
    _
  $region19: #{basic_block_forward.5} parent=0 // pred_check_branch
    %21 = sbr.rel (0) target = $region21
  $region20: #{basic_block_forward.5} parent=0 // pred_region
    _
  $region21: #{basic_block_forward.5} parent=0 // pred_fallthru
    _
  // Predicated region
  $region22: #{basic_block_forward.5} parent=0 // pred_check
    _
  $region23: #{basic_block_forward.5} parent=0 // pred_check_branch
    %23 = sbr.rel (0) target = $region25
  $region24: #{basic_block_forward.5} parent=0 // pred_region
    _
  $region25: #{basic_block_forward.5} parent=0 // pred_fallthru
    _
  // Predicated region
  $region26: #{basic_block_forward.5} parent=0 // pred_check
    _
  $region27: #{basic_block_forward.5} parent=0 // pred_check_branch
    %25 = sbr.rel (0) target = $region29
  $region28: #{basic_block_forward.5} parent=0 // pred_region
    _
  $region29: #{basic_block_forward.5} parent=0 // pred_fallthru
    _
  %v27 = vld [vmem:[%s2] sm:$0xf]
  %v28 = vld [vmem:[%s1] sm:$0xff]
  %30 = vst [vmem:[#allocation1] ss:$4 sm:$0xff] %v28
  %v31 = vld.sshfl [vmem:[#allocation1] sm:$0xff pattern:$0x73625140]
  %v33 = vld.sshfl [vmem:[#allocation1 + $0x8] sm:$0xff pattern:$0x73625140]
  %v35 = vld.sshfl [vmem:[#allocation1 + $0x10] sm:$0xff pattern:$0x73625140]
  %v37 = vld.sshfl [vmem:[#allocation1 + $0x18] sm:$0xff pattern:$0x73625140]
  %39 = vrot.lane.b32.xlu0 %v31, 90
  %v40 = vpop.permute.xlu0 %39
  %41 = vrot.lane.b32.xlu0 %v33, 90
  %v42 = vpop.permute.xlu0 %41
  %43 = vrot.lane.b32.xlu0 %v35, 90
  %v44 = vpop.permute.xlu0 %43
  %45 = vrot.lane.b32.xlu0 %v37, 90
  %v46 = vpop.permute.xlu0 %45
  %vm47 = vcmask 736256
  %v48 = vsel %vm47, %v40, %v42
  %v49 = vsel %vm47, %v42, %v44
  %v50 = vsel %vm47, %v44, %v46
  %vm51 = vcmask 31744
  %v53 = vsel %vm51, %v27, 0
  %vm55 = vcmask 1041408
  %v57 = vsel %vm55, %v48, 0
  %v60 = vsel %vm55, %v49, 0
  %v63 = vsel %vm55, %v50, 0
  %65 = vmatpush.bf16.msra.mxu0 0
  %66 = vmatpush.bf16.msra.mxu0 0
  %67 = vmatpush.bf16.msra.mxu0 0
  %68 = vmatpush.bf16.msra.mxu0 0
  %69 = vmatpush.bf16.msra.mxu0 0
  %70 = vmatpush.bf16.msra.mxu0 0
  %71 = vmatpush.bf16.msra.mxu0 0
  %72 = vmatpush.bf16.msra.mxu0 %v57
  %73 = vmatmul.bf16.gmra.mxu0 %v53
  %v74 = vpop.f32.mrf.mxu0
  %v75 = vadd.f32 0.0, %v74
  %v76 = vpop.f32.mrf.mxu0
  %77 = vdwg.mxu0
  %78 = vmatpush.bf16.msra.mxu0 0
  %79 = vmatpush.bf16.msra.mxu0 0
  %80 = vmatpush.bf16.msra.mxu0 0
  %81 = vmatpush.bf16.msra.mxu0 0
  %82 = vmatpush.bf16.msra.mxu0 0
  %83 = vmatpush.bf16.msra.mxu0 0
  %84 = vmatpush.bf16.msra.mxu0 0
  %85 = vmatpush.bf16.msra.mxu0 %v60
  %86 = vmatmul.bf16.gmra.mxu0 %v53
  %v87 = vpop.f32.mrf.mxu0
  %v88 = vadd.f32 0.0, %v87
  %v89 = vpop.f32.mrf.mxu0
  %90 = vdwg.mxu0
  %91 = vmatpush.bf16.msra.mxu0 0
  %92 = vmatpush.bf16.msra.mxu0 0
  %93 = vmatpush.bf16.msra.mxu0 0
  %94 = vmatpush.bf16.msra.mxu0 0
  %95 = vmatpush.bf16.msra.mxu0 0
  %96 = vmatpush.bf16.msra.mxu0 0
  %97 = vmatpush.bf16.msra.mxu0 0
  %98 = vmatpush.bf16.msra.mxu0 %v63
  %99 = vmatmul.bf16.gmra.mxu0 %v53
  %v100 = vpop.f32.mrf.mxu0
  %v101 = vadd.f32 0.0, %v100
  %v102 = vpop.f32.mrf.mxu0
  %103 = vdwg.mxu0
  %v104 = vld [vmem:[%s0] sm:$0xff]
  %v105 = vld [vmem:[%s0 + $0x8] sm:$0xf]
  %v106 = vunpack.c.l.bf16 %v104
  %v107 = vunpack.c.h.bf16 %v104
  %v108 = vunpack.c.l.bf16 %v105
  %v109 = vld [vmem:[%s3] sm:$0xff]
  %111 = vset.pattern.permute.xlu0 0
  %112 = vperm.xlu0 %111, %v109
  %v113 = vpop.permute.xlu0 %112
  %v115 = vmul.f32 %v106, %v113
  %v116 = vmul.f32 %v107, %v113
  %v117 = vmul.f32 %v108, %v113
  %v118 = vld [vmem:[%s4] sm:$0xff]
  %120 = vset.pattern.permute.xlu0 0
  %121 = vperm.xlu0 %120, %v118
  %v122 = vpop.permute.xlu0 %121
  %v124 = vadd.f32 %v115, %v122
  %v125 = vadd.f32 %v116, %v122
  %v126 = vadd.f32 %v117, %v122
  %v127 = vld [vmem:[%s5] sm:$0xff]
  %129 = vset.pattern.permute.xlu0 0
  %130 = vperm.xlu0 %129, %v127
  %v131 = vpop.permute.xlu0 %130
  %v133 = vmul.f32 %v75, %v131
  %v134 = vmul.f32 %v88, %v131
  %v135 = vmul.f32 %v101, %v131
  %v136 = vadd.f32 %v124, %v133
  %v137 = vadd.f32 %v125, %v134
  %v138 = vadd.f32 %v126, %v135
  %v139 = vld [vmem:[%s6] sm:$0xff]
  %141 = vset.pattern.permute.xlu0 0
  %142 = vperm.xlu0 %141, %v139
  %v143 = vpop.permute.xlu0 %142
  %v145 = vadd.f32 %v136, %v143
  %v146 = vadd.f32 %v137, %v143
  %v147 = vadd.f32 %v138, %v143
  %v148 = vmax.f32 %v145, 0.0
  %v149 = vmax.f32 %v146, 0.0
  %v150 = vmax.f32 %v147, 0.0
  %v151 = vpack.c.bf16 %v149, %v148
  %v152 = vpack.c.bf16 %v150, %v150
  %153 = vst [vmem:[%s7] sm:$0xff] %v151
  %154 = vst [vmem:[%s7 + $0x8] sm:$0xf] %v152
  %v155 = vld [vmem:[%s2] sm:$0xf]
  %s156 = scalar_lea.vmem %s1, 10
  %v157 = vld [vmem:[%s156] sm:$0xff]
  %159 = vst [vmem:[#allocation1] ss:$4 sm:$0xff] %v157
  %v160 = vld.sshfl [vmem:[#allocation1] sm:$0xff pattern:$0x73625140]
  %v162 = vld.sshfl [vmem:[#allocation1 + $0x8] sm:$0xff pattern:$0x73625140]
  %v164 = vld.sshfl [vmem:[#allocation1 + $0x10] sm:$0xff pattern:$0x73625140]
  %v166 = vld.sshfl [vmem:[#allocation1 + $0x18] sm:$0xff pattern:$0x73625140]
  %168 = vrot.lane.b32.xlu0 %v160, 90
  %v169 = vpop.permute.xlu0 %168
  %170 = vrot.lane.b32.xlu0 %v162, 90
  %v171 = vpop.permute.xlu0 %170
  %172 = vrot.lane.b32.xlu0 %v164, 90
  %v173 = vpop.permute.xlu0 %172
  %174 = vrot.lane.b32.xlu0 %v166, 90
  %v175 = vpop.permute.xlu0 %174
  %v176 = vsel %vm47, %v169, %v171
  %v177 = vsel %vm47, %v171, %v173
  %v178 = vsel %vm47, %v173, %v175
  %v180 = vsel %vm51, %v155, 0
  %v183 = vsel %vm55, %v176, 0
  %v186 = vsel %vm55, %v177, 0
  %v189 = vsel %vm55, %v178, 0
  %191 = vmatpush.bf16.msra.mxu0 0
  %192 = vmatpush.bf16.msra.mxu0 0
  %193 = vmatpush.bf16.msra.mxu0 0
  %194 = vmatpush.bf16.msra.mxu0 0
  %195 = vmatpush.bf16.msra.mxu0 0
  %196 = vmatpush.bf16.msra.mxu0 0
  %197 = vmatpush.bf16.msra.mxu0 0
  %198 = vmatpush.bf16.msra.mxu0 %v183
  %199 = vmatmul.bf16.gmra.mxu0 %v180
  %v200 = vpop.f32.mrf.mxu0
  %v201 = vadd.f32 0.0, %v200
  %v202 = vpop.f32.mrf.mxu0
  %203 = vdwg.mxu0
  %204 = vmatpush.bf16.msra.mxu0 0
  %205 = vmatpush.bf16.msra.mxu0 0
  %206 = vmatpush.bf16.msra.mxu0 0
  %207 = vmatpush.bf16.msra.mxu0 0
  %208 = vmatpush.bf16.msra.mxu0 0
  %209 = vmatpush.bf16.msra.mxu0 0
  %210 = vmatpush.bf16.msra.mxu0 0
  %211 = vmatpush.bf16.msra.mxu0 %v186
  %212 = vmatmul.bf16.gmra.mxu0 %v180
  %v213 = vpop.f32.mrf.mxu0
  %v214 = vadd.f32 0.0, %v213
  %v215 = vpop.f32.mrf.mxu0
  %216 = vdwg.mxu0
  %217 = vmatpush.bf16.msra.mxu0 0
  %218 = vmatpush.bf16.msra.mxu0 0
  %219 = vmatpush.bf16.msra.mxu0 0
  %220 = vmatpush.bf16.msra.mxu0 0
  %221 = vmatpush.bf16.msra.mxu0 0
  %222 = vmatpush.bf16.msra.mxu0 0
  %223 = vmatpush.bf16.msra.mxu0 0
  %224 = vmatpush.bf16.msra.mxu0 %v189
  %225 = vmatmul.bf16.gmra.mxu0 %v180
  %v226 = vpop.f32.mrf.mxu0
  %v227 = vadd.f32 0.0, %v226
  %v228 = vpop.f32.mrf.mxu0
  %229 = vdwg.mxu0
  %s230 = scalar_lea.vmem %s0, 12
  %v231 = vld [vmem:[%s230] sm:$0xff]
  %v232 = vld [vmem:[%s230 + $0x8] sm:$0xf]
  %v233 = vunpack.c.l.bf16 %v231
  %v234 = vunpack.c.h.bf16 %v231
  %v235 = vunpack.c.l.bf16 %v232
  %v236 = vld [vmem:[%s3] sm:$0xff]
  %238 = vset.pattern.permute.xlu0 0
  %239 = vperm.xlu0 %238, %v236
  %v240 = vpop.permute.xlu0 %239
  %v242 = vmul.f32 %v233, %v240
  %v243 = vmul.f32 %v234, %v240
  %v244 = vmul.f32 %v235, %v240
  %v245 = vld [vmem:[%s4] sm:$0xff]
  %247 = vset.pattern.permute.xlu0 0
  %248 = vperm.xlu0 %247, %v245
  %v249 = vpop.permute.xlu0 %248
  %v251 = vadd.f32 %v242, %v249
  %v252 = vadd.f32 %v243, %v249
  %v253 = vadd.f32 %v244, %v249
  %v254 = vld [vmem:[%s5] sm:$0xff]
  %256 = vset.pattern.permute.xlu0 0
  %257 = vperm.xlu0 %256, %v254
  %v258 = vpop.permute.xlu0 %257
  %v260 = vmul.f32 %v201, %v258
  %v261 = vmul.f32 %v214, %v258
  %v262 = vmul.f32 %v227, %v258
  %v263 = vadd.f32 %v251, %v260
  %v264 = vadd.f32 %v252, %v261
  %v265 = vadd.f32 %v253, %v262
  %v266 = vld [vmem:[%s6] sm:$0xff]
  %268 = vset.pattern.permute.xlu0 0
  %269 = vperm.xlu0 %268, %v266
  %v270 = vpop.permute.xlu0 %269
  %v272 = vadd.f32 %v263, %v270
  %v273 = vadd.f32 %v264, %v270
  %v274 = vadd.f32 %v265, %v270
  %v275 = vmax.f32 %v272, 0.0
  %v276 = vmax.f32 %v273, 0.0
  %v277 = vmax.f32 %v274, 0.0
  %v278 = vpack.c.bf16 %v276, %v275
  %v279 = vpack.c.bf16 %v277, %v277
  %s280 = scalar_lea.vmem %s7, 12
  %281 = vst [vmem:[%s280] sm:$0xff] %v278
  %282 = vst [vmem:[%s280 + $0x8] sm:$0xf] %v279
  // Predicated region
  $region30: #{basic_block_forward.5} parent=0 // pred_check
    _
  $region31: #{basic_block_forward.5} parent=0 // pred_check_branch
    %284 = sbr.rel (0) target = $region33
  $region32: #{basic_block_forward.5} parent=0 // pred_region
    _
  $region33: #{basic_block_forward.5} parent=0 // pred_fallthru
    _
  // Predicated region
  $region34: #{basic_block_forward.5} parent=0 // pred_check
    _
  $region35: #{basic_block_forward.5} parent=0 // pred_check_branch
    %286 = sbr.rel (0) target = $region37
  $region36: #{basic_block_forward.5} parent=0 // pred_region
    _
  $region37: #{basic_block_forward.5} parent=0 // pred_fallthru
    _

// kernel: basic_block_forward.4
$region0: #{basic_block_forward.4}
  #allocation0 [shape = 'u32[]', space=smem, size = 0x4, offset = 0x4, fixed_abs, tag = 'smem constant byte address 0x4 - core index']
  #allocation1 [shape = 'u32[72,128]{1,0:T(1,128)}', space=vmem, size = 0x9000, scoped, tag = 'internal scratch']
  #allocation2 [shape = 'bf16[8,512]{1,0:T(8,128)(2,1)}', space=vmem, size = 0x2000, scoped, tag = 'scratch operand']
  %s0 = inlined_call_operand.vmem [shape: bf16[2,8,512], index: 0, kind: input, shape index: {}]
  %s1 = inlined_call_operand.vmem [shape: bf16[8,72], index: 1, kind: input, shape index: {}]
  %s2 = inlined_call_operand.vmem [shape: f32[8,1], index: 2, kind: input, shape index: {}]
  %s3 = inlined_call_operand.vmem [shape: f32[8,1], index: 3, kind: input, shape index: {}]
  %s4 = inlined_call_operand.vmem [shape: f32[1,512], index: 4, kind: input, shape index: {}]
  %s5 = inlined_call_operand.vmem [shape: f32[1,384], index: 5, kind: input, shape index: {}]
  %s6 = inlined_call_operand.vmem [shape: bf16[2,8,384], index: 6, kind: output, shape index: {0}]
  %s7 = inlined_call_operand.vmem [shape: f32[8,1], index: 7, kind: output, shape index: {1}]
  %s8 = inlined_call_operand.vmem [shape: f32[8,1], index: 8, kind: output, shape index: {2}]
  %9 = xla_tuple %s6, %s7, %s8
  %s10 = sld [smem:[#allocation0]]
  $region54: #{basic_block_forward.4} parent=0
    _
  %s12 = ssub.s32 1, %s10
  %s13 = scalar_select 0, %s12, %s10
  // Predicated region
  $region2: #{basic_block_forward.4} parent=0 // pred_check
    _
  $region3: #{basic_block_forward.4} parent=0 // pred_check_branch
    %15 = sbr.rel (0) target = $region5
  $region4: #{basic_block_forward.4} parent=0 // pred_region
    _
  $region5: #{basic_block_forward.4} parent=0 // pred_fallthru
    _
  // Predicated region
  $region6: #{basic_block_forward.4} parent=0 // pred_check
    _
  $region7: #{basic_block_forward.4} parent=0 // pred_check_branch
    %17 = sbr.rel (0) target = $region9
  $region8: #{basic_block_forward.4} parent=0 // pred_region
    _
  $region9: #{basic_block_forward.4} parent=0 // pred_fallthru
    _
  // Predicated region
  $region10: #{basic_block_forward.4} parent=0 // pred_check
    _
  $region11: #{basic_block_forward.4} parent=0 // pred_check_branch
    %19 = sbr.rel (0) target = $region13
  $region12: #{basic_block_forward.4} parent=0 // pred_region
    _
  $region13: #{basic_block_forward.4} parent=0 // pred_fallthru
    _
  // Predicated region
  $region14: #{basic_block_forward.4} parent=0 // pred_check
    _
  $region15: #{basic_block_forward.4} parent=0 // pred_check_branch
    %21 = sbr.rel (0) target = $region17
  $region16: #{basic_block_forward.4} parent=0 // pred_region
    _
  $region17: #{basic_block_forward.4} parent=0 // pred_fallthru
    _
  // Predicated region
  $region18: #{basic_block_forward.4} parent=0 // pred_check
    _
  $region19: #{basic_block_forward.4} parent=0 // pred_check_branch
    %23 = sbr.rel (0) target = $region21
  $region20: #{basic_block_forward.4} parent=0 // pred_region
    _
  $region21: #{basic_block_forward.4} parent=0 // pred_fallthru
    _
  // Predicated region
  $region22: #{basic_block_forward.4} parent=0 // pred_check
    _
  $region23: #{basic_block_forward.4} parent=0 // pred_check_branch
    %25 = sbr.rel (0) target = $region25
  $region24: #{basic_block_forward.4} parent=0 // pred_region
    _
  $region25: #{basic_block_forward.4} parent=0 // pred_fallthru
    _
  %p27 = scmp.eq.s32.totalorder 0, 0
  // Predicated region
  $region26: #{basic_block_forward.4} parent=0 // pred_check
    %p28 = pneg %p27
  $region27: #{basic_block_forward.4} parent=0 // pred_check_branch
    %30 = sbr.rel (%p28) target = $region29
  $region28: #{basic_block_forward.4} parent=0 // pred_region
    %vm31 = vcmask 7168
    %32 = vst.msk [vmem:[%s7] sm:$0xff] %vm31, 0.0
    %33 = vst.msk [vmem:[%s8] sm:$0xff] %vm31, 0.0
  $region29: #{basic_block_forward.4} parent=0 // pred_fallthru
    _
  %v34 = vld [vmem:[%s2] sm:$0xff]
  %v35 = vld [vmem:[%s3] sm:$0xff]
  %v36 = vld [vmem:[%s4] sm:$0xf]
  %v37 = vld [vmem:[%s5] sm:$0x7]
  %v38 = vld [vmem:[%s0] sm:$0xff]
  %v39 = vld [vmem:[%s0 + $0x8] sm:$0xff]
  %v40 = vunpack.c.l.bf16 %v38
  %v41 = vunpack.c.h.bf16 %v38
  %v42 = vunpack.c.l.bf16 %v39
  %v43 = vunpack.c.h.bf16 %v39
  %45 = vset.pattern.permute.xlu0 0
  %46 = vperm.xlu0 %45, %v34
  %v47 = vpop.permute.xlu0 %46
  %v49 = vmul.f32 %v40, %v47
  %v50 = vmul.f32 %v41, %v47
  %v51 = vmul.f32 %v42, %v47
  %v52 = vmul.f32 %v43, %v47
  %54 = vset.pattern.permute.xlu0 0
  %55 = vperm.xlu0 %54, %v35
  %v56 = vpop.permute.xlu0 %55
  %v58 = vadd.f32 %v49, %v56
  %v59 = vadd.f32 %v50, %v56
  %v60 = vadd.f32 %v51, %v56
  %v61 = vadd.f32 %v52, %v56
  %v62 = vmax.f32 %v58, 0.0
  %v63 = vmax.f32 %v59, 0.0
  %v64 = vmax.f32 %v60, 0.0
  %v65 = vmax.f32 %v61, 0.0
  %v67 = vperm.slane %v36, 0
  %v68 = vperm.slane %v36, 1
  %v69 = vperm.slane %v36, 2
  %v70 = vperm.slane %v36, 3
  %v75 = vmul.f32 %v62, %v67
  %v76 = vmul.f32 %v63, %v68
  %v77 = vmul.f32 %v64, %v69
  %v78 = vmul.f32 %v65, %v70
  %v79 = vpack.c.bf16 %v76, %v75
  %v80 = vpack.c.bf16 %v78, %v77
  %81 = vst [vmem:[#allocation2] sm:$0xff] %v79
  %82 = vst [vmem:[#allocation2 + $0x8] sm:$0xff] %v80
  %v83 = vld [vmem:[%s1] sm:$0xf]
  %v84 = vld [vmem:[#allocation2] sm:$0xff]
  %v85 = vld [vmem:[#allocation2 + $0x8] sm:$0xf]
  %v86 = vld [vmem:[#allocation2] sm:$0xff]
  %v87 = vld [vmem:[#allocation2 + $0x8] sm:$0xff]
  %v89 = vunpack.c.l.b16 %v83
  %v90 = vpack.c.b16 %v89, %v89
  %91 = vrot.lane.b32.xlu0 %v90, 120
  %v92 = vpop.permute.xlu0 %91
  %v95 = vunpack.c.l.b16 %v86
  %v96 = vunpack.c.h.b16 %v86
  %v97 = vunpack.c.l.b16 %v87
  %v98 = vunpack.c.h.b16 %v87
  %v99 = vpack.c.b16 %v95, %v95
  %v100 = vpack.c.b16 %v96, %v96
  %v101 = vpack.c.b16 %v97, %v97
  %v102 = vpack.c.b16 %v98, %v98
  %103 = vrot.lane.b32.xlu0 %v99, 127
  %v104 = vpop.permute.xlu0 %103
  %105 = vrot.lane.b32.xlu0 %v100, 127
  %v106 = vpop.permute.xlu0 %105
  %107 = vrot.lane.b32.xlu0 %v101, 127
  %v108 = vpop.permute.xlu0 %107
  %109 = vrot.lane.b32.xlu0 %v102, 127
  %v110 = vpop.permute.xlu0 %109
  %vm111 = vcmask 1039360
  %v112 = vsel %vm111, %v104, %v106
  %v113 = vsel %vm111, %v106, %v108
  %v114 = vsel %vm111, %v108, %v110
  %vm115 = vcmask 64512
  %v117 = vsel %vm115, %v92, 0
  %vm119 = vcmask 1043456
  %v121 = vsel %vm119, %v112, 0
  %v124 = vsel %vm119, %v113, 0
  %v127 = vsel %vm119, %v114, 0
  %129 = vmatpush.bf16.msra.mxu0 0
  %130 = vmatpush.bf16.msra.mxu0 0
  %131 = vmatpush.bf16.msra.mxu0 0
  %132 = vmatpush.bf16.msra.mxu0 0
  %133 = vmatpush.bf16.msra.mxu0 0
  %134 = vmatpush.bf16.msra.mxu0 0
  %135 = vmatpush.bf16.msra.mxu0 0
  %136 = vmatpush.bf16.msra.mxu0 %v121
  %137 = vmatmul.bf16.gmra.mxu0 %v117
  %v138 = vpop.f32.mrf.mxu0
  %v139 = vadd.f32 0.0, %v138
  %v140 = vpop.f32.mrf.mxu0
  %141 = vdwg.mxu0
  %142 = vmatpush.bf16.msra.mxu0 0
  %143 = vmatpush.bf16.msra.mxu0 0
  %144 = vmatpush.bf16.msra.mxu0 0
  %145 = vmatpush.bf16.msra.mxu0 0
  %146 = vmatpush.bf16.msra.mxu0 0
  %147 = vmatpush.bf16.msra.mxu0 0
  %148 = vmatpush.bf16.msra.mxu0 0
  %149 = vmatpush.bf16.msra.mxu0 %v124
  %150 = vmatmul.bf16.gmra.mxu0 %v117
  %v151 = vpop.f32.mrf.mxu0
  %v152 = vadd.f32 0.0, %v151
  %v153 = vpop.f32.mrf.mxu0
  %154 = vdwg.mxu0
  %155 = vmatpush.bf16.msra.mxu0 0
  %156 = vmatpush.bf16.msra.mxu0 0
  %157 = vmatpush.bf16.msra.mxu0 0
  %158 = vmatpush.bf16.msra.mxu0 0
  %159 = vmatpush.bf16.msra.mxu0 0
  %160 = vmatpush.bf16.msra.mxu0 0
  %161 = vmatpush.bf16.msra.mxu0 0
  %162 = vmatpush.bf16.msra.mxu0 %v127
  %163 = vmatmul.bf16.gmra.mxu0 %v117
  %v164 = vpop.f32.mrf.mxu0
  %v165 = vadd.f32 0.0, %v164
  %v166 = vpop.f32.mrf.mxu0
  %167 = vdwg.mxu0
  %v170 = vunpack.c.l.b16 %v84
  %v171 = vunpack.c.h.b16 %v84
  %v172 = vunpack.c.l.b16 %v85
  %v173 = vpack.c.b16 %v170, %v170
  %v174 = vpack.c.b16 %v171, %v171
  %v175 = vpack.c.b16 %v172, %v172
  %v177 = vsel %vm115, %v83, 0
  %v180 = vsel %vm119, %v173, 0
  %v183 = vsel %vm119, %v174, 0
  %v186 = vsel %vm119, %v175, 0
  %188 = vmatpush.bf16.msra.mxu0 0
  %189 = vmatpush.bf16.msra.mxu0 0
  %190 = vmatpush.bf16.msra.mxu0 0
  %191 = vmatpush.bf16.msra.mxu0 0
  %192 = vmatpush.bf16.msra.mxu0 0
  %193 = vmatpush.bf16.msra.mxu0 0
  %194 = vmatpush.bf16.msra.mxu0 0
  %195 = vmatpush.bf16.msra.mxu0 %v180
  %196 = vmatmul.bf16.gmra.mxu0 %v177
  %v197 = vpop.f32.mrf.mxu0
  %v198 = vadd.f32 %v139, %v197
  %v199 = vpop.f32.mrf.mxu0
  %200 = vdwg.mxu0
  %201 = vmatpush.bf16.msra.mxu0 0
  %202 = vmatpush.bf16.msra.mxu0 0
  %203 = vmatpush.bf16.msra.mxu0 0
  %204 = vmatpush.bf16.msra.mxu0 0
  %205 = vmatpush.bf16.msra.mxu0 0
  %206 = vmatpush.bf16.msra.mxu0 0
  %207 = vmatpush.bf16.msra.mxu0 0
  %208 = vmatpush.bf16.msra.mxu0 %v183
  %209 = vmatmul.bf16.gmra.mxu0 %v177
  %v210 = vpop.f32.mrf.mxu0
  %v211 = vadd.f32 %v152, %v210
  %v212 = vpop.f32.mrf.mxu0
  %213 = vdwg.mxu0
  %214 = vmatpush.bf16.msra.mxu0 0
  %215 = vmatpush.bf16.msra.mxu0 0
  %216 = vmatpush.bf16.msra.mxu0 0
  %217 = vmatpush.bf16.msra.mxu0 0
  %218 = vmatpush.bf16.msra.mxu0 0
  %219 = vmatpush.bf16.msra.mxu0 0
  %220 = vmatpush.bf16.msra.mxu0 0
  %221 = vmatpush.bf16.msra.mxu0 %v186
  %222 = vmatmul.bf16.gmra.mxu0 %v177
  %v223 = vpop.f32.mrf.mxu0
  %v224 = vadd.f32 %v165, %v223
  %v225 = vpop.f32.mrf.mxu0
  %226 = vdwg.mxu0
  %227 = vrot.lane.b32.xlu0 %v90, 112
  %v228 = vpop.permute.xlu0 %227
  %229 = vrot.lane.b32.xlu0 %v99, 126
  %v230 = vpop.permute.xlu0 %229
  %231 = vrot.lane.b32.xlu0 %v100, 126
  %v232 = vpop.permute.xlu0 %231
  %233 = vrot.lane.b32.xlu0 %v101, 126
  %v234 = vpop.permute.xlu0 %233
  %235 = vrot.lane.b32.xlu0 %v102, 126
  %v236 = vpop.permute.xlu0 %235
  %vm237 = vcmask 1031168
  %v238 = vsel %vm237, %v230, %v232
  %v239 = vsel %vm237, %v232, %v234
  %v240 = vsel %vm237, %v234, %v236
  %v242 = vsel %vm115, %v228, 0
  %v245 = vsel %vm119, %v238, 0
  %v248 = vsel %vm119, %v239, 0
  %v251 = vsel %vm119, %v240, 0
  %253 = vmatpush.bf16.msra.mxu0 0
  %254 = vmatpush.bf16.msra.mxu0 0
  %255 = vmatpush.bf16.msra.mxu0 0
  %256 = vmatpush.bf16.msra.mxu0 0
  %257 = vmatpush.bf16.msra.mxu0 0
  %258 = vmatpush.bf16.msra.mxu0 0
  %259 = vmatpush.bf16.msra.mxu0 0
  %260 = vmatpush.bf16.msra.mxu0 %v245
  %261 = vmatmul.bf16.gmra.mxu0 %v242
  %v262 = vpop.f32.mrf.mxu0
  %v263 = vadd.f32 0.0, %v262
  %v264 = vpop.f32.mrf.mxu0
  %265 = vdwg.mxu0
  %266 = vmatpush.bf16.msra.mxu0 0
  %267 = vmatpush.bf16.msra.mxu0 0
  %268 = vmatpush.bf16.msra.mxu0 0
  %269 = vmatpush.bf16.msra.mxu0 0
  %270 = vmatpush.bf16.msra.mxu0 0
  %271 = vmatpush.bf16.msra.mxu0 0
  %272 = vmatpush.bf16.msra.mxu0 0
  %273 = vmatpush.bf16.msra.mxu0 %v248
  %274 = vmatmul.bf16.gmra.mxu0 %v242
  %v275 = vpop.f32.mrf.mxu0
  %v276 = vadd.f32 0.0, %v275
  %v277 = vpop.f32.mrf.mxu0
  %278 = vdwg.mxu0
  %279 = vmatpush.bf16.msra.mxu0 0
  %280 = vmatpush.bf16.msra.mxu0 0
  %281 = vmatpush.bf16.msra.mxu0 0
  %282 = vmatpush.bf16.msra.mxu0 0
  %283 = vmatpush.bf16.msra.mxu0 0
  %284 = vmatpush.bf16.msra.mxu0 0
  %285 = vmatpush.bf16.msra.mxu0 0
  %286 = vmatpush.bf16.msra.mxu0 %v251
  %287 = vmatmul.bf16.gmra.mxu0 %v242
  %v288 = vpop.f32.mrf.mxu0
  %v289 = vadd.f32 0.0, %v288
  %v290 = vpop.f32.mrf.mxu0
  %291 = vdwg.mxu0
  %v292 = vadd.f32 %v198, %v263
  %v293 = vadd.f32 %v211, %v276
  %v294 = vadd.f32 %v224, %v289
  %295 = vrot.lane.b32.xlu0 %v90, 104
  %v296 = vpop.permute.xlu0 %295
  %297 = vrot.lane.b32.xlu0 %v99, 110
  %v298 = vpop.permute.xlu0 %297
  %299 = vrot.lane.b32.xlu0 %v100, 110
  %v300 = vpop.permute.xlu0 %299
  %301 = vrot.lane.b32.xlu0 %v101, 110
  %v302 = vpop.permute.xlu0 %301
  %303 = vrot.lane.b32.xlu0 %v102, 110
  %v304 = vpop.permute.xlu0 %303
  %vm305 = vcmask 900096
  %v306 = vsel %vm305, %v298, %v300
  %v307 = vsel %vm305, %v300, %v302
  %v308 = vsel %vm305, %v302, %v304
  %v310 = vsel %vm115, %v296, 0
  %v313 = vsel %vm119, %v306, 0
  %v316 = vsel %vm119, %v307, 0
  %v319 = vsel %vm119, %v308, 0
  %321 = vmatpush.bf16.msra.mxu0 0
  %322 = vmatpush.bf16.msra.mxu0 0
  %323 = vmatpush.bf16.msra.mxu0 0
  %324 = vmatpush.bf16.msra.mxu0 0
  %325 = vmatpush.bf16.msra.mxu0 0
  %326 = vmatpush.bf16.msra.mxu0 0
  %327 = vmatpush.bf16.msra.mxu0 0
  %328 = vmatpush.bf16.msra.mxu0 %v313
  %329 = vmatmul.bf16.gmra.mxu0 %v310
  %v330 = vpop.f32.mrf.mxu0
  %v331 = vadd.f32 0.0, %v330
  %v332 = vpop.f32.mrf.mxu0
  %333 = vdwg.mxu0
  %334 = vmatpush.bf16.msra.mxu0 0
  %335 = vmatpush.bf16.msra.mxu0 0
  %336 = vmatpush.bf16.msra.mxu0 0
  %337 = vmatpush.bf16.msra.mxu0 0
  %338 = vmatpush.bf16.msra.mxu0 0
  %339 = vmatpush.bf16.msra.mxu0 0
  %340 = vmatpush.bf16.msra.mxu0 0
  %341 = vmatpush.bf16.msra.mxu0 %v316
  %342 = vmatmul.bf16.gmra.mxu0 %v310
  %v343 = vpop.f32.mrf.mxu0
  %v344 = vadd.f32 0.0, %v343
  %v345 = vpop.f32.mrf.mxu0
  %346 = vdwg.mxu0
  %347 = vmatpush.bf16.msra.mxu0 0
  %348 = vmatpush.bf16.msra.mxu0 0
  %349 = vmatpush.bf16.msra.mxu0 0
  %350 = vmatpush.bf16.msra.mxu0 0
  %351 = vmatpush.bf16.msra.mxu0 0
  %352 = vmatpush.bf16.msra.mxu0 0
  %353 = vmatpush.bf16.msra.mxu0 0
  %354 = vmatpush.bf16.msra.mxu0 %v319
  %355 = vmatmul.bf16.gmra.mxu0 %v310
  %v356 = vpop.f32.mrf.mxu0
  %v357 = vadd.f32 0.0, %v356
  %v358 = vpop.f32.mrf.mxu0
  %359 = vdwg.mxu0
  %v360 = vadd.f32 %v292, %v331
  %v361 = vadd.f32 %v293, %v344
  %v362 = vadd.f32 %v294, %v357
  %363 = vrot.lane.b32.xlu0 %v90, 96
  %v364 = vpop.permute.xlu0 %363
  %365 = vrot.lane.b32.xlu0 %v99, 109
  %v366 = vpop.permute.xlu0 %365
  %367 = vrot.lane.b32.xlu0 %v100, 109
  %v368 = vpop.permute.xlu0 %367
  %369 = vrot.lane.b32.xlu0 %v101, 109
  %v370 = vpop.permute.xlu0 %369
  %371 = vrot.lane.b32.xlu0 %v102, 109
  %v372 = vpop.permute.xlu0 %371
  %vm373 = vcmask 891904
  %v374 = vsel %vm373, %v366, %v368
  %v375 = vsel %vm373, %v368, %v370
  %v376 = vsel %vm373, %v370, %v372
  %v378 = vsel %vm115, %v364, 0
  %v381 = vsel %vm119, %v374, 0
  %v384 = vsel %vm119, %v375, 0
  %v387 = vsel %vm119, %v376, 0
  %389 = vmatpush.bf16.msra.mxu0 0
  %390 = vmatpush.bf16.msra.mxu0 0
  %391 = vmatpush.bf16.msra.mxu0 0
  %392 = vmatpush.bf16.msra.mxu0 0
  %393 = vmatpush.bf16.msra.mxu0 0
  %394 = vmatpush.bf16.msra.mxu0 0
  %395 = vmatpush.bf16.msra.mxu0 0
  %396 = vmatpush.bf16.msra.mxu0 %v381
  %397 = vmatmul.bf16.gmra.mxu0 %v378
  %v398 = vpop.f32.mrf.mxu0
  %v399 = vadd.f32 0.0, %v398
  %v400 = vpop.f32.mrf.mxu0
  %401 = vdwg.mxu0
  %402 = vmatpush.bf16.msra.mxu0 0
  %403 = vmatpush.bf16.msra.mxu0 0
  %404 = vmatpush.bf16.msra.mxu0 0
  %405 = vmatpush.bf16.msra.mxu0 0
  %406 = vmatpush.bf16.msra.mxu0 0
  %407 = vmatpush.bf16.msra.mxu0 0
  %408 = vmatpush.bf16.msra.mxu0 0
  %409 = vmatpush.bf16.msra.mxu0 %v384
  %410 = vmatmul.bf16.gmra.mxu0 %v378
  %v411 = vpop.f32.mrf.mxu0
  %v412 = vadd.f32 0.0, %v411
  %v413 = vpop.f32.mrf.mxu0
  %414 = vdwg.mxu0
  %415 = vmatpush.bf16.msra.mxu0 0
  %416 = vmatpush.bf16.msra.mxu0 0
  %417 = vmatpush.bf16.msra.mxu0 0
  %418 = vmatpush.bf16.msra.mxu0 0
  %419 = vmatpush.bf16.msra.mxu0 0
  %420 = vmatpush.bf16.msra.mxu0 0
  %421 = vmatpush.bf16.msra.mxu0 0
  %422 = vmatpush.bf16.msra.mxu0 %v387
  %423 = vmatmul.bf16.gmra.mxu0 %v378
  %v424 = vpop.f32.mrf.mxu0
  %v425 = vadd.f32 0.0, %v424
  %v426 = vpop.f32.mrf.mxu0
  %427 = vdwg.mxu0
  %v428 = vadd.f32 %v360, %v399
  %v429 = vadd.f32 %v361, %v412
  %v430 = vadd.f32 %v362, %v425
  %431 = vrot.lane.b32.xlu0 %v90, 88
  %v432 = vpop.permute.xlu0 %431
  %433 = vrot.lane.b32.xlu0 %v99, 108
  %v434 = vpop.permute.xlu0 %433
  %435 = vrot.lane.b32.xlu0 %v100, 108
  %v436 = vpop.permute.xlu0 %435
  %437 = vrot.lane.b32.xlu0 %v101, 108
  %v438 = vpop.permute.xlu0 %437
  %439 = vrot.lane.b32.xlu0 %v102, 108
  %v440 = vpop.permute.xlu0 %439
  %vm441 = vcmask 883712
  %v442 = vsel %vm441, %v434, %v436
  %v443 = vsel %vm441, %v436, %v438
  %v444 = vsel %vm441, %v438, %v440
  %v446 = vsel %vm115, %v432, 0
  %v449 = vsel %vm119, %v442, 0
  %v452 = vsel %vm119, %v443, 0
  %v455 = vsel %vm119, %v444, 0
  %457 = vmatpush.bf16.msra.mxu0 0
  %458 = vmatpush.bf16.msra.mxu0 0
  %459 = vmatpush.bf16.msra.mxu0 0
  %460 = vmatpush.bf16.msra.mxu0 0
  %461 = vmatpush.bf16.msra.mxu0 0
  %462 = vmatpush.bf16.msra.mxu0 0
  %463 = vmatpush.bf16.msra.mxu0 0
  %464 = vmatpush.bf16.msra.mxu0 %v449
  %465 = vmatmul.bf16.gmra.mxu0 %v446
  %v466 = vpop.f32.mrf.mxu0
  %v467 = vadd.f32 0.0, %v466
  %v468 = vpop.f32.mrf.mxu0
  %469 = vdwg.mxu0
  %470 = vmatpush.bf16.msra.mxu0 0
  %471 = vmatpush.bf16.msra.mxu0 0
  %472 = vmatpush.bf16.msra.mxu0 0
  %473 = vmatpush.bf16.msra.mxu0 0
  %474 = vmatpush.bf16.msra.mxu0 0
  %475 = vmatpush.bf16.msra.mxu0 0
  %476 = vmatpush.bf16.msra.mxu0 0
  %477 = vmatpush.bf16.msra.mxu0 %v452
  %478 = vmatmul.bf16.gmra.mxu0 %v446
  %v479 = vpop.f32.mrf.mxu0
  %v480 = vadd.f32 0.0, %v479
  %v481 = vpop.f32.mrf.mxu0
  %482 = vdwg.mxu0
  %483 = vmatpush.bf16.msra.mxu0 0
  %484 = vmatpush.bf16.msra.mxu0 0
  %485 = vmatpush.bf16.msra.mxu0 0
  %486 = vmatpush.bf16.msra.mxu0 0
  %487 = vmatpush.bf16.msra.mxu0 0
  %488 = vmatpush.bf16.msra.mxu0 0
  %489 = vmatpush.bf16.msra.mxu0 0
  %490 = vmatpush.bf16.msra.mxu0 %v455
  %491 = vmatmul.bf16.gmra.mxu0 %v446
  %v492 = vpop.f32.mrf.mxu0
  %v493 = vadd.f32 0.0, %v492
  %v494 = vpop.f32.mrf.mxu0
  %495 = vdwg.mxu0
  %v496 = vadd.f32 %v428, %v467
  %v497 = vadd.f32 %v429, %v480
  %v498 = vadd.f32 %v430, %v493
  %499 = vrot.lane.b32.xlu0 %v90, 80
  %v500 = vpop.permute.xlu0 %499
  %501 = vrot.lane.b32.xlu0 %v99, 92
  %v502 = vpop.permute.xlu0 %501
  %503 = vrot.lane.b32.xlu0 %v100, 92
  %v504 = vpop.permute.xlu0 %503
  %505 = vrot.lane.b32.xlu0 %v101, 92
  %v506 = vpop.permute.xlu0 %505
  %507 = vrot.lane.b32.xlu0 %v102, 92
  %v508 = vpop.permute.xlu0 %507
  %vm509 = vcmask 752640
  %v510 = vsel %vm509, %v502, %v504
  %v511 = vsel %vm509, %v504, %v506
  %v512 = vsel %vm509, %v506, %v508
  %v514 = vsel %vm115, %v500, 0
  %v517 = vsel %vm119, %v510, 0
  %v520 = vsel %vm119, %v511, 0
  %v523 = vsel %vm119, %v512, 0
  %525 = vmatpush.bf16.msra.mxu0 0
  %526 = vmatpush.bf16.msra.mxu0 0
  %527 = vmatpush.bf16.msra.mxu0 0
  %528 = vmatpush.bf16.msra.mxu0 0
  %529 = vmatpush.bf16.msra.mxu0 0
  %530 = vmatpush.bf16.msra.mxu0 0
  %531 = vmatpush.bf16.msra.mxu0 0
  %532 = vmatpush.bf16.msra.mxu0 %v517
  %533 = vmatmul.bf16.gmra.mxu0 %v514
  %v534 = vpop.f32.mrf.mxu0
  %v535 = vadd.f32 0.0, %v534
  %v536 = vpop.f32.mrf.mxu0
  %537 = vdwg.mxu0
  %538 = vmatpush.bf16.msra.mxu0 0
  %539 = vmatpush.bf16.msra.mxu0 0
  %540 = vmatpush.bf16.msra.mxu0 0
  %541 = vmatpush.bf16.msra.mxu0 0
  %542 = vmatpush.bf16.msra.mxu0 0
  %543 = vmatpush.bf16.msra.mxu0 0
  %544 = vmatpush.bf16.msra.mxu0 0
  %545 = vmatpush.bf16.msra.mxu0 %v520
  %546 = vmatmul.bf16.gmra.mxu0 %v514
  %v547 = vpop.f32.mrf.mxu0
  %v548 = vadd.f32 0.0, %v547
  %v549 = vpop.f32.mrf.mxu0
  %550 = vdwg.mxu0
  %551 = vmatpush.bf16.msra.mxu0 0
  %552 = vmatpush.bf16.msra.mxu0 0
  %553 = vmatpush.bf16.msra.mxu0 0
  %554 = vmatpush.bf16.msra.mxu0 0
  %555 = vmatpush.bf16.msra.mxu0 0
  %556 = vmatpush.bf16.msra.mxu0 0
  %557 = vmatpush.bf16.msra.mxu0 0
  %558 = vmatpush.bf16.msra.mxu0 %v523
  %559 = vmatmul.bf16.gmra.mxu0 %v514
  %v560 = vpop.f32.mrf.mxu0
  %v561 = vadd.f32 0.0, %v560
  %v562 = vpop.f32.mrf.mxu0
  %563 = vdwg.mxu0
  %v564 = vadd.f32 %v496, %v535
  %v565 = vadd.f32 %v497, %v548
  %v566 = vadd.f32 %v498, %v561
  %567 = vrot.lane.b32.xlu0 %v90, 72
  %v568 = vpop.permute.xlu0 %567
  %569 = vrot.lane.b32.xlu0 %v99, 91
  %v570 = vpop.permute.xlu0 %569
  %571 = vrot.lane.b32.xlu0 %v100, 91
  %v572 = vpop.permute.xlu0 %571
  %573 = vrot.lane.b32.xlu0 %v101, 91
  %v574 = vpop.permute.xlu0 %573
  %575 = vrot.lane.b32.xlu0 %v102, 91
  %v576 = vpop.permute.xlu0 %575
  %vm577 = vcmask 744448
  %v578 = vsel %vm577, %v570, %v572
  %v579 = vsel %vm577, %v572, %v574
  %v580 = vsel %vm577, %v574, %v576
  %v582 = vsel %vm115, %v568, 0
  %v585 = vsel %vm119, %v578, 0
  %v588 = vsel %vm119, %v579, 0
  %v591 = vsel %vm119, %v580, 0
  %593 = vmatpush.bf16.msra.mxu0 0
  %594 = vmatpush.bf16.msra.mxu0 0
  %595 = vmatpush.bf16.msra.mxu0 0
  %596 = vmatpush.bf16.msra.mxu0 0
  %597 = vmatpush.bf16.msra.mxu0 0
  %598 = vmatpush.bf16.msra.mxu0 0
  %599 = vmatpush.bf16.msra.mxu0 0
  %600 = vmatpush.bf16.msra.mxu0 %v585
  %601 = vmatmul.bf16.gmra.mxu0 %v582
  %v602 = vpop.f32.mrf.mxu0
  %v603 = vadd.f32 0.0, %v602
  %v604 = vpop.f32.mrf.mxu0
  %605 = vdwg.mxu0
  %606 = vmatpush.bf16.msra.mxu0 0
  %607 = vmatpush.bf16.msra.mxu0 0
  %608 = vmatpush.bf16.msra.mxu0 0
  %609 = vmatpush.bf16.msra.mxu0 0
  %610 = vmatpush.bf16.msra.mxu0 0
  %611 = vmatpush.bf16.msra.mxu0 0
  %612 = vmatpush.bf16.msra.mxu0 0
  %613 = vmatpush.bf16.msra.mxu0 %v588
  %614 = vmatmul.bf16.gmra.mxu0 %v582
  %v615 = vpop.f32.mrf.mxu0
  %v616 = vadd.f32 0.0, %v615
  %v617 = vpop.f32.mrf.mxu0
  %618 = vdwg.mxu0
  %619 = vmatpush.bf16.msra.mxu0 0
  %620 = vmatpush.bf16.msra.mxu0 0
  %621 = vmatpush.bf16.msra.mxu0 0
  %622 = vmatpush.bf16.msra.mxu0 0
  %623 = vmatpush.bf16.msra.mxu0 0
  %624 = vmatpush.bf16.msra.mxu0 0
  %625 = vmatpush.bf16.msra.mxu0 0
  %626 = vmatpush.bf16.msra.mxu0 %v591
  %627 = vmatmul.bf16.gmra.mxu0 %v582
  %v628 = vpop.f32.mrf.mxu0
  %v629 = vadd.f32 0.0, %v628
  %v630 = vpop.f32.mrf.mxu0
  %631 = vdwg.mxu0
  %v632 = vadd.f32 %v564, %v603
  %v633 = vadd.f32 %v565, %v616
  %v634 = vadd.f32 %v566, %v629
  %635 = vrot.lane.b32.xlu0 %v90, 64
  %v636 = vpop.permute.xlu0 %635
  %637 = vrot.lane.b32.xlu0 %v99, 90
  %v638 = vpop.permute.xlu0 %637
  %639 = vrot.lane.b32.xlu0 %v100, 90
  %v640 = vpop.permute.xlu0 %639
  %641 = vrot.lane.b32.xlu0 %v101, 90
  %v642 = vpop.permute.xlu0 %641
  %643 = vrot.lane.b32.xlu0 %v102, 90
  %v644 = vpop.permute.xlu0 %643
  %vm645 = vcmask 736256
  %v646 = vsel %vm645, %v638, %v640
  %v647 = vsel %vm645, %v640, %v642
  %v648 = vsel %vm645, %v642, %v644
  %v650 = vsel %vm115, %v636, 0
  %v653 = vsel %vm119, %v646, 0
  %v656 = vsel %vm119, %v647, 0
  %v659 = vsel %vm119, %v648, 0
  %661 = vmatpush.bf16.msra.mxu0 0
  %662 = vmatpush.bf16.msra.mxu0 0
  %663 = vmatpush.bf16.msra.mxu0 0
  %664 = vmatpush.bf16.msra.mxu0 0
  %665 = vmatpush.bf16.msra.mxu0 0
  %666 = vmatpush.bf16.msra.mxu0 0
  %667 = vmatpush.bf16.msra.mxu0 0
  %668 = vmatpush.bf16.msra.mxu0 %v653
  %669 = vmatmul.bf16.gmra.mxu0 %v650
  %v670 = vpop.f32.mrf.mxu0
  %v671 = vadd.f32 0.0, %v670
  %v672 = vpop.f32.mrf.mxu0
  %673 = vdwg.mxu0
  %674 = vmatpush.bf16.msra.mxu0 0
  %675 = vmatpush.bf16.msra.mxu0 0
  %676 = vmatpush.bf16.msra.mxu0 0
  %677 = vmatpush.bf16.msra.mxu0 0
  %678 = vmatpush.bf16.msra.mxu0 0
  %679 = vmatpush.bf16.msra.mxu0 0
  %680 = vmatpush.bf16.msra.mxu0 0
  %681 = vmatpush.bf16.msra.mxu0 %v656
  %682 = vmatmul.bf16.gmra.mxu0 %v650
  %v683 = vpop.f32.mrf.mxu0
  %v684 = vadd.f32 0.0, %v683
  %v685 = vpop.f32.mrf.mxu0
  %686 = vdwg.mxu0
  %687 = vmatpush.bf16.msra.mxu0 0
  %688 = vmatpush.bf16.msra.mxu0 0
  %689 = vmatpush.bf16.msra.mxu0 0
  %690 = vmatpush.bf16.msra.mxu0 0
  %691 = vmatpush.bf16.msra.mxu0 0
  %692 = vmatpush.bf16.msra.mxu0 0
  %693 = vmatpush.bf16.msra.mxu0 0
  %694 = vmatpush.bf16.msra.mxu0 %v659
  %695 = vmatmul.bf16.gmra.mxu0 %v650
  %v696 = vpop.f32.mrf.mxu0
  %v697 = vadd.f32 0.0, %v696
  %v698 = vpop.f32.mrf.mxu0
  %699 = vdwg.mxu0
  %v700 = vadd.f32 %v632, %v671
  %v701 = vadd.f32 %v633, %v684
  %v702 = vadd.f32 %v634, %v697
  %v704 = vperm.slane %v37, 0
  %v705 = vperm.slane %v37, 1
  %v706 = vperm.slane %v37, 2
  %v710 = vmul.f32 %v700, %v704
  %v711 = vmul.f32 %v701, %v705
  %v712 = vmul.f32 %v702, %v706
  %v713 = vld [vmem:[%s7] sm:$0xff]
  %v714 = vadd.f32 %v710, %v711
  %v715 = vadd.f32 %v714, %v712
  %716 = vadd.xlane.f32.xlu0 %v715
  %v717 = vpop.xlane.xlu0 %716
  %v718 = vadd.f32 %v713, %v717
  %vm719 = vcmask 7168
  %720 = vst.msk [vmem:[%s7] sm:$0xff] %vm719, %v718
  %v721 = vld [vmem:[%s8] sm:$0xff]
  %v722 = vmul.f32 %v710, %v700
  %v723 = vmul.f32 %v711, %v701
  %v724 = vmul.f32 %v712, %v702
  %v725 = vadd.f32 %v722, %v723
  %v726 = vadd.f32 %v725, %v724
  %727 = vadd.xlane.f32.xlu0 %v726
  %v728 = vpop.xlane.xlu0 %727
  %v729 = vadd.f32 %v721, %v728
  %730 = vst.msk [vmem:[%s8] sm:$0xff] %vm719, %v729
  %v731 = vpack.c.bf16 %v701, %v700
  %v732 = vpack.c.bf16 %v702, %v702
  %733 = vst [vmem:[%s6] sm:$0xff] %v731
  %734 = vst [vmem:[%s6 + $0x8] sm:$0xf] %v732
  %s735 = scalar_lea.vmem %s0, 16
  %v736 = vld [vmem:[%s735] sm:$0xff]
  %v737 = vld [vmem:[%s735 + $0x8] sm:$0xff]
  %v738 = vunpack.c.l.bf16 %v736
  %v739 = vunpack.c.h.bf16 %v736
  %v740 = vunpack.c.l.bf16 %v737
  %v741 = vunpack.c.h.bf16 %v737
  %v742 = vmul.f32 %v738, %v47
  %v743 = vmul.f32 %v739, %v47
  %v744 = vmul.f32 %v740, %v47
  %v745 = vmul.f32 %v741, %v47
  %v746 = vadd.f32 %v742, %v56
  %v747 = vadd.f32 %v743, %v56
  %v748 = vadd.f32 %v744, %v56
  %v749 = vadd.f32 %v745, %v56
  %v750 = vmax.f32 %v746, 0.0
  %v751 = vmax.f32 %v747, 0.0
  %v752 = vmax.f32 %v748, 0.0
  %v753 = vmax.f32 %v749, 0.0
  %v754 = vmul.f32 %v750, %v67
  %v755 = vmul.f32 %v751, %v68
  %v756 = vmul.f32 %v752, %v69
  %v757 = vmul.f32 %v753, %v70
  %v758 = vpack.c.bf16 %v755, %v754
  %v759 = vpack.c.bf16 %v757, %v756
  %760 = vst [vmem:[#allocation2] sm:$0xff] %v758
  %761 = vst [vmem:[#allocation2 + $0x8] sm:$0xff] %v759
  %v762 = vld [vmem:[%s1] sm:$0xf]
  %v763 = vld [vmem:[#allocation2] sm:$0xff]
  %v764 = vld [vmem:[#allocation2 + $0x8] sm:$0xf]
  %v765 = vld [vmem:[#allocation2] sm:$0xff]
  %v766 = vld [vmem:[#allocation2 + $0x8] sm:$0xff]
  %v768 = vunpack.c.l.b16 %v762
  %v769 = vpack.c.b16 %v768, %v768
  %770 = vrot.lane.b32.xlu0 %v769, 120
  %v771 = vpop.permute.xlu0 %770
  %v774 = vunpack.c.l.b16 %v765
  %v775 = vunpack.c.h.b16 %v765
  %v776 = vunpack.c.l.b16 %v766
  %v777 = vunpack.c.h.b16 %v766
  %v778 = vpack.c.b16 %v774, %v774
  %v779 = vpack.c.b16 %v775, %v775
  %v780 = vpack.c.b16 %v776, %v776
  %v781 = vpack.c.b16 %v777, %v777
  %782 = vrot.lane.b32.xlu0 %v778, 127
  %v783 = vpop.permute.xlu0 %782
  %784 = vrot.lane.b32.xlu0 %v779, 127
  %v785 = vpop.permute.xlu0 %784
  %786 = vrot.lane.b32.xlu0 %v780, 127
  %v787 = vpop.permute.xlu0 %786
  %788 = vrot.lane.b32.xlu0 %v781, 127
  %v789 = vpop.permute.xlu0 %788
  %v790 = vsel %vm111, %v783, %v785
  %v791 = vsel %vm111, %v785, %v787
  %v792 = vsel %vm111, %v787, %v789
  %v794 = vsel %vm115, %v771, 0
  %v797 = vsel %vm119, %v790, 0
  %v800 = vsel %vm119, %v791, 0
  %v803 = vsel %vm119, %v792, 0
  %805 = vmatpush.bf16.msra.mxu0 0
  %806 = vmatpush.bf16.msra.mxu0 0
  %807 = vmatpush.bf16.msra.mxu0 0
  %808 = vmatpush.bf16.msra.mxu0 0
  %809 = vmatpush.bf16.msra.mxu0 0
  %810 = vmatpush.bf16.msra.mxu0 0
  %811 = vmatpush.bf16.msra.mxu0 0
  %812 = vmatpush.bf16.msra.mxu0 %v797
  %813 = vmatmul.bf16.gmra.mxu0 %v794
  %v814 = vpop.f32.mrf.mxu0
  %v815 = vadd.f32 0.0, %v814
  %v816 = vpop.f32.mrf.mxu0
  %817 = vdwg.mxu0
  %818 = vmatpush.bf16.msra.mxu0 0
  %819 = vmatpush.bf16.msra.mxu0 0
  %820 = vmatpush.bf16.msra.mxu0 0
  %821 = vmatpush.bf16.msra.mxu0 0
  %822 = vmatpush.bf16.msra.mxu0 0
  %823 = vmatpush.bf16.msra.mxu0 0
  %824 = vmatpush.bf16.msra.mxu0 0
  %825 = vmatpush.bf16.msra.mxu0 %v800
  %826 = vmatmul.bf16.gmra.mxu0 %v794
  %v827 = vpop.f32.mrf.mxu0
  %v828 = vadd.f32 0.0, %v827
  %v829 = vpop.f32.mrf.mxu0
  %830 = vdwg.mxu0
  %831 = vmatpush.bf16.msra.mxu0 0
  %832 = vmatpush.bf16.msra.mxu0 0
  %833 = vmatpush.bf16.msra.mxu0 0
  %834 = vmatpush.bf16.msra.mxu0 0
  %835 = vmatpush.bf16.msra.mxu0 0
  %836 = vmatpush.bf16.msra.mxu0 0
  %837 = vmatpush.bf16.msra.mxu0 0
  %838 = vmatpush.bf16.msra.mxu0 %v803
  %839 = vmatmul.bf16.gmra.mxu0 %v794
  %v840 = vpop.f32.mrf.mxu0
  %v841 = vadd.f32 0.0, %v840
  %v842 = vpop.f32.mrf.mxu0
  %843 = vdwg.mxu0
  %v846 = vunpack.c.l.b16 %v763
  %v847 = vunpack.c.h.b16 %v763
  %v848 = vunpack.c.l.b16 %v764
  %v849 = vpack.c.b16 %v846, %v846
  %v850 = vpack.c.b16 %v847, %v847
  %v851 = vpack.c.b16 %v848, %v848
  %v853 = vsel %vm115, %v762, 0
  %v856 = vsel %vm119, %v849, 0
  %v859 = vsel %vm119, %v850, 0
  %v862 = vsel %vm119, %v851, 0
  %864 = vmatpush.bf16.msra.mxu0 0
  %865 = vmatpush.bf16.msra.mxu0 0
  %866 = vmatpush.bf16.msra.mxu0 0
  %867 = vmatpush.bf16.msra.mxu0 0
  %868 = vmatpush.bf16.msra.mxu0 0
  %869 = vmatpush.bf16.msra.mxu0 0
  %870 = vmatpush.bf16.msra.mxu0 0
  %871 = vmatpush.bf16.msra.mxu0 %v856
  %872 = vmatmul.bf16.gmra.mxu0 %v853
  %v873 = vpop.f32.mrf.mxu0
  %v874 = vadd.f32 %v815, %v873
  %v875 = vpop.f32.mrf.mxu0
  %876 = vdwg.mxu0
  %877 = vmatpush.bf16.msra.mxu0 0
  %878 = vmatpush.bf16.msra.mxu0 0
  %879 = vmatpush.bf16.msra.mxu0 0
  %880 = vmatpush.bf16.msra.mxu0 0
  %881 = vmatpush.bf16.msra.mxu0 0
  %882 = vmatpush.bf16.msra.mxu0 0
  %883 = vmatpush.bf16.msra.mxu0 0
  %884 = vmatpush.bf16.msra.mxu0 %v859
  %885 = vmatmul.bf16.gmra.mxu0 %v853
  %v886 = vpop.f32.mrf.mxu0
  %v887 = vadd.f32 %v828, %v886
  %v888 = vpop.f32.mrf.mxu0
  %889 = vdwg.mxu0
  %890 = vmatpush.bf16.msra.mxu0 0
  %891 = vmatpush.bf16.msra.mxu0 0
  %892 = vmatpush.bf16.msra.mxu0 0
  %893 = vmatpush.bf16.msra.mxu0 0
  %894 = vmatpush.bf16.msra.mxu0 0
  %895 = vmatpush.bf16.msra.mxu0 0
  %896 = vmatpush.bf16.msra.mxu0 0
  %897 = vmatpush.bf16.msra.mxu0 %v862
  %898 = vmatmul.bf16.gmra.mxu0 %v853
  %v899 = vpop.f32.mrf.mxu0
  %v900 = vadd.f32 %v841, %v899
  %v901 = vpop.f32.mrf.mxu0
  %902 = vdwg.mxu0
  %903 = vrot.lane.b32.xlu0 %v769, 112
  %v904 = vpop.permute.xlu0 %903
  %905 = vrot.lane.b32.xlu0 %v778, 126
  %v906 = vpop.permute.xlu0 %905
  %907 = vrot.lane.b32.xlu0 %v779, 126
  %v908 = vpop.permute.xlu0 %907
  %909 = vrot.lane.b32.xlu0 %v780, 126
  %v910 = vpop.permute.xlu0 %909
  %911 = vrot.lane.b32.xlu0 %v781, 126
  %v912 = vpop.permute.xlu0 %911
  %v913 = vsel %vm237, %v906, %v908
  %v914 = vsel %vm237, %v908, %v910
  %v915 = vsel %vm237, %v910, %v912
  %v917 = vsel %vm115, %v904, 0
  %v920 = vsel %vm119, %v913, 0
  %v923 = vsel %vm119, %v914, 0
  %v926 = vsel %vm119, %v915, 0
  %928 = vmatpush.bf16.msra.mxu0 0
  %929 = vmatpush.bf16.msra.mxu0 0
  %930 = vmatpush.bf16.msra.mxu0 0
  %931 = vmatpush.bf16.msra.mxu0 0
  %932 = vmatpush.bf16.msra.mxu0 0
  %933 = vmatpush.bf16.msra.mxu0 0
  %934 = vmatpush.bf16.msra.mxu0 0
  %935 = vmatpush.bf16.msra.mxu0 %v920
  %936 = vmatmul.bf16.gmra.mxu0 %v917
  %v937 = vpop.f32.mrf.mxu0
  %v938 = vadd.f32 0.0, %v937
  %v939 = vpop.f32.mrf.mxu0
  %940 = vdwg.mxu0
  %941 = vmatpush.bf16.msra.mxu0 0
  %942 = vmatpush.bf16.msra.mxu0 0
  %943 = vmatpush.bf16.msra.mxu0 0
  %944 = vmatpush.bf16.msra.mxu0 0
  %945 = vmatpush.bf16.msra.mxu0 0
  %946 = vmatpush.bf16.msra.mxu0 0
  %947 = vmatpush.bf16.msra.mxu0 0
  %948 = vmatpush.bf16.msra.mxu0 %v923
  %949 = vmatmul.bf16.gmra.mxu0 %v917
  %v950 = vpop.f32.mrf.mxu0
  %v951 = vadd.f32 0.0, %v950
  %v952 = vpop.f32.mrf.mxu0
  %953 = vdwg.mxu0
  %954 = vmatpush.bf16.msra.mxu0 0
  %955 = vmatpush.bf16.msra.mxu0 0
  %956 = vmatpush.bf16.msra.mxu0 0
  %957 = vmatpush.bf16.msra.mxu0 0
  %958 = vmatpush.bf16.msra.mxu0 0
  %959 = vmatpush.bf16.msra.mxu0 0
  %960 = vmatpush.bf16.msra.mxu0 0
  %961 = vmatpush.bf16.msra.mxu0 %v926
  %962 = vmatmul.bf16.gmra.mxu0 %v917
  %v963 = vpop.f32.mrf.mxu0
  %v964 = vadd.f32 0.0, %v963
  %v965 = vpop.f32.mrf.mxu0
  %966 = vdwg.mxu0
  %v967 = vadd.f32 %v874, %v938
  %v968 = vadd.f32 %v887, %v951
  %v969 = vadd.f32 %v900, %v964
  %970 = vrot.lane.b32.xlu0 %v769, 104
  %v971 = vpop.permute.xlu0 %970
  %972 = vrot.lane.b32.xlu0 %v778, 110
  %v973 = vpop.permute.xlu0 %972
  %974 = vrot.lane.b32.xlu0 %v779, 110
  %v975 = vpop.permute.xlu0 %974
  %976 = vrot.lane.b32.xlu0 %v780, 110
  %v977 = vpop.permute.xlu0 %976
  %978 = vrot.lane.b32.xlu0 %v781, 110
  %v979 = vpop.permute.xlu0 %978
  %v980 = vsel %vm305, %v973, %v975
  %v981 = vsel %vm305, %v975, %v977
  %v982 = vsel %vm305, %v977, %v979
  %v984 = vsel %vm115, %v971, 0
  %v987 = vsel %vm119, %v980, 0
  %v990 = vsel %vm119, %v981, 0
  %v993 = vsel %vm119, %v982, 0
  %995 = vmatpush.bf16.msra.mxu0 0
  %996 = vmatpush.bf16.msra.mxu0 0
  %997 = vmatpush.bf16.msra.mxu0 0
  %998 = vmatpush.bf16.msra.mxu0 0
  %999 = vmatpush.bf16.msra.mxu0 0
  %1000 = vmatpush.bf16.msra.mxu0 0
  %1001 = vmatpush.bf16.msra.mxu0 0
  %1002 = vmatpush.bf16.msra.mxu0 %v987
  %1003 = vmatmul.bf16.gmra.mxu0 %v984
  %v1004 = vpop.f32.mrf.mxu0
  %v1005 = vadd.f32 0.0, %v1004
  %v1006 = vpop.f32.mrf.mxu0
  %1007 = vdwg.mxu0
  %1008 = vmatpush.bf16.msra.mxu0 0
  %1009 = vmatpush.bf16.msra.mxu0 0
  %1010 = vmatpush.bf16.msra.mxu0 0
  %1011 = vmatpush.bf16.msra.mxu0 0
  %1012 = vmatpush.bf16.msra.mxu0 0
  %1013 = vmatpush.bf16.msra.mxu0 0
  %1014 = vmatpush.bf16.msra.mxu0 0
  %1015 = vmatpush.bf16.msra.mxu0 %v990
  %1016 = vmatmul.bf16.gmra.mxu0 %v984
  %v1017 = vpop.f32.mrf.mxu0
  %v1018 = vadd.f32 0.0, %v1017
  %v1019 = vpop.f32.mrf.mxu0
  %1020 = vdwg.mxu0
  %1021 = vmatpush.bf16.msra.mxu0 0
  %1022 = vmatpush.bf16.msra.mxu0 0
  %1023 = vmatpush.bf16.msra.mxu0 0
  %1024 = vmatpush.bf16.msra.mxu0 0
  %1025 = vmatpush.bf16.msra.mxu0 0
  %1026 = vmatpush.bf16.msra.mxu0 0
  %1027 = vmatpush.bf16.msra.mxu0 0
  %1028 = vmatpush.bf16.msra.mxu0 %v993
  %1029 = vmatmul.bf16.gmra.mxu0 %v984
  %v1030 = vpop.f32.mrf.mxu0
  %v1031 = vadd.f32 0.0, %v1030
  %v1032 = vpop.f32.mrf.mxu0
  %1033 = vdwg.mxu0
  %v1034 = vadd.f32 %v967, %v1005
  %v1035 = vadd.f32 %v968, %v1018
  %v1036 = vadd.f32 %v969, %v1031
  %1037 = vrot.lane.b32.xlu0 %v769, 96
  %v1038 = vpop.permute.xlu0 %1037
  %1039 = vrot.lane.b32.xlu0 %v778, 109
  %v1040 = vpop.permute.xlu0 %1039
  %1041 = vrot.lane.b32.xlu0 %v779, 109
  %v1042 = vpop.permute.xlu0 %1041
  %1043 = vrot.lane.b32.xlu0 %v780, 109
  %v1044 = vpop.permute.xlu0 %1043
  %1045 = vrot.lane.b32.xlu0 %v781, 109
  %v1046 = vpop.permute.xlu0 %1045
  %v1047 = vsel %vm373, %v1040, %v1042
  %v1048 = vsel %vm373, %v1042, %v1044
  %v1049 = vsel %vm373, %v1044, %v1046
  %v1051 = vsel %vm115, %v1038, 0
  %v1054 = vsel %vm119, %v1047, 0
  %v1057 = vsel %vm119, %v1048, 0
  %v1060 = vsel %vm119, %v1049, 0
  %1062 = vmatpush.bf16.msra.mxu0 0
  %1063 = vmatpush.bf16.msra.mxu0 0
  %1064 = vmatpush.bf16.msra.mxu0 0
  %1065 = vmatpush.bf16.msra.mxu0 0
  %1066 = vmatpush.bf16.msra.mxu0 0
  %1067 = vmatpush.bf16.msra.mxu0 0
  %1068 = vmatpush.bf16.msra.mxu0 0
  %1069 = vmatpush.bf16.msra.mxu0 %v1054
  %1070 = vmatmul.bf16.gmra.mxu0 %v1051
  %v1071 = vpop.f32.mrf.mxu0
  %v1072 = vadd.f32 0.0, %v1071
  %v1073 = vpop.f32.mrf.mxu0
  %1074 = vdwg.mxu0
  %1075 = vmatpush.bf16.msra.mxu0 0
  %1076 = vmatpush.bf16.msra.mxu0 0
  %1077 = vmatpush.bf16.msra.mxu0 0
  %1078 = vmatpush.bf16.msra.mxu0 0
  %1079 = vmatpush.bf16.msra.mxu0 0
  %1080 = vmatpush.bf16.msra.mxu0 0
  %1081 = vmatpush.bf16.msra.mxu0 0
  %1082 = vmatpush.bf16.msra.mxu0 %v1057
  %1083 = vmatmul.bf16.gmra.mxu0 %v1051
  %v1084 = vpop.f32.mrf.mxu0
  %v1085 = vadd.f32 0.0, %v1084
  %v1086 = vpop.f32.mrf.mxu0
  %1087 = vdwg.mxu0
  %1088 = vmatpush.bf16.msra.mxu0 0
  %1089 = vmatpush.bf16.msra.mxu0 0
  %1090 = vmatpush.bf16.msra.mxu0 0
  %1091 = vmatpush.bf16.msra.mxu0 0
  %1092 = vmatpush.bf16.msra.mxu0 0
  %1093 = vmatpush.bf16.msra.mxu0 0
  %1094 = vmatpush.bf16.msra.mxu0 0
  %1095 = vmatpush.bf16.msra.mxu0 %v1060
  %1096 = vmatmul.bf16.gmra.mxu0 %v1051
  %v1097 = vpop.f32.mrf.mxu0
  %v1098 = vadd.f32 0.0, %v1097
  %v1099 = vpop.f32.mrf.mxu0
  %1100 = vdwg.mxu0
  %v1101 = vadd.f32 %v1034, %v1072
  %v1102 = vadd.f32 %v1035, %v1085
  %v1103 = vadd.f32 %v1036, %v1098
  %1104 = vrot.lane.b32.xlu0 %v769, 88
  %v1105 = vpop.permute.xlu0 %1104
  %1106 = vrot.lane.b32.xlu0 %v778, 108
  %v1107 = vpop.permute.xlu0 %1106
  %1108 = vrot.lane.b32.xlu0 %v779, 108
  %v1109 = vpop.permute.xlu0 %1108
  %1110 = vrot.lane.b32.xlu0 %v780, 108
  %v1111 = vpop.permute.xlu0 %1110
  %1112 = vrot.lane.b32.xlu0 %v781, 108
  %v1113 = vpop.permute.xlu0 %1112
  %v1114 = vsel %vm441, %v1107, %v1109
  %v1115 = vsel %vm441, %v1109, %v1111
  %v1116 = vsel %vm441, %v1111, %v1113
  %v1118 = vsel %vm115, %v1105, 0
  %v1121 = vsel %vm119, %v1114, 0
  %v1124 = vsel %vm119, %v1115, 0
  %v1127 = vsel %vm119, %v1116, 0
  %1129 = vmatpush.bf16.msra.mxu0 0
  %1130 = vmatpush.bf16.msra.mxu0 0
  %1131 = vmatpush.bf16.msra.mxu0 0
  %1132 = vmatpush.bf16.msra.mxu0 0
  %1133 = vmatpush.bf16.msra.mxu0 0
  %1134 = vmatpush.bf16.msra.mxu0 0
  %1135 = vmatpush.bf16.msra.mxu0 0
  %1136 = vmatpush.bf16.msra.mxu0 %v1121
  %1137 = vmatmul.bf16.gmra.mxu0 %v1118
  %v1138 = vpop.f32.mrf.mxu0
  %v1139 = vadd.f32 0.0, %v1138
  %v1140 = vpop.f32.mrf.mxu0
  %1141 = vdwg.mxu0
  %1142 = vmatpush.bf16.msra.mxu0 0
  %1143 = vmatpush.bf16.msra.mxu0 0
  %1144 = vmatpush.bf16.msra.mxu0 0
  %1145 = vmatpush.bf16.msra.mxu0 0
  %1146 = vmatpush.bf16.msra.mxu0 0
  %1147 = vmatpush.bf16.msra.mxu0 0
  %1148 = vmatpush.bf16.msra.mxu0 0
  %1149 = vmatpush.bf16.msra.mxu0 %v1124
  %1150 = vmatmul.bf16.gmra.mxu0 %v1118
  %v1151 = vpop.f32.mrf.mxu0
  %v1152 = vadd.f32 0.0, %v1151
  %v1153 = vpop.f32.mrf.mxu0
  %1154 = vdwg.mxu0
  %1155 = vmatpush.bf16.msra.mxu0 0
  %1156 = vmatpush.bf16.msra.mxu0 0
  %1157 = vmatpush.bf16.msra.mxu0 0
  %1158 = vmatpush.bf16.msra.mxu0 0
  %1159 = vmatpush.bf16.msra.mxu0 0
  %1160 = vmatpush.bf16.msra.mxu0 0
  %1161 = vmatpush.bf16.msra.mxu0 0
  %1162 = vmatpush.bf16.msra.mxu0 %v1127
  %1163 = vmatmul.bf16.gmra.mxu0 %v1118
  %v1164 = vpop.f32.mrf.mxu0
  %v1165 = vadd.f32 0.0, %v1164
  %v1166 = vpop.f32.mrf.mxu0
  %1167 = vdwg.mxu0
  %v1168 = vadd.f32 %v1101, %v1139
  %v1169 = vadd.f32 %v1102, %v1152
  %v1170 = vadd.f32 %v1103, %v1165
  %1171 = vrot.lane.b32.xlu0 %v769, 80
  %v1172 = vpop.permute.xlu0 %1171
  %1173 = vrot.lane.b32.xlu0 %v778, 92
  %v1174 = vpop.permute.xlu0 %1173
  %1175 = vrot.lane.b32.xlu0 %v779, 92
  %v1176 = vpop.permute.xlu0 %1175
  %1177 = vrot.lane.b32.xlu0 %v780, 92
  %v1178 = vpop.permute.xlu0 %1177
  %1179 = vrot.lane.b32.xlu0 %v781, 92
  %v1180 = vpop.permute.xlu0 %1179
  %v1181 = vsel %vm509, %v1174, %v1176
  %v1182 = vsel %vm509, %v1176, %v1178
  %v1183 = vsel %vm509, %v1178, %v1180
  %v1185 = vsel %vm115, %v1172, 0
  %v1188 = vsel %vm119, %v1181, 0
  %v1191 = vsel %vm119, %v1182, 0
  %v1194 = vsel %vm119, %v1183, 0
  %1196 = vmatpush.bf16.msra.mxu0 0
  %1197 = vmatpush.bf16.msra.mxu0 0
  %1198 = vmatpush.bf16.msra.mxu0 0
  %1199 = vmatpush.bf16.msra.mxu0 0
  %1200 = vmatpush.bf16.msra.mxu0 0
  %1201 = vmatpush.bf16.msra.mxu0 0
  %1202 = vmatpush.bf16.msra.mxu0 0
  %1203 = vmatpush.bf16.msra.mxu0 %v1188
  %1204 = vmatmul.bf16.gmra.mxu0 %v1185
  %v1205 = vpop.f32.mrf.mxu0
  %v1206 = vadd.f32 0.0, %v1205
  %v1207 = vpop.f32.mrf.mxu0
  %1208 = vdwg.mxu0
  %1209 = vmatpush.bf16.msra.mxu0 0
  %1210 = vmatpush.bf16.msra.mxu0 0
  %1211 = vmatpush.bf16.msra.mxu0 0
  %1212 = vmatpush.bf16.msra.mxu0 0
  %1213 = vmatpush.bf16.msra.mxu0 0
  %1214 = vmatpush.bf16.msra.mxu0 0
  %1215 = vmatpush.bf16.msra.mxu0 0
  %1216 = vmatpush.bf16.msra.mxu0 %v1191
  %1217 = vmatmul.bf16.gmra.mxu0 %v1185
  %v1218 = vpop.f32.mrf.mxu0
  %v1219 = vadd.f32 0.0, %v1218
  %v1220 = vpop.f32.mrf.mxu0
  %1221 = vdwg.mxu0
  %1222 = vmatpush.bf16.msra.mxu0 0
  %1223 = vmatpush.bf16.msra.mxu0 0
  %1224 = vmatpush.bf16.msra.mxu0 0
  %1225 = vmatpush.bf16.msra.mxu0 0
  %1226 = vmatpush.bf16.msra.mxu0 0
  %1227 = vmatpush.bf16.msra.mxu0 0
  %1228 = vmatpush.bf16.msra.mxu0 0
  %1229 = vmatpush.bf16.msra.mxu0 %v1194
  %1230 = vmatmul.bf16.gmra.mxu0 %v1185
  %v1231 = vpop.f32.mrf.mxu0
  %v1232 = vadd.f32 0.0, %v1231
  %v1233 = vpop.f32.mrf.mxu0
  %1234 = vdwg.mxu0
  %v1235 = vadd.f32 %v1168, %v1206
  %v1236 = vadd.f32 %v1169, %v1219
  %v1237 = vadd.f32 %v1170, %v1232
  %1238 = vrot.lane.b32.xlu0 %v769, 72
  %v1239 = vpop.permute.xlu0 %1238
  %1240 = vrot.lane.b32.xlu0 %v778, 91
  %v1241 = vpop.permute.xlu0 %1240
  %1242 = vrot.lane.b32.xlu0 %v779, 91
  %v1243 = vpop.permute.xlu0 %1242
  %1244 = vrot.lane.b32.xlu0 %v780, 91
  %v1245 = vpop.permute.xlu0 %1244
  %1246 = vrot.lane.b32.xlu0 %v781, 91
  %v1247 = vpop.permute.xlu0 %1246
  %v1248 = vsel %vm577, %v1241, %v1243
  %v1249 = vsel %vm577, %v1243, %v1245
  %v1250 = vsel %vm577, %v1245, %v1247
  %v1252 = vsel %vm115, %v1239, 0
  %v1255 = vsel %vm119, %v1248, 0
  %v1258 = vsel %vm119, %v1249, 0
  %v1261 = vsel %vm119, %v1250, 0
  %1263 = vmatpush.bf16.msra.mxu0 0
  %1264 = vmatpush.bf16.msra.mxu0 0
  %1265 = vmatpush.bf16.msra.mxu0 0
  %1266 = vmatpush.bf16.msra.mxu0 0
  %1267 = vmatpush.bf16.msra.mxu0 0
  %1268 = vmatpush.bf16.msra.mxu0 0
  %1269 = vmatpush.bf16.msra.mxu0 0
  %1270 = vmatpush.bf16.msra.mxu0 %v1255
  %1271 = vmatmul.bf16.gmra.mxu0 %v1252
  %v1272 = vpop.f32.mrf.mxu0
  %v1273 = vadd.f32 0.0, %v1272
  %v1274 = vpop.f32.mrf.mxu0
  %1275 = vdwg.mxu0
  %1276 = vmatpush.bf16.msra.mxu0 0
  %1277 = vmatpush.bf16.msra.mxu0 0
  %1278 = vmatpush.bf16.msra.mxu0 0
  %1279 = vmatpush.bf16.msra.mxu0 0
  %1280 = vmatpush.bf16.msra.mxu0 0
  %1281 = vmatpush.bf16.msra.mxu0 0
  %1282 = vmatpush.bf16.msra.mxu0 0
  %1283 = vmatpush.bf16.msra.mxu0 %v1258
  %1284 = vmatmul.bf16.gmra.mxu0 %v1252
  %v1285 = vpop.f32.mrf.mxu0
  %v1286 = vadd.f32 0.0, %v1285
  %v1287 = vpop.f32.mrf.mxu0
  %1288 = vdwg.mxu0
  %1289 = vmatpush.bf16.msra.mxu0 0
  %1290 = vmatpush.bf16.msra.mxu0 0
  %1291 = vmatpush.bf16.msra.mxu0 0
  %1292 = vmatpush.bf16.msra.mxu0 0
  %1293 = vmatpush.bf16.msra.mxu0 0
  %1294 = vmatpush.bf16.msra.mxu0 0
  %1295 = vmatpush.bf16.msra.mxu0 0
  %1296 = vmatpush.bf16.msra.mxu0 %v1261
  %1297 = vmatmul.bf16.gmra.mxu0 %v1252
  %v1298 = vpop.f32.mrf.mxu0
  %v1299 = vadd.f32 0.0, %v1298
  %v1300 = vpop.f32.mrf.mxu0
  %1301 = vdwg.mxu0
  %v1302 = vadd.f32 %v1235, %v1273
  %v1303 = vadd.f32 %v1236, %v1286
  %v1304 = vadd.f32 %v1237, %v1299
  %1305 = vrot.lane.b32.xlu0 %v769, 64
  %v1306 = vpop.permute.xlu0 %1305
  %1307 = vrot.lane.b32.xlu0 %v778, 90
  %v1308 = vpop.permute.xlu0 %1307
  %1309 = vrot.lane.b32.xlu0 %v779, 90
  %v1310 = vpop.permute.xlu0 %1309
  %1311 = vrot.lane.b32.xlu0 %v780, 90
  %v1312 = vpop.permute.xlu0 %1311
  %1313 = vrot.lane.b32.xlu0 %v781, 90
  %v1314 = vpop.permute.xlu0 %1313
  %v1315 = vsel %vm645, %v1308, %v1310
  %v1316 = vsel %vm645, %v1310, %v1312
  %v1317 = vsel %vm645, %v1312, %v1314
  %v1319 = vsel %vm115, %v1306, 0
  %v1322 = vsel %vm119, %v1315, 0
  %v1325 = vsel %vm119, %v1316, 0
  %v1328 = vsel %vm119, %v1317, 0
  %1330 = vmatpush.bf16.msra.mxu0 0
  %1331 = vmatpush.bf16.msra.mxu0 0
  %1332 = vmatpush.bf16.msra.mxu0 0
  %1333 = vmatpush.bf16.msra.mxu0 0
  %1334 = vmatpush.bf16.msra.mxu0 0
  %1335 = vmatpush.bf16.msra.mxu0 0
  %1336 = vmatpush.bf16.msra.mxu0 0
  %1337 = vmatpush.bf16.msra.mxu0 %v1322
  %1338 = vmatmul.bf16.gmra.mxu0 %v1319
  %v1339 = vpop.f32.mrf.mxu0
  %v1340 = vadd.f32 0.0, %v1339
  %v1341 = vpop.f32.mrf.mxu0
  %1342 = vdwg.mxu0
  %1343 = vmatpush.bf16.msra.mxu0 0
  %1344 = vmatpush.bf16.msra.mxu0 0
  %1345 = vmatpush.bf16.msra.mxu0 0
  %1346 = vmatpush.bf16.msra.mxu0 0
  %1347 = vmatpush.bf16.msra.mxu0 0
  %1348 = vmatpush.bf16.msra.mxu0 0
  %1349 = vmatpush.bf16.msra.mxu0 0
  %1350 = vmatpush.bf16.msra.mxu0 %v1325
  %1351 = vmatmul.bf16.gmra.mxu0 %v1319
  %v1352 = vpop.f32.mrf.mxu0
  %v1353 = vadd.f32 0.0, %v1352
  %v1354 = vpop.f32.mrf.mxu0
  %1355 = vdwg.mxu0
  %1356 = vmatpush.bf16.msra.mxu0 0
  %1357 = vmatpush.bf16.msra.mxu0 0
  %1358 = vmatpush.bf16.msra.mxu0 0
  %1359 = vmatpush.bf16.msra.mxu0 0
  %1360 = vmatpush.bf16.msra.mxu0 0
  %1361 = vmatpush.bf16.msra.mxu0 0
  %1362 = vmatpush.bf16.msra.mxu0 0
  %1363 = vmatpush.bf16.msra.mxu0 %v1328
  %1364 = vmatmul.bf16.gmra.mxu0 %v1319
  %v1365 = vpop.f32.mrf.mxu0
  %v1366 = vadd.f32 0.0, %v1365
  %v1367 = vpop.f32.mrf.mxu0
  %1368 = vdwg.mxu0
  %v1369 = vadd.f32 %v1302, %v1340
  %v1370 = vadd.f32 %v1303, %v1353
  %v1371 = vadd.f32 %v1304, %v1366
  %v1372 = vmul.f32 %v1369, %v704
  %v1373 = vmul.f32 %v1370, %v705
  %v1374 = vmul.f32 %v1371, %v706
  %v1375 = vld [vmem:[%s7] sm:$0xff]
  %v1376 = vadd.f32 %v1372, %v1373
  %v1377 = vadd.f32 %v1376, %v1374
  %1378 = vadd.xlane.f32.xlu0 %v1377
  %v1379 = vpop.xlane.xlu0 %1378
  %v1380 = vadd.f32 %v1375, %v1379
  %1381 = vst.msk [vmem:[%s7] sm:$0xff] %vm719, %v1380
  %v1382 = vld [vmem:[%s8] sm:$0xff]
  %v1383 = vmul.f32 %v1372, %v1369
  %v1384 = vmul.f32 %v1373, %v1370
  %v1385 = vmul.f32 %v1374, %v1371
  %v1386 = vadd.f32 %v1383, %v1384
  %v1387 = vadd.f32 %v1386, %v1385
  %1388 = vadd.xlane.f32.xlu0 %v1387
  %v1389 = vpop.xlane.xlu0 %1388
  %v1390 = vadd.f32 %v1382, %v1389
  %1391 = vst.msk [vmem:[%s8] sm:$0xff] %vm719, %v1390
  %v1392 = vpack.c.bf16 %v1370, %v1369
  %v1393 = vpack.c.bf16 %v1371, %v1371
  %s1394 = scalar_lea.vmem %s6, 12
  %1395 = vst [vmem:[%s1394] sm:$0xff] %v1392
  %1396 = vst [vmem:[%s1394 + $0x8] sm:$0xf] %v1393
  // Predicated region
  $region30: #{basic_block_forward.4} parent=0 // pred_check
    _
  $region31: #{basic_block_forward.4} parent=0 // pred_check_branch
    %1398 = sbr.rel (0) target = $region33
  $region32: #{basic_block_forward.4} parent=0 // pred_region
    _
  $region33: #{basic_block_forward.4} parent=0 // pred_fallthru
    _
  // Predicated region
  $region34: #{basic_block_forward.4} parent=0 // pred_check
    _
  $region35: #{basic_block_forward.4} parent=0 // pred_check_branch
    %1400 = sbr.rel (0) target = $region37
  $region36: #{basic_block_forward.4} parent=0 // pred_region
    _
  $region37: #{basic_block_forward.4} parent=0 // pred_fallthru
    _
  // Predicated region
  $region38: #{basic_block_forward.4} parent=0 // pred_check
    _
  $region39: #{basic_block_forward.4} parent=0 // pred_check_branch
    %1402 = sbr.rel (0) target = $region41
  $region40: #{basic_block_forward.4} parent=0 // pred_region
    _
  $region41: #{basic_block_forward.4} parent=0 // pred_fallthru
    _
  // Predicated region
  $region42: #{basic_block_forward.4} parent=0 // pred_check
    _
  $region43: #{basic_block_forward.4} parent=0 // pred_check_branch
    %1404 = sbr.rel (0) target = $region45
  $region44: #{basic_block_forward.4} parent=0 // pred_region
    _
  $region45: #{basic_block_forward.4} parent=0 // pred_fallthru
    _
  // Predicated region
  $region46: #{basic_block_forward.4} parent=0 // pred_check
    _
  $region47: #{basic_block_forward.4} parent=0 // pred_check_branch
    %1406 = sbr.rel (0) target = $region49
  $region48: #{basic_block_forward.4} parent=0 // pred_region
    _
  $region49: #{basic_block_forward.4} parent=0 // pred_fallthru
    _
  // Predicated region
  $region50: #{basic_block_forward.4} parent=0 // pred_check
    _
  $region51: #{basic_block_forward.4} parent=0 // pred_check_branch
    %1408 = sbr.rel (0) target = $region53
  $region52: #{basic_block_forward.4} parent=0 // pred_region
    _
  $region53: #{basic_block_forward.4} parent=0 // pred_fallthru
    _

// kernel: basic_block_forward.3
$region0: #{basic_block_forward.3}
  #allocation0 [shape = 'u32[]', space=smem, size = 0x4, offset = 0x4, fixed_abs, tag = 'smem constant byte address 0x4 - core index']
  #allocation1 [shape = 'u32[72,128]{1,0:T(1,128)}', space=vmem, size = 0x9000, scoped, tag = 'internal scratch']
  %s0 = inlined_call_operand.vmem [shape: bf16[2,4,640], index: 0, kind: input, shape index: {}]
  %s1 = inlined_call_operand.vmem [shape: bf16[16,36], index: 1, kind: input, shape index: {}]
  %s2 = inlined_call_operand.vmem [shape: f32[1,512], index: 2, kind: input, shape index: {}]
  %s3 = inlined_call_operand.vmem [shape: bf16[2,8,512], index: 3, kind: output, shape index: {0}]
  %s4 = inlined_call_operand.vmem [shape: f32[16,1], index: 4, kind: output, shape index: {1}]
  %s5 = inlined_call_operand.vmem [shape: f32[16,1], index: 5, kind: output, shape index: {2}]
  %6 = xla_tuple %s3, %s4, %s5
  %s7 = sld [smem:[#allocation0]]
  $region42: #{basic_block_forward.3} parent=0
    _
  %s9 = ssub.s32 1, %s7
  %s10 = scalar_select 0, %s9, %s7
  // Predicated region
  $region2: #{basic_block_forward.3} parent=0 // pred_check
    _
  $region3: #{basic_block_forward.3} parent=0 // pred_check_branch
    %12 = sbr.rel (0) target = $region5
  $region4: #{basic_block_forward.3} parent=0 // pred_region
    _
  $region5: #{basic_block_forward.3} parent=0 // pred_fallthru
    _
  // Predicated region
  $region6: #{basic_block_forward.3} parent=0 // pred_check
    _
  $region7: #{basic_block_forward.3} parent=0 // pred_check_branch
    %14 = sbr.rel (0) target = $region9
  $region8: #{basic_block_forward.3} parent=0 // pred_region
    _
  $region9: #{basic_block_forward.3} parent=0 // pred_fallthru
    _
  // Predicated region
  $region10: #{basic_block_forward.3} parent=0 // pred_check
    _
  $region11: #{basic_block_forward.3} parent=0 // pred_check_branch
    %16 = sbr.rel (0) target = $region13
  $region12: #{basic_block_forward.3} parent=0 // pred_region
    _
  $region13: #{basic_block_forward.3} parent=0 // pred_fallthru
    _
  %p18 = scmp.eq.s32.totalorder 0, 0
  // Predicated region
  $region14: #{basic_block_forward.3} parent=0 // pred_check
    %p19 = pneg %p18
  $region15: #{basic_block_forward.3} parent=0 // pred_check_branch
    %21 = sbr.rel (%p19) target = $region17
  $region16: #{basic_block_forward.3} parent=0 // pred_region
    %vm22 = vcmask 7168
    %23 = vst.msk [vmem:[%s4] sm:$0xff] %vm22, 0.0
    %24 = vst.msk [vmem:[%s4 + $0x8] sm:$0xff] %vm22, 0.0
    %25 = vst.msk [vmem:[%s5] sm:$0xff] %vm22, 0.0
    %26 = vst.msk [vmem:[%s5 + $0x8] sm:$0xff] %vm22, 0.0
  $region17: #{basic_block_forward.3} parent=0 // pred_fallthru
    _
  %v27 = vld [vmem:[%s2] sm:$0xf]
  %v28 = vld [vmem:[%s1] sm:$0xf]
  %v29 = vld [vmem:[%s1 + $0x4] sm:$0xf]
  %v30 = vld [vmem:[%s0] sm:$0xff]
  %v31 = vld [vmem:[%s0 + $0x8] sm:$0x3]
  %v34 = vunpack.c.l.b16 %v28
  %v35 = vunpack.c.l.b16 %v29
  %v36 = vpack.c.b16 %v35, %v34
  %37 = vrot.lane.b32.xlu0 %v36, 124
  %v38 = vpop.permute.xlu0 %37
  %40 = vst [vmem:[#allocation1] ss:$4 sm:$0xff] %v30
  %s42 = scalar_lea.vmem [#allocation1], 32
  %43 = vst [vmem:[%s42] ss:$4 sm:$0xff] %v31
  %v44 = vld.sshfl [vmem:[#allocation1] sm:$0xff pattern:$0x73625140]
  %v46 = vld.sshfl [vmem:[#allocation1 + $0x8] sm:$0xff pattern:$0x73625140]
  %v48 = vld.sshfl [vmem:[#allocation1 + $0x10] sm:$0xff pattern:$0x73625140]
  %v50 = vld.sshfl [vmem:[#allocation1 + $0x18] sm:$0xff pattern:$0x73625140]
  %v52 = vld.sshfl [vmem:[#allocation1 + $0x20] sm:$0xff pattern:$0x73625140]
  %54 = vrot.lane.b32.xlu0 %v44, 127
  %v55 = vpop.permute.xlu0 %54
  %56 = vrot.lane.b32.xlu0 %v46, 127
  %v57 = vpop.permute.xlu0 %56
  %58 = vrot.lane.b32.xlu0 %v48, 127
  %v59 = vpop.permute.xlu0 %58
  %60 = vrot.lane.b32.xlu0 %v50, 127
  %v61 = vpop.permute.xlu0 %60
  %62 = vrot.lane.b32.xlu0 %v52, 127
  %v63 = vpop.permute.xlu0 %62
  %vm64 = vcmask 1039360
  %v65 = vsel %vm64, %v55, %v57
  %v66 = vsel %vm64, %v57, %v59
  %v67 = vsel %vm64, %v59, %v61
  %v68 = vsel %vm64, %v61, %v63
  %vm69 = vcmask 31744
  %v71 = vsel %vm69, %v38, 0
  %vm73 = vcmask 1041408
  %v75 = vsel %vm73, %v65, 0
  %v78 = vsel %vm73, %v66, 0
  %v81 = vsel %vm73, %v67, 0
  %v84 = vsel %vm73, %v68, 0
  %86 = vmatpush.bf16.msra.mxu0 0
  %87 = vmatpush.bf16.msra.mxu0 0
  %88 = vmatpush.bf16.msra.mxu0 0
  %89 = vmatpush.bf16.msra.mxu0 0
  %90 = vmatpush.bf16.msra.mxu0 0
  %91 = vmatpush.bf16.msra.mxu0 0
  %92 = vmatpush.bf16.msra.mxu0 0
  %93 = vmatpush.bf16.msra.mxu0 %v75
  %94 = vmatmul.bf16.gmra.mxu0 %v71
  %v95 = vpop.f32.mrf.mxu0
  %v96 = vadd.f32 0.0, %v95
  %v97 = vpop.f32.mrf.mxu0
  %v98 = vadd.f32 0.0, %v97
  %99 = vdwg.mxu0
  %100 = vmatpush.bf16.msra.mxu0 0
  %101 = vmatpush.bf16.msra.mxu0 0
  %102 = vmatpush.bf16.msra.mxu0 0
  %103 = vmatpush.bf16.msra.mxu0 0
  %104 = vmatpush.bf16.msra.mxu0 0
  %105 = vmatpush.bf16.msra.mxu0 0
  %106 = vmatpush.bf16.msra.mxu0 0
  %107 = vmatpush.bf16.msra.mxu0 %v78
  %108 = vmatmul.bf16.gmra.mxu0 %v71
  %v109 = vpop.f32.mrf.mxu0
  %v110 = vadd.f32 0.0, %v109
  %v111 = vpop.f32.mrf.mxu0
  %v112 = vadd.f32 0.0, %v111
  %113 = vdwg.mxu0
  %114 = vmatpush.bf16.msra.mxu0 0
  %115 = vmatpush.bf16.msra.mxu0 0
  %116 = vmatpush.bf16.msra.mxu0 0
  %117 = vmatpush.bf16.msra.mxu0 0
  %118 = vmatpush.bf16.msra.mxu0 0
  %119 = vmatpush.bf16.msra.mxu0 0
  %120 = vmatpush.bf16.msra.mxu0 0
  %121 = vmatpush.bf16.msra.mxu0 %v81
  %122 = vmatmul.bf16.gmra.mxu0 %v71
  %v123 = vpop.f32.mrf.mxu0
  %v124 = vadd.f32 0.0, %v123
  %v125 = vpop.f32.mrf.mxu0
  %v126 = vadd.f32 0.0, %v125
  %127 = vdwg.mxu0
  %128 = vmatpush.bf16.msra.mxu0 0
  %129 = vmatpush.bf16.msra.mxu0 0
  %130 = vmatpush.bf16.msra.mxu0 0
  %131 = vmatpush.bf16.msra.mxu0 0
  %132 = vmatpush.bf16.msra.mxu0 0
  %133 = vmatpush.bf16.msra.mxu0 0
  %134 = vmatpush.bf16.msra.mxu0 0
  %135 = vmatpush.bf16.msra.mxu0 %v84
  %136 = vmatmul.bf16.gmra.mxu0 %v71
  %v137 = vpop.f32.mrf.mxu0
  %v138 = vadd.f32 0.0, %v137
  %v139 = vpop.f32.mrf.mxu0
  %v140 = vadd.f32 0.0, %v139
  %141 = vdwg.mxu0
  %142 = vst [vmem:[#allocation1] ss:$4 sm:$0xff] %v30
  %v143 = vld.sshfl [vmem:[#allocation1] sm:$0xff pattern:$0x73625140]
  %v144 = vld.sshfl [vmem:[#allocation1 + $0x8] sm:$0xff pattern:$0x73625140]
  %v145 = vld.sshfl [vmem:[#allocation1 + $0x10] sm:$0xff pattern:$0x73625140]
  %v146 = vld.sshfl [vmem:[#allocation1 + $0x18] sm:$0xff pattern:$0x73625140]
  %v148 = vsel %vm69, %v36, 0
  %v150 = vsel %vm73, %v143, 0
  %v152 = vsel %vm73, %v144, 0
  %v154 = vsel %vm73, %v145, 0
  %v156 = vsel %vm73, %v146, 0
  %158 = vmatpush.bf16.msra.mxu0 0
  %159 = vmatpush.bf16.msra.mxu0 0
  %160 = vmatpush.bf16.msra.mxu0 0
  %161 = vmatpush.bf16.msra.mxu0 0
  %162 = vmatpush.bf16.msra.mxu0 0
  %163 = vmatpush.bf16.msra.mxu0 0
  %164 = vmatpush.bf16.msra.mxu0 0
  %165 = vmatpush.bf16.msra.mxu0 %v150
  %166 = vmatmul.bf16.gmra.mxu0 %v148
  %v167 = vpop.f32.mrf.mxu0
  %v168 = vadd.f32 %v96, %v167
  %v169 = vpop.f32.mrf.mxu0
  %v170 = vadd.f32 %v98, %v169
  %171 = vdwg.mxu0
  %172 = vmatpush.bf16.msra.mxu0 0
  %173 = vmatpush.bf16.msra.mxu0 0
  %174 = vmatpush.bf16.msra.mxu0 0
  %175 = vmatpush.bf16.msra.mxu0 0
  %176 = vmatpush.bf16.msra.mxu0 0
  %177 = vmatpush.bf16.msra.mxu0 0
  %178 = vmatpush.bf16.msra.mxu0 0
  %179 = vmatpush.bf16.msra.mxu0 %v152
  %180 = vmatmul.bf16.gmra.mxu0 %v148
  %v181 = vpop.f32.mrf.mxu0
  %v182 = vadd.f32 %v110, %v181
  %v183 = vpop.f32.mrf.mxu0
  %v184 = vadd.f32 %v112, %v183
  %185 = vdwg.mxu0
  %186 = vmatpush.bf16.msra.mxu0 0
  %187 = vmatpush.bf16.msra.mxu0 0
  %188 = vmatpush.bf16.msra.mxu0 0
  %189 = vmatpush.bf16.msra.mxu0 0
  %190 = vmatpush.bf16.msra.mxu0 0
  %191 = vmatpush.bf16.msra.mxu0 0
  %192 = vmatpush.bf16.msra.mxu0 0
  %193 = vmatpush.bf16.msra.mxu0 %v154
  %194 = vmatmul.bf16.gmra.mxu0 %v148
  %v195 = vpop.f32.mrf.mxu0
  %v196 = vadd.f32 %v124, %v195
  %v197 = vpop.f32.mrf.mxu0
  %v198 = vadd.f32 %v126, %v197
  %199 = vdwg.mxu0
  %200 = vmatpush.bf16.msra.mxu0 0
  %201 = vmatpush.bf16.msra.mxu0 0
  %202 = vmatpush.bf16.msra.mxu0 0
  %203 = vmatpush.bf16.msra.mxu0 0
  %204 = vmatpush.bf16.msra.mxu0 0
  %205 = vmatpush.bf16.msra.mxu0 0
  %206 = vmatpush.bf16.msra.mxu0 0
  %207 = vmatpush.bf16.msra.mxu0 %v156
  %208 = vmatmul.bf16.gmra.mxu0 %v148
  %v209 = vpop.f32.mrf.mxu0
  %v210 = vadd.f32 %v138, %v209
  %v211 = vpop.f32.mrf.mxu0
  %v212 = vadd.f32 %v140, %v211
  %213 = vdwg.mxu0
  %v214 = vld [vmem:[%s1] sm:$0xf]
  %v215 = vld [vmem:[%s1 + $0x4] sm:$0xf]
  %v216 = vld [vmem:[%s0] sm:$0xff]
  %v217 = vld [vmem:[%s0 + $0x8] sm:$0x3]
  %v220 = vunpack.c.l.b16 %v214
  %v221 = vunpack.c.l.b16 %v215
  %v222 = vpack.c.b16 %v221, %v220
  %223 = vrot.lane.b32.xlu0 %v222, 120
  %v224 = vpop.permute.xlu0 %223
  %226 = vst [vmem:[#allocation1] ss:$4 sm:$0xff] %v216
  %s228 = scalar_lea.vmem [#allocation1], 32
  %229 = vst [vmem:[%s228] ss:$4 sm:$0xff] %v217
  %v230 = vld.sshfl [vmem:[#allocation1] sm:$0xff pattern:$0x73625140]
  %v232 = vld.sshfl [vmem:[#allocation1 + $0x8] sm:$0xff pattern:$0x73625140]
  %v234 = vld.sshfl [vmem:[#allocation1 + $0x10] sm:$0xff pattern:$0x73625140]
  %v236 = vld.sshfl [vmem:[#allocation1 + $0x18] sm:$0xff pattern:$0x73625140]
  %v238 = vld.sshfl [vmem:[#allocation1 + $0x20] sm:$0xff pattern:$0x73625140]
  %240 = vrot.lane.b32.xlu0 %v230, 126
  %v241 = vpop.permute.xlu0 %240
  %242 = vrot.lane.b32.xlu0 %v232, 126
  %v243 = vpop.permute.xlu0 %242
  %244 = vrot.lane.b32.xlu0 %v234, 126
  %v245 = vpop.permute.xlu0 %244
  %246 = vrot.lane.b32.xlu0 %v236, 126
  %v247 = vpop.permute.xlu0 %246
  %248 = vrot.lane.b32.xlu0 %v238, 126
  %v249 = vpop.permute.xlu0 %248
  %vm250 = vcmask 1031168
  %v251 = vsel %vm250, %v241, %v243
  %v252 = vsel %vm250, %v243, %v245
  %v253 = vsel %vm250, %v245, %v247
  %v254 = vsel %vm250, %v247, %v249
  %v256 = vsel %vm69, %v224, 0
  %v259 = vsel %vm73, %v251, 0
  %v262 = vsel %vm73, %v252, 0
  %v265 = vsel %vm73, %v253, 0
  %v268 = vsel %vm73, %v254, 0
  %270 = vmatpush.bf16.msra.mxu0 0
  %271 = vmatpush.bf16.msra.mxu0 0
  %272 = vmatpush.bf16.msra.mxu0 0
  %273 = vmatpush.bf16.msra.mxu0 0
  %274 = vmatpush.bf16.msra.mxu0 0
  %275 = vmatpush.bf16.msra.mxu0 0
  %276 = vmatpush.bf16.msra.mxu0 0
  %277 = vmatpush.bf16.msra.mxu0 %v259
  %278 = vmatmul.bf16.gmra.mxu0 %v256
  %v279 = vpop.f32.mrf.mxu0
  %v280 = vadd.f32 0.0, %v279
  %v281 = vpop.f32.mrf.mxu0
  %v282 = vadd.f32 0.0, %v281
  %283 = vdwg.mxu0
  %284 = vmatpush.bf16.msra.mxu0 0
  %285 = vmatpush.bf16.msra.mxu0 0
  %286 = vmatpush.bf16.msra.mxu0 0
  %287 = vmatpush.bf16.msra.mxu0 0
  %288 = vmatpush.bf16.msra.mxu0 0
  %289 = vmatpush.bf16.msra.mxu0 0
  %290 = vmatpush.bf16.msra.mxu0 0
  %291 = vmatpush.bf16.msra.mxu0 %v262
  %292 = vmatmul.bf16.gmra.mxu0 %v256
  %v293 = vpop.f32.mrf.mxu0
  %v294 = vadd.f32 0.0, %v293
  %v295 = vpop.f32.mrf.mxu0
  %v296 = vadd.f32 0.0, %v295
  %297 = vdwg.mxu0
  %298 = vmatpush.bf16.msra.mxu0 0
  %299 = vmatpush.bf16.msra.mxu0 0
  %300 = vmatpush.bf16.msra.mxu0 0
  %301 = vmatpush.bf16.msra.mxu0 0
  %302 = vmatpush.bf16.msra.mxu0 0
  %303 = vmatpush.bf16.msra.mxu0 0
  %304 = vmatpush.bf16.msra.mxu0 0
  %305 = vmatpush.bf16.msra.mxu0 %v265
  %306 = vmatmul.bf16.gmra.mxu0 %v256
  %v307 = vpop.f32.mrf.mxu0
  %v308 = vadd.f32 0.0, %v307
  %v309 = vpop.f32.mrf.mxu0
  %v310 = vadd.f32 0.0, %v309
  %311 = vdwg.mxu0
  %312 = vmatpush.bf16.msra.mxu0 0
  %313 = vmatpush.bf16.msra.mxu0 0
  %314 = vmatpush.bf16.msra.mxu0 0
  %315 = vmatpush.bf16.msra.mxu0 0
  %316 = vmatpush.bf16.msra.mxu0 0
  %317 = vmatpush.bf16.msra.mxu0 0
  %318 = vmatpush.bf16.msra.mxu0 0
  %319 = vmatpush.bf16.msra.mxu0 %v268
  %320 = vmatmul.bf16.gmra.mxu0 %v256
  %v321 = vpop.f32.mrf.mxu0
  %v322 = vadd.f32 0.0, %v321
  %v323 = vpop.f32.mrf.mxu0
  %v324 = vadd.f32 0.0, %v323
  %325 = vdwg.mxu0
  %v326 = vadd.f32 %v168, %v280
  %v327 = vadd.f32 %v182, %v294
  %v328 = vadd.f32 %v196, %v308
  %v329 = vadd.f32 %v210, %v322
  %v330 = vadd.f32 %v170, %v282
  %v331 = vadd.f32 %v184, %v296
  %v332 = vadd.f32 %v198, %v310
  %v333 = vadd.f32 %v212, %v324
  %v334 = vld [vmem:[%s1] sm:$0xf]
  %v335 = vld [vmem:[%s1 + $0x4] sm:$0xf]
  %v336 = vld [vmem:[%s0] sm:$0xff]
  %v337 = vld [vmem:[%s0 + $0x8] sm:$0x3]
  %v340 = vunpack.c.l.b16 %v334
  %v341 = vunpack.c.l.b16 %v335
  %v342 = vpack.c.b16 %v341, %v340
  %343 = vrot.lane.b32.xlu0 %v342, 116
  %v344 = vpop.permute.xlu0 %343
  %346 = vst [vmem:[#allocation1] ss:$4 sm:$0xff] %v336
  %s348 = scalar_lea.vmem [#allocation1], 32
  %349 = vst [vmem:[%s348] ss:$4 sm:$0xff] %v337
  %v350 = vld.sshfl [vmem:[#allocation1] sm:$0xff pattern:$0x73625140]
  %v352 = vld.sshfl [vmem:[#allocation1 + $0x8] sm:$0xff pattern:$0x73625140]
  %v354 = vld.sshfl [vmem:[#allocation1 + $0x10] sm:$0xff pattern:$0x73625140]
  %v356 = vld.sshfl [vmem:[#allocation1 + $0x18] sm:$0xff pattern:$0x73625140]
  %v358 = vld.sshfl [vmem:[#allocation1 + $0x20] sm:$0xff pattern:$0x73625140]
  %360 = vrot.lane.b32.xlu0 %v350, 110
  %v361 = vpop.permute.xlu0 %360
  %362 = vrot.lane.b32.xlu0 %v352, 110
  %v363 = vpop.permute.xlu0 %362
  %364 = vrot.lane.b32.xlu0 %v354, 110
  %v365 = vpop.permute.xlu0 %364
  %366 = vrot.lane.b32.xlu0 %v356, 110
  %v367 = vpop.permute.xlu0 %366
  %368 = vrot.lane.b32.xlu0 %v358, 110
  %v369 = vpop.permute.xlu0 %368
  %vm370 = vcmask 900096
  %v371 = vsel %vm370, %v361, %v363
  %v372 = vsel %vm370, %v363, %v365
  %v373 = vsel %vm370, %v365, %v367
  %v374 = vsel %vm370, %v367, %v369
  %v376 = vsel %vm69, %v344, 0
  %v379 = vsel %vm73, %v371, 0
  %v382 = vsel %vm73, %v372, 0
  %v385 = vsel %vm73, %v373, 0
  %v388 = vsel %vm73, %v374, 0
  %390 = vmatpush.bf16.msra.mxu0 0
  %391 = vmatpush.bf16.msra.mxu0 0
  %392 = vmatpush.bf16.msra.mxu0 0
  %393 = vmatpush.bf16.msra.mxu0 0
  %394 = vmatpush.bf16.msra.mxu0 0
  %395 = vmatpush.bf16.msra.mxu0 0
  %396 = vmatpush.bf16.msra.mxu0 0
  %397 = vmatpush.bf16.msra.mxu0 %v379
  %398 = vmatmul.bf16.gmra.mxu0 %v376
  %v399 = vpop.f32.mrf.mxu0
  %v400 = vadd.f32 0.0, %v399
  %v401 = vpop.f32.mrf.mxu0
  %v402 = vadd.f32 0.0, %v401
  %403 = vdwg.mxu0
  %404 = vmatpush.bf16.msra.mxu0 0
  %405 = vmatpush.bf16.msra.mxu0 0
  %406 = vmatpush.bf16.msra.mxu0 0
  %407 = vmatpush.bf16.msra.mxu0 0
  %408 = vmatpush.bf16.msra.mxu0 0
  %409 = vmatpush.bf16.msra.mxu0 0
  %410 = vmatpush.bf16.msra.mxu0 0
  %411 = vmatpush.bf16.msra.mxu0 %v382
  %412 = vmatmul.bf16.gmra.mxu0 %v376
  %v413 = vpop.f32.mrf.mxu0
  %v414 = vadd.f32 0.0, %v413
  %v415 = vpop.f32.mrf.mxu0
  %v416 = vadd.f32 0.0, %v415
  %417 = vdwg.mxu0
  %418 = vmatpush.bf16.msra.mxu0 0
  %419 = vmatpush.bf16.msra.mxu0 0
  %420 = vmatpush.bf16.msra.mxu0 0
  %421 = vmatpush.bf16.msra.mxu0 0
  %422 = vmatpush.bf16.msra.mxu0 0
  %423 = vmatpush.bf16.msra.mxu0 0
  %424 = vmatpush.bf16.msra.mxu0 0
  %425 = vmatpush.bf16.msra.mxu0 %v385
  %426 = vmatmul.bf16.gmra.mxu0 %v376
  %v427 = vpop.f32.mrf.mxu0
  %v428 = vadd.f32 0.0, %v427
  %v429 = vpop.f32.mrf.mxu0
  %v430 = vadd.f32 0.0, %v429
  %431 = vdwg.mxu0
  %432 = vmatpush.bf16.msra.mxu0 0
  %433 = vmatpush.bf16.msra.mxu0 0
  %434 = vmatpush.bf16.msra.mxu0 0
  %435 = vmatpush.bf16.msra.mxu0 0
  %436 = vmatpush.bf16.msra.mxu0 0
  %437 = vmatpush.bf16.msra.mxu0 0
  %438 = vmatpush.bf16.msra.mxu0 0
  %439 = vmatpush.bf16.msra.mxu0 %v388
  %440 = vmatmul.bf16.gmra.mxu0 %v376
  %v441 = vpop.f32.mrf.mxu0
  %v442 = vadd.f32 0.0, %v441
  %v443 = vpop.f32.mrf.mxu0
  %v444 = vadd.f32 0.0, %v443
  %445 = vdwg.mxu0
  %v446 = vadd.f32 %v326, %v400
  %v447 = vadd.f32 %v327, %v414
  %v448 = vadd.f32 %v328, %v428
  %v449 = vadd.f32 %v329, %v442
  %v450 = vadd.f32 %v330, %v402
  %v451 = vadd.f32 %v331, %v416
  %v452 = vadd.f32 %v332, %v430
  %v453 = vadd.f32 %v333, %v444
  %v454 = vld [vmem:[%s1] sm:$0xf]
  %v455 = vld [vmem:[%s1 + $0x4] sm:$0xf]
  %v456 = vld [vmem:[%s0] sm:$0xff]
  %v457 = vld [vmem:[%s0 + $0x8] sm:$0x3]
  %v460 = vunpack.c.l.b16 %v454
  %v461 = vunpack.c.l.b16 %v455
  %v462 = vpack.c.b16 %v461, %v460
  %463 = vrot.lane.b32.xlu0 %v462, 112
  %v464 = vpop.permute.xlu0 %463
  %466 = vst [vmem:[#allocation1] ss:$4 sm:$0xff] %v456
  %s468 = scalar_lea.vmem [#allocation1], 32
  %469 = vst [vmem:[%s468] ss:$4 sm:$0xff] %v457
  %v470 = vld.sshfl [vmem:[#allocation1] sm:$0xff pattern:$0x73625140]
  %v472 = vld.sshfl [vmem:[#allocation1 + $0x8] sm:$0xff pattern:$0x73625140]
  %v474 = vld.sshfl [vmem:[#allocation1 + $0x10] sm:$0xff pattern:$0x73625140]
  %v476 = vld.sshfl [vmem:[#allocation1 + $0x18] sm:$0xff pattern:$0x73625140]
  %v478 = vld.sshfl [vmem:[#allocation1 + $0x20] sm:$0xff pattern:$0x73625140]
  %480 = vrot.lane.b32.xlu0 %v470, 109
  %v481 = vpop.permute.xlu0 %480
  %482 = vrot.lane.b32.xlu0 %v472, 109
  %v483 = vpop.permute.xlu0 %482
  %484 = vrot.lane.b32.xlu0 %v474, 109
  %v485 = vpop.permute.xlu0 %484
  %486 = vrot.lane.b32.xlu0 %v476, 109
  %v487 = vpop.permute.xlu0 %486
  %488 = vrot.lane.b32.xlu0 %v478, 109
  %v489 = vpop.permute.xlu0 %488
  %vm490 = vcmask 891904
  %v491 = vsel %vm490, %v481, %v483
  %v492 = vsel %vm490, %v483, %v485
  %v493 = vsel %vm490, %v485, %v487
  %v494 = vsel %vm490, %v487, %v489
  %v496 = vsel %vm69, %v464, 0
  %v499 = vsel %vm73, %v491, 0
  %v502 = vsel %vm73, %v492, 0
  %v505 = vsel %vm73, %v493, 0
  %v508 = vsel %vm73, %v494, 0
  %510 = vmatpush.bf16.msra.mxu0 0
  %511 = vmatpush.bf16.msra.mxu0 0
  %512 = vmatpush.bf16.msra.mxu0 0
  %513 = vmatpush.bf16.msra.mxu0 0
  %514 = vmatpush.bf16.msra.mxu0 0
  %515 = vmatpush.bf16.msra.mxu0 0
  %516 = vmatpush.bf16.msra.mxu0 0
  %517 = vmatpush.bf16.msra.mxu0 %v499
  %518 = vmatmul.bf16.gmra.mxu0 %v496
  %v519 = vpop.f32.mrf.mxu0
  %v520 = vadd.f32 0.0, %v519
  %v521 = vpop.f32.mrf.mxu0
  %v522 = vadd.f32 0.0, %v521
  %523 = vdwg.mxu0
  %524 = vmatpush.bf16.msra.mxu0 0
  %525 = vmatpush.bf16.msra.mxu0 0
  %526 = vmatpush.bf16.msra.mxu0 0
  %527 = vmatpush.bf16.msra.mxu0 0
  %528 = vmatpush.bf16.msra.mxu0 0
  %529 = vmatpush.bf16.msra.mxu0 0
  %530 = vmatpush.bf16.msra.mxu0 0
  %531 = vmatpush.bf16.msra.mxu0 %v502
  %532 = vmatmul.bf16.gmra.mxu0 %v496
  %v533 = vpop.f32.mrf.mxu0
  %v534 = vadd.f32 0.0, %v533
  %v535 = vpop.f32.mrf.mxu0
  %v536 = vadd.f32 0.0, %v535
  %537 = vdwg.mxu0
  %538 = vmatpush.bf16.msra.mxu0 0
  %539 = vmatpush.bf16.msra.mxu0 0
  %540 = vmatpush.bf16.msra.mxu0 0
  %541 = vmatpush.bf16.msra.mxu0 0
  %542 = vmatpush.bf16.msra.mxu0 0
  %543 = vmatpush.bf16.msra.mxu0 0
  %544 = vmatpush.bf16.msra.mxu0 0
  %545 = vmatpush.bf16.msra.mxu0 %v505
  %546 = vmatmul.bf16.gmra.mxu0 %v496
  %v547 = vpop.f32.mrf.mxu0
  %v548 = vadd.f32 0.0, %v547
  %v549 = vpop.f32.mrf.mxu0
  %v550 = vadd.f32 0.0, %v549
  %551 = vdwg.mxu0
  %552 = vmatpush.bf16.msra.mxu0 0
  %553 = vmatpush.bf16.msra.mxu0 0
  %554 = vmatpush.bf16.msra.mxu0 0
  %555 = vmatpush.bf16.msra.mxu0 0
  %556 = vmatpush.bf16.msra.mxu0 0
  %557 = vmatpush.bf16.msra.mxu0 0
  %558 = vmatpush.bf16.msra.mxu0 0
  %559 = vmatpush.bf16.msra.mxu0 %v508
  %560 = vmatmul.bf16.gmra.mxu0 %v496
  %v561 = vpop.f32.mrf.mxu0
  %v562 = vadd.f32 0.0, %v561
  %v563 = vpop.f32.mrf.mxu0
  %v564 = vadd.f32 0.0, %v563
  %565 = vdwg.mxu0
  %v566 = vadd.f32 %v446, %v520
  %v567 = vadd.f32 %v447, %v534
  %v568 = vadd.f32 %v448, %v548
  %v569 = vadd.f32 %v449, %v562
  %v570 = vadd.f32 %v450, %v522
  %v571 = vadd.f32 %v451, %v536
  %v572 = vadd.f32 %v452, %v550
  %v573 = vadd.f32 %v453, %v564
  %v574 = vld [vmem:[%s1] sm:$0xf]
  %v575 = vld [vmem:[%s1 + $0x4] sm:$0xf]
  %v576 = vld [vmem:[%s0] sm:$0xff]
  %v577 = vld [vmem:[%s0 + $0x8] sm:$0x3]
  %v580 = vunpack.c.l.b16 %v574
  %v581 = vunpack.c.l.b16 %v575
  %v582 = vpack.c.b16 %v581, %v580
  %583 = vrot.lane.b32.xlu0 %v582, 108
  %v584 = vpop.permute.xlu0 %583
  %586 = vst [vmem:[#allocation1] ss:$4 sm:$0xff] %v576
  %s588 = scalar_lea.vmem [#allocation1], 32
  %589 = vst [vmem:[%s588] ss:$4 sm:$0xff] %v577
  %v590 = vld.sshfl [vmem:[#allocation1] sm:$0xff pattern:$0x73625140]
  %v592 = vld.sshfl [vmem:[#allocation1 + $0x8] sm:$0xff pattern:$0x73625140]
  %v594 = vld.sshfl [vmem:[#allocation1 + $0x10] sm:$0xff pattern:$0x73625140]
  %v596 = vld.sshfl [vmem:[#allocation1 + $0x18] sm:$0xff pattern:$0x73625140]
  %v598 = vld.sshfl [vmem:[#allocation1 + $0x20] sm:$0xff pattern:$0x73625140]
  %600 = vrot.lane.b32.xlu0 %v590, 108
  %v601 = vpop.permute.xlu0 %600
  %602 = vrot.lane.b32.xlu0 %v592, 108
  %v603 = vpop.permute.xlu0 %602
  %604 = vrot.lane.b32.xlu0 %v594, 108
  %v605 = vpop.permute.xlu0 %604
  %606 = vrot.lane.b32.xlu0 %v596, 108
  %v607 = vpop.permute.xlu0 %606
  %608 = vrot.lane.b32.xlu0 %v598, 108
  %v609 = vpop.permute.xlu0 %608
  %vm610 = vcmask 883712
  %v611 = vsel %vm610, %v601, %v603
  %v612 = vsel %vm610, %v603, %v605
  %v613 = vsel %vm610, %v605, %v607
  %v614 = vsel %vm610, %v607, %v609
  %v616 = vsel %vm69, %v584, 0
  %v619 = vsel %vm73, %v611, 0
  %v622 = vsel %vm73, %v612, 0
  %v625 = vsel %vm73, %v613, 0
  %v628 = vsel %vm73, %v614, 0
  %630 = vmatpush.bf16.msra.mxu0 0
  %631 = vmatpush.bf16.msra.mxu0 0
  %632 = vmatpush.bf16.msra.mxu0 0
  %633 = vmatpush.bf16.msra.mxu0 0
  %634 = vmatpush.bf16.msra.mxu0 0
  %635 = vmatpush.bf16.msra.mxu0 0
  %636 = vmatpush.bf16.msra.mxu0 0
  %637 = vmatpush.bf16.msra.mxu0 %v619
  %638 = vmatmul.bf16.gmra.mxu0 %v616
  %v639 = vpop.f32.mrf.mxu0
  %v640 = vadd.f32 0.0, %v639
  %v641 = vpop.f32.mrf.mxu0
  %v642 = vadd.f32 0.0, %v641
  %643 = vdwg.mxu0
  %644 = vmatpush.bf16.msra.mxu0 0
  %645 = vmatpush.bf16.msra.mxu0 0
  %646 = vmatpush.bf16.msra.mxu0 0
  %647 = vmatpush.bf16.msra.mxu0 0
  %648 = vmatpush.bf16.msra.mxu0 0
  %649 = vmatpush.bf16.msra.mxu0 0
  %650 = vmatpush.bf16.msra.mxu0 0
  %651 = vmatpush.bf16.msra.mxu0 %v622
  %652 = vmatmul.bf16.gmra.mxu0 %v616
  %v653 = vpop.f32.mrf.mxu0
  %v654 = vadd.f32 0.0, %v653
  %v655 = vpop.f32.mrf.mxu0
  %v656 = vadd.f32 0.0, %v655
  %657 = vdwg.mxu0
  %658 = vmatpush.bf16.msra.mxu0 0
  %659 = vmatpush.bf16.msra.mxu0 0
  %660 = vmatpush.bf16.msra.mxu0 0
  %661 = vmatpush.bf16.msra.mxu0 0
  %662 = vmatpush.bf16.msra.mxu0 0
  %663 = vmatpush.bf16.msra.mxu0 0
  %664 = vmatpush.bf16.msra.mxu0 0
  %665 = vmatpush.bf16.msra.mxu0 %v625
  %666 = vmatmul.bf16.gmra.mxu0 %v616
  %v667 = vpop.f32.mrf.mxu0
  %v668 = vadd.f32 0.0, %v667
  %v669 = vpop.f32.mrf.mxu0
  %v670 = vadd.f32 0.0, %v669
  %671 = vdwg.mxu0
  %672 = vmatpush.bf16.msra.mxu0 0
  %673 = vmatpush.bf16.msra.mxu0 0
  %674 = vmatpush.bf16.msra.mxu0 0
  %675 = vmatpush.bf16.msra.mxu0 0
  %676 = vmatpush.bf16.msra.mxu0 0
  %677 = vmatpush.bf16.msra.mxu0 0
  %678 = vmatpush.bf16.msra.mxu0 0
  %679 = vmatpush.bf16.msra.mxu0 %v628
  %680 = vmatmul.bf16.gmra.mxu0 %v616
  %v681 = vpop.f32.mrf.mxu0
  %v682 = vadd.f32 0.0, %v681
  %v683 = vpop.f32.mrf.mxu0
  %v684 = vadd.f32 0.0, %v683
  %685 = vdwg.mxu0
  %v686 = vadd.f32 %v566, %v640
  %v687 = vadd.f32 %v567, %v654
  %v688 = vadd.f32 %v568, %v668
  %v689 = vadd.f32 %v569, %v682
  %v690 = vadd.f32 %v570, %v642
  %v691 = vadd.f32 %v571, %v656
  %v692 = vadd.f32 %v572, %v670
  %v693 = vadd.f32 %v573, %v684
  %v694 = vld [vmem:[%s1] sm:$0xf]
  %v695 = vld [vmem:[%s1 + $0x4] sm:$0xf]
  %v696 = vld [vmem:[%s0] sm:$0xff]
  %v697 = vld [vmem:[%s0 + $0x8] sm:$0x3]
  %v700 = vunpack.c.l.b16 %v694
  %v701 = vunpack.c.l.b16 %v695
  %v702 = vpack.c.b16 %v701, %v700
  %703 = vrot.lane.b32.xlu0 %v702, 104
  %v704 = vpop.permute.xlu0 %703
  %706 = vst [vmem:[#allocation1] ss:$4 sm:$0xff] %v696
  %s708 = scalar_lea.vmem [#allocation1], 32
  %709 = vst [vmem:[%s708] ss:$4 sm:$0xff] %v697
  %v710 = vld.sshfl [vmem:[#allocation1] sm:$0xff pattern:$0x73625140]
  %v712 = vld.sshfl [vmem:[#allocation1 + $0x8] sm:$0xff pattern:$0x73625140]
  %v714 = vld.sshfl [vmem:[#allocation1 + $0x10] sm:$0xff pattern:$0x73625140]
  %v716 = vld.sshfl [vmem:[#allocation1 + $0x18] sm:$0xff pattern:$0x73625140]
  %v718 = vld.sshfl [vmem:[#allocation1 + $0x20] sm:$0xff pattern:$0x73625140]
  %720 = vrot.lane.b32.xlu0 %v710, 92
  %v721 = vpop.permute.xlu0 %720
  %722 = vrot.lane.b32.xlu0 %v712, 92
  %v723 = vpop.permute.xlu0 %722
  %724 = vrot.lane.b32.xlu0 %v714, 92
  %v725 = vpop.permute.xlu0 %724
  %726 = vrot.lane.b32.xlu0 %v716, 92
  %v727 = vpop.permute.xlu0 %726
  %728 = vrot.lane.b32.xlu0 %v718, 92
  %v729 = vpop.permute.xlu0 %728
  %vm730 = vcmask 752640
  %v731 = vsel %vm730, %v721, %v723
  %v732 = vsel %vm730, %v723, %v725
  %v733 = vsel %vm730, %v725, %v727
  %v734 = vsel %vm730, %v727, %v729
  %v736 = vsel %vm69, %v704, 0
  %v739 = vsel %vm73, %v731, 0
  %v742 = vsel %vm73, %v732, 0
  %v745 = vsel %vm73, %v733, 0
  %v748 = vsel %vm73, %v734, 0
  %750 = vmatpush.bf16.msra.mxu0 0
  %751 = vmatpush.bf16.msra.mxu0 0
  %752 = vmatpush.bf16.msra.mxu0 0
  %753 = vmatpush.bf16.msra.mxu0 0
  %754 = vmatpush.bf16.msra.mxu0 0
  %755 = vmatpush.bf16.msra.mxu0 0
  %756 = vmatpush.bf16.msra.mxu0 0
  %757 = vmatpush.bf16.msra.mxu0 %v739
  %758 = vmatmul.bf16.gmra.mxu0 %v736
  %v759 = vpop.f32.mrf.mxu0
  %v760 = vadd.f32 0.0, %v759
  %v761 = vpop.f32.mrf.mxu0
  %v762 = vadd.f32 0.0, %v761
  %763 = vdwg.mxu0
  %764 = vmatpush.bf16.msra.mxu0 0
  %765 = vmatpush.bf16.msra.mxu0 0
  %766 = vmatpush.bf16.msra.mxu0 0
  %767 = vmatpush.bf16.msra.mxu0 0
  %768 = vmatpush.bf16.msra.mxu0 0
  %769 = vmatpush.bf16.msra.mxu0 0
  %770 = vmatpush.bf16.msra.mxu0 0
  %771 = vmatpush.bf16.msra.mxu0 %v742
  %772 = vmatmul.bf16.gmra.mxu0 %v736
  %v773 = vpop.f32.mrf.mxu0
  %v774 = vadd.f32 0.0, %v773
  %v775 = vpop.f32.mrf.mxu0
  %v776 = vadd.f32 0.0, %v775
  %777 = vdwg.mxu0
  %778 = vmatpush.bf16.msra.mxu0 0
  %779 = vmatpush.bf16.msra.mxu0 0
  %780 = vmatpush.bf16.msra.mxu0 0
  %781 = vmatpush.bf16.msra.mxu0 0
  %782 = vmatpush.bf16.msra.mxu0 0
  %783 = vmatpush.bf16.msra.mxu0 0
  %784 = vmatpush.bf16.msra.mxu0 0
  %785 = vmatpush.bf16.msra.mxu0 %v745
  %786 = vmatmul.bf16.gmra.mxu0 %v736
  %v787 = vpop.f32.mrf.mxu0
  %v788 = vadd.f32 0.0, %v787
  %v789 = vpop.f32.mrf.mxu0
  %v790 = vadd.f32 0.0, %v789
  %791 = vdwg.mxu0
  %792 = vmatpush.bf16.msra.mxu0 0
  %793 = vmatpush.bf16.msra.mxu0 0
  %794 = vmatpush.bf16.msra.mxu0 0
  %795 = vmatpush.bf16.msra.mxu0 0
  %796 = vmatpush.bf16.msra.mxu0 0
  %797 = vmatpush.bf16.msra.mxu0 0
  %798 = vmatpush.bf16.msra.mxu0 0
  %799 = vmatpush.bf16.msra.mxu0 %v748
  %800 = vmatmul.bf16.gmra.mxu0 %v736
  %v801 = vpop.f32.mrf.mxu0
  %v802 = vadd.f32 0.0, %v801
  %v803 = vpop.f32.mrf.mxu0
  %v804 = vadd.f32 0.0, %v803
  %805 = vdwg.mxu0
  %v806 = vadd.f32 %v686, %v760
  %v807 = vadd.f32 %v687, %v774
  %v808 = vadd.f32 %v688, %v788
  %v809 = vadd.f32 %v689, %v802
  %v810 = vadd.f32 %v690, %v762
  %v811 = vadd.f32 %v691, %v776
  %v812 = vadd.f32 %v692, %v790
  %v813 = vadd.f32 %v693, %v804
  %v814 = vld [vmem:[%s1] sm:$0xf]
  %v815 = vld [vmem:[%s1 + $0x4] sm:$0xf]
  %v816 = vld [vmem:[%s0] sm:$0xff]
  %v817 = vld [vmem:[%s0 + $0x8] sm:$0x3]
  %v820 = vunpack.c.l.b16 %v814
  %v821 = vunpack.c.l.b16 %v815
  %v822 = vpack.c.b16 %v821, %v820
  %823 = vrot.lane.b32.xlu0 %v822, 100
  %v824 = vpop.permute.xlu0 %823
  %826 = vst [vmem:[#allocation1] ss:$4 sm:$0xff] %v816
  %s828 = scalar_lea.vmem [#allocation1], 32
  %829 = vst [vmem:[%s828] ss:$4 sm:$0xff] %v817
  %v830 = vld.sshfl [vmem:[#allocation1] sm:$0xff pattern:$0x73625140]
  %v832 = vld.sshfl [vmem:[#allocation1 + $0x8] sm:$0xff pattern:$0x73625140]
  %v834 = vld.sshfl [vmem:[#allocation1 + $0x10] sm:$0xff pattern:$0x73625140]
  %v836 = vld.sshfl [vmem:[#allocation1 + $0x18] sm:$0xff pattern:$0x73625140]
  %v838 = vld.sshfl [vmem:[#allocation1 + $0x20] sm:$0xff pattern:$0x73625140]
  %840 = vrot.lane.b32.xlu0 %v830, 91
  %v841 = vpop.permute.xlu0 %840
  %842 = vrot.lane.b32.xlu0 %v832, 91
  %v843 = vpop.permute.xlu0 %842
  %844 = vrot.lane.b32.xlu0 %v834, 91
  %v845 = vpop.permute.xlu0 %844
  %846 = vrot.lane.b32.xlu0 %v836, 91
  %v847 = vpop.permute.xlu0 %846
  %848 = vrot.lane.b32.xlu0 %v838, 91
  %v849 = vpop.permute.xlu0 %848
  %vm850 = vcmask 744448
  %v851 = vsel %vm850, %v841, %v843
  %v852 = vsel %vm850, %v843, %v845
  %v853 = vsel %vm850, %v845, %v847
  %v854 = vsel %vm850, %v847, %v849
  %v856 = vsel %vm69, %v824, 0
  %v859 = vsel %vm73, %v851, 0
  %v862 = vsel %vm73, %v852, 0
  %v865 = vsel %vm73, %v853, 0
  %v868 = vsel %vm73, %v854, 0
  %870 = vmatpush.bf16.msra.mxu0 0
  %871 = vmatpush.bf16.msra.mxu0 0
  %872 = vmatpush.bf16.msra.mxu0 0
  %873 = vmatpush.bf16.msra.mxu0 0
  %874 = vmatpush.bf16.msra.mxu0 0
  %875 = vmatpush.bf16.msra.mxu0 0
  %876 = vmatpush.bf16.msra.mxu0 0
  %877 = vmatpush.bf16.msra.mxu0 %v859
  %878 = vmatmul.bf16.gmra.mxu0 %v856
  %v879 = vpop.f32.mrf.mxu0
  %v880 = vadd.f32 0.0, %v879
  %v881 = vpop.f32.mrf.mxu0
  %v882 = vadd.f32 0.0, %v881
  %883 = vdwg.mxu0
  %884 = vmatpush.bf16.msra.mxu0 0
  %885 = vmatpush.bf16.msra.mxu0 0
  %886 = vmatpush.bf16.msra.mxu0 0
  %887 = vmatpush.bf16.msra.mxu0 0
  %888 = vmatpush.bf16.msra.mxu0 0
  %889 = vmatpush.bf16.msra.mxu0 0
  %890 = vmatpush.bf16.msra.mxu0 0
  %891 = vmatpush.bf16.msra.mxu0 %v862
  %892 = vmatmul.bf16.gmra.mxu0 %v856
  %v893 = vpop.f32.mrf.mxu0
  %v894 = vadd.f32 0.0, %v893
  %v895 = vpop.f32.mrf.mxu0
  %v896 = vadd.f32 0.0, %v895
  %897 = vdwg.mxu0
  %898 = vmatpush.bf16.msra.mxu0 0
  %899 = vmatpush.bf16.msra.mxu0 0
  %900 = vmatpush.bf16.msra.mxu0 0
  %901 = vmatpush.bf16.msra.mxu0 0
  %902 = vmatpush.bf16.msra.mxu0 0
  %903 = vmatpush.bf16.msra.mxu0 0
  %904 = vmatpush.bf16.msra.mxu0 0
  %905 = vmatpush.bf16.msra.mxu0 %v865
  %906 = vmatmul.bf16.gmra.mxu0 %v856
  %v907 = vpop.f32.mrf.mxu0
  %v908 = vadd.f32 0.0, %v907
  %v909 = vpop.f32.mrf.mxu0
  %v910 = vadd.f32 0.0, %v909
  %911 = vdwg.mxu0
  %912 = vmatpush.bf16.msra.mxu0 0
  %913 = vmatpush.bf16.msra.mxu0 0
  %914 = vmatpush.bf16.msra.mxu0 0
  %915 = vmatpush.bf16.msra.mxu0 0
  %916 = vmatpush.bf16.msra.mxu0 0
  %917 = vmatpush.bf16.msra.mxu0 0
  %918 = vmatpush.bf16.msra.mxu0 0
  %919 = vmatpush.bf16.msra.mxu0 %v868
  %920 = vmatmul.bf16.gmra.mxu0 %v856
  %v921 = vpop.f32.mrf.mxu0
  %v922 = vadd.f32 0.0, %v921
  %v923 = vpop.f32.mrf.mxu0
  %v924 = vadd.f32 0.0, %v923
  %925 = vdwg.mxu0
  %v926 = vadd.f32 %v806, %v880
  %v927 = vadd.f32 %v807, %v894
  %v928 = vadd.f32 %v808, %v908
  %v929 = vadd.f32 %v809, %v922
  %v930 = vadd.f32 %v810, %v882
  %v931 = vadd.f32 %v811, %v896
  %v932 = vadd.f32 %v812, %v910
  %v933 = vadd.f32 %v813, %v924
  %v934 = vld [vmem:[%s1] sm:$0xf]
  %v935 = vld [vmem:[%s1 + $0x4] sm:$0xf]
  %v936 = vld [vmem:[%s0] sm:$0xff]
  %v937 = vld [vmem:[%s0 + $0x8] sm:$0x3]
  %v940 = vunpack.c.l.b16 %v934
  %v941 = vunpack.c.l.b16 %v935
  %v942 = vpack.c.b16 %v941, %v940
  %943 = vrot.lane.b32.xlu0 %v942, 96
  %v944 = vpop.permute.xlu0 %943
  %946 = vst [vmem:[#allocation1] ss:$4 sm:$0xff] %v936
  %s948 = scalar_lea.vmem [#allocation1], 32
  %949 = vst [vmem:[%s948] ss:$4 sm:$0xff] %v937
  %v950 = vld.sshfl [vmem:[#allocation1] sm:$0xff pattern:$0x73625140]
  %v952 = vld.sshfl [vmem:[#allocation1 + $0x8] sm:$0xff pattern:$0x73625140]
  %v954 = vld.sshfl [vmem:[#allocation1 + $0x10] sm:$0xff pattern:$0x73625140]
  %v956 = vld.sshfl [vmem:[#allocation1 + $0x18] sm:$0xff pattern:$0x73625140]
  %v958 = vld.sshfl [vmem:[#allocation1 + $0x20] sm:$0xff pattern:$0x73625140]
  %960 = vrot.lane.b32.xlu0 %v950, 90
  %v961 = vpop.permute.xlu0 %960
  %962 = vrot.lane.b32.xlu0 %v952, 90
  %v963 = vpop.permute.xlu0 %962
  %964 = vrot.lane.b32.xlu0 %v954, 90
  %v965 = vpop.permute.xlu0 %964
  %966 = vrot.lane.b32.xlu0 %v956, 90
  %v967 = vpop.permute.xlu0 %966
  %968 = vrot.lane.b32.xlu0 %v958, 90
  %v969 = vpop.permute.xlu0 %968
  %vm970 = vcmask 736256
  %v971 = vsel %vm970, %v961, %v963
  %v972 = vsel %vm970, %v963, %v965
  %v973 = vsel %vm970, %v965, %v967
  %v974 = vsel %vm970, %v967, %v969
  %v976 = vsel %vm69, %v944, 0
  %v979 = vsel %vm73, %v971, 0
  %v982 = vsel %vm73, %v972, 0
  %v985 = vsel %vm73, %v973, 0
  %v988 = vsel %vm73, %v974, 0
  %990 = vmatpush.bf16.msra.mxu0 0
  %991 = vmatpush.bf16.msra.mxu0 0
  %992 = vmatpush.bf16.msra.mxu0 0
  %993 = vmatpush.bf16.msra.mxu0 0
  %994 = vmatpush.bf16.msra.mxu0 0
  %995 = vmatpush.bf16.msra.mxu0 0
  %996 = vmatpush.bf16.msra.mxu0 0
  %997 = vmatpush.bf16.msra.mxu0 %v979
  %998 = vmatmul.bf16.gmra.mxu0 %v976
  %v999 = vpop.f32.mrf.mxu0
  %v1000 = vadd.f32 0.0, %v999
  %v1001 = vpop.f32.mrf.mxu0
  %v1002 = vadd.f32 0.0, %v1001
  %1003 = vdwg.mxu0
  %1004 = vmatpush.bf16.msra.mxu0 0
  %1005 = vmatpush.bf16.msra.mxu0 0
  %1006 = vmatpush.bf16.msra.mxu0 0
  %1007 = vmatpush.bf16.msra.mxu0 0
  %1008 = vmatpush.bf16.msra.mxu0 0
  %1009 = vmatpush.bf16.msra.mxu0 0
  %1010 = vmatpush.bf16.msra.mxu0 0
  %1011 = vmatpush.bf16.msra.mxu0 %v982
  %1012 = vmatmul.bf16.gmra.mxu0 %v976
  %v1013 = vpop.f32.mrf.mxu0
  %v1014 = vadd.f32 0.0, %v1013
  %v1015 = vpop.f32.mrf.mxu0
  %v1016 = vadd.f32 0.0, %v1015
  %1017 = vdwg.mxu0
  %1018 = vmatpush.bf16.msra.mxu0 0
  %1019 = vmatpush.bf16.msra.mxu0 0
  %1020 = vmatpush.bf16.msra.mxu0 0
  %1021 = vmatpush.bf16.msra.mxu0 0
  %1022 = vmatpush.bf16.msra.mxu0 0
  %1023 = vmatpush.bf16.msra.mxu0 0
  %1024 = vmatpush.bf16.msra.mxu0 0
  %1025 = vmatpush.bf16.msra.mxu0 %v985
  %1026 = vmatmul.bf16.gmra.mxu0 %v976
  %v1027 = vpop.f32.mrf.mxu0
  %v1028 = vadd.f32 0.0, %v1027
  %v1029 = vpop.f32.mrf.mxu0
  %v1030 = vadd.f32 0.0, %v1029
  %1031 = vdwg.mxu0
  %1032 = vmatpush.bf16.msra.mxu0 0
  %1033 = vmatpush.bf16.msra.mxu0 0
  %1034 = vmatpush.bf16.msra.mxu0 0
  %1035 = vmatpush.bf16.msra.mxu0 0
  %1036 = vmatpush.bf16.msra.mxu0 0
  %1037 = vmatpush.bf16.msra.mxu0 0
  %1038 = vmatpush.bf16.msra.mxu0 0
  %1039 = vmatpush.bf16.msra.mxu0 %v988
  %1040 = vmatmul.bf16.gmra.mxu0 %v976
  %v1041 = vpop.f32.mrf.mxu0
  %v1042 = vadd.f32 0.0, %v1041
  %v1043 = vpop.f32.mrf.mxu0
  %v1044 = vadd.f32 0.0, %v1043
  %1045 = vdwg.mxu0
  %v1046 = vadd.f32 %v926, %v1000
  %v1047 = vadd.f32 %v927, %v1014
  %v1048 = vadd.f32 %v928, %v1028
  %v1049 = vadd.f32 %v929, %v1042
  %v1050 = vadd.f32 %v930, %v1002
  %v1051 = vadd.f32 %v931, %v1016
  %v1052 = vadd.f32 %v932, %v1030
  %v1053 = vadd.f32 %v933, %v1044
  %v1055 = vperm.slane %v27, 0
  %v1056 = vperm.slane %v27, 1
  %v1057 = vperm.slane %v27, 2
  %v1058 = vperm.slane %v27, 3
  %v1063 = vmul.f32 %v1046, %v1055
  %v1064 = vmul.f32 %v1047, %v1056
  %v1065 = vmul.f32 %v1048, %v1057
  %v1066 = vmul.f32 %v1049, %v1058
  %v1067 = vmul.f32 %v1050, %v1055
  %v1068 = vmul.f32 %v1051, %v1056
  %v1069 = vmul.f32 %v1052, %v1057
  %v1070 = vmul.f32 %v1053, %v1058
  %v1071 = vld [vmem:[%s4] sm:$0xff]
  %v1072 = vld [vmem:[%s4 + $0x8] sm:$0xff]
  %v1073 = vadd.f32 %v1063, %v1064
  %v1074 = vadd.f32 %v1073, %v1065
  %v1075 = vadd.f32 %v1074, %v1066
  %1076 = vadd.xlane.f32.xlu0 %v1075
  %v1077 = vpop.xlane.xlu0 %1076
  %v1078 = vadd.f32 %v1067, %v1068
  %v1079 = vadd.f32 %v1078, %v1069
  %v1080 = vadd.f32 %v1079, %v1070
  %1081 = vadd.xlane.f32.xlu0 %v1080
  %v1082 = vpop.xlane.xlu0 %1081
  %v1083 = vadd.f32 %v1071, %v1077
  %v1084 = vadd.f32 %v1072, %v1082
  %vm1085 = vcmask 7168
  %1086 = vst.msk [vmem:[%s4] sm:$0xff] %vm1085, %v1083
  %1087 = vst.msk [vmem:[%s4 + $0x8] sm:$0xff] %vm1085, %v1084
  %v1088 = vld [vmem:[%s5] sm:$0xff]
  %v1089 = vld [vmem:[%s5 + $0x8] sm:$0xff]
  %v1090 = vmul.f32 %v1063, %v1046
  %v1091 = vmul.f32 %v1064, %v1047
  %v1092 = vmul.f32 %v1065, %v1048
  %v1093 = vmul.f32 %v1066, %v1049
  %v1094 = vmul.f32 %v1067, %v1050
  %v1095 = vmul.f32 %v1068, %v1051
  %v1096 = vmul.f32 %v1069, %v1052
  %v1097 = vmul.f32 %v1070, %v1053
  %v1098 = vadd.f32 %v1090, %v1091
  %v1099 = vadd.f32 %v1098, %v1092
  %v1100 = vadd.f32 %v1099, %v1093
  %1101 = vadd.xlane.f32.xlu0 %v1100
  %v1102 = vpop.xlane.xlu0 %1101
  %v1103 = vadd.f32 %v1094, %v1095
  %v1104 = vadd.f32 %v1103, %v1096
  %v1105 = vadd.f32 %v1104, %v1097
  %1106 = vadd.xlane.f32.xlu0 %v1105
  %v1107 = vpop.xlane.xlu0 %1106
  %v1108 = vadd.f32 %v1088, %v1102
  %v1109 = vadd.f32 %v1089, %v1107
  %1110 = vst.msk [vmem:[%s5] sm:$0xff] %vm1085, %v1108
  %1111 = vst.msk [vmem:[%s5 + $0x8] sm:$0xff] %vm1085, %v1109
  %v1112 = vpack.c.bf16 %v1047, %v1046
  %v1113 = vpack.c.bf16 %v1049, %v1048
  %1114 = vst [vmem:[%s3] sm:$0xff] %v1112
  %1115 = vst [vmem:[%s3 + $0x8] sm:$0xff] %v1113
  %v1116 = vld [vmem:[%s1] sm:$0xf]
  %v1117 = vld [vmem:[%s1 + $0x4] sm:$0xf]
  %s1118 = scalar_lea.vmem %s0, 10
  %v1119 = vld [vmem:[%s1118] sm:$0xff]
  %v1120 = vld [vmem:[%s1118 + $0x8] sm:$0x3]
  %v1123 = vunpack.c.l.b16 %v1116
  %v1124 = vunpack.c.l.b16 %v1117
  %v1125 = vpack.c.b16 %v1124, %v1123
  %1126 = vrot.lane.b32.xlu0 %v1125, 124
  %v1127 = vpop.permute.xlu0 %1126
  %1129 = vst [vmem:[#allocation1] ss:$4 sm:$0xff] %v1119
  %s1131 = scalar_lea.vmem [#allocation1], 32
  %1132 = vst [vmem:[%s1131] ss:$4 sm:$0xff] %v1120
  %v1133 = vld.sshfl [vmem:[#allocation1] sm:$0xff pattern:$0x73625140]
  %v1135 = vld.sshfl [vmem:[#allocation1 + $0x8] sm:$0xff pattern:$0x73625140]
  %v1137 = vld.sshfl [vmem:[#allocation1 + $0x10] sm:$0xff pattern:$0x73625140]
  %v1139 = vld.sshfl [vmem:[#allocation1 + $0x18] sm:$0xff pattern:$0x73625140]
  %v1141 = vld.sshfl [vmem:[#allocation1 + $0x20] sm:$0xff pattern:$0x73625140]
  %1143 = vrot.lane.b32.xlu0 %v1133, 127
  %v1144 = vpop.permute.xlu0 %1143
  %1145 = vrot.lane.b32.xlu0 %v1135, 127
  %v1146 = vpop.permute.xlu0 %1145
  %1147 = vrot.lane.b32.xlu0 %v1137, 127
  %v1148 = vpop.permute.xlu0 %1147
  %1149 = vrot.lane.b32.xlu0 %v1139, 127
  %v1150 = vpop.permute.xlu0 %1149
  %1151 = vrot.lane.b32.xlu0 %v1141, 127
  %v1152 = vpop.permute.xlu0 %1151
  %v1153 = vsel %vm64, %v1144, %v1146
  %v1154 = vsel %vm64, %v1146, %v1148
  %v1155 = vsel %vm64, %v1148, %v1150
  %v1156 = vsel %vm64, %v1150, %v1152
  %v1158 = vsel %vm69, %v1127, 0
  %v1161 = vsel %vm73, %v1153, 0
  %v1164 = vsel %vm73, %v1154, 0
  %v1167 = vsel %vm73, %v1155, 0
  %v1170 = vsel %vm73, %v1156, 0
  %1172 = vmatpush.bf16.msra.mxu0 0
  %1173 = vmatpush.bf16.msra.mxu0 0
  %1174 = vmatpush.bf16.msra.mxu0 0
  %1175 = vmatpush.bf16.msra.mxu0 0
  %1176 = vmatpush.bf16.msra.mxu0 0
  %1177 = vmatpush.bf16.msra.mxu0 0
  %1178 = vmatpush.bf16.msra.mxu0 0
  %1179 = vmatpush.bf16.msra.mxu0 %v1161
  %1180 = vmatmul.bf16.gmra.mxu0 %v1158
  %v1181 = vpop.f32.mrf.mxu0
  %v1182 = vadd.f32 0.0, %v1181
  %v1183 = vpop.f32.mrf.mxu0
  %v1184 = vadd.f32 0.0, %v1183
  %1185 = vdwg.mxu0
  %1186 = vmatpush.bf16.msra.mxu0 0
  %1187 = vmatpush.bf16.msra.mxu0 0
  %1188 = vmatpush.bf16.msra.mxu0 0
  %1189 = vmatpush.bf16.msra.mxu0 0
  %1190 = vmatpush.bf16.msra.mxu0 0
  %1191 = vmatpush.bf16.msra.mxu0 0
  %1192 = vmatpush.bf16.msra.mxu0 0
  %1193 = vmatpush.bf16.msra.mxu0 %v1164
  %1194 = vmatmul.bf16.gmra.mxu0 %v1158
  %v1195 = vpop.f32.mrf.mxu0
  %v1196 = vadd.f32 0.0, %v1195
  %v1197 = vpop.f32.mrf.mxu0
  %v1198 = vadd.f32 0.0, %v1197
  %1199 = vdwg.mxu0
  %1200 = vmatpush.bf16.msra.mxu0 0
  %1201 = vmatpush.bf16.msra.mxu0 0
  %1202 = vmatpush.bf16.msra.mxu0 0
  %1203 = vmatpush.bf16.msra.mxu0 0
  %1204 = vmatpush.bf16.msra.mxu0 0
  %1205 = vmatpush.bf16.msra.mxu0 0
  %1206 = vmatpush.bf16.msra.mxu0 0
  %1207 = vmatpush.bf16.msra.mxu0 %v1167
  %1208 = vmatmul.bf16.gmra.mxu0 %v1158
  %v1209 = vpop.f32.mrf.mxu0
  %v1210 = vadd.f32 0.0, %v1209
  %v1211 = vpop.f32.mrf.mxu0
  %v1212 = vadd.f32 0.0, %v1211
  %1213 = vdwg.mxu0
  %1214 = vmatpush.bf16.msra.mxu0 0
  %1215 = vmatpush.bf16.msra.mxu0 0
  %1216 = vmatpush.bf16.msra.mxu0 0
  %1217 = vmatpush.bf16.msra.mxu0 0
  %1218 = vmatpush.bf16.msra.mxu0 0
  %1219 = vmatpush.bf16.msra.mxu0 0
  %1220 = vmatpush.bf16.msra.mxu0 0
  %1221 = vmatpush.bf16.msra.mxu0 %v1170
  %1222 = vmatmul.bf16.gmra.mxu0 %v1158
  %v1223 = vpop.f32.mrf.mxu0
  %v1224 = vadd.f32 0.0, %v1223
  %v1225 = vpop.f32.mrf.mxu0
  %v1226 = vadd.f32 0.0, %v1225
  %1227 = vdwg.mxu0
  %1228 = vst [vmem:[#allocation1] ss:$4 sm:$0xff] %v1119
  %v1229 = vld.sshfl [vmem:[#allocation1] sm:$0xff pattern:$0x73625140]
  %v1230 = vld.sshfl [vmem:[#allocation1 + $0x8] sm:$0xff pattern:$0x73625140]
  %v1231 = vld.sshfl [vmem:[#allocation1 + $0x10] sm:$0xff pattern:$0x73625140]
  %v1232 = vld.sshfl [vmem:[#allocation1 + $0x18] sm:$0xff pattern:$0x73625140]
  %v1234 = vsel %vm69, %v1125, 0
  %v1236 = vsel %vm73, %v1229, 0
  %v1238 = vsel %vm73, %v1230, 0
  %v1240 = vsel %vm73, %v1231, 0
  %v1242 = vsel %vm73, %v1232, 0
  %1244 = vmatpush.bf16.msra.mxu0 0
  %1245 = vmatpush.bf16.msra.mxu0 0
  %1246 = vmatpush.bf16.msra.mxu0 0
  %1247 = vmatpush.bf16.msra.mxu0 0
  %1248 = vmatpush.bf16.msra.mxu0 0
  %1249 = vmatpush.bf16.msra.mxu0 0
  %1250 = vmatpush.bf16.msra.mxu0 0
  %1251 = vmatpush.bf16.msra.mxu0 %v1236
  %1252 = vmatmul.bf16.gmra.mxu0 %v1234
  %v1253 = vpop.f32.mrf.mxu0
  %v1254 = vadd.f32 %v1182, %v1253
  %v1255 = vpop.f32.mrf.mxu0
  %v1256 = vadd.f32 %v1184, %v1255
  %1257 = vdwg.mxu0
  %1258 = vmatpush.bf16.msra.mxu0 0
  %1259 = vmatpush.bf16.msra.mxu0 0
  %1260 = vmatpush.bf16.msra.mxu0 0
  %1261 = vmatpush.bf16.msra.mxu0 0
  %1262 = vmatpush.bf16.msra.mxu0 0
  %1263 = vmatpush.bf16.msra.mxu0 0
  %1264 = vmatpush.bf16.msra.mxu0 0
  %1265 = vmatpush.bf16.msra.mxu0 %v1238
  %1266 = vmatmul.bf16.gmra.mxu0 %v1234
  %v1267 = vpop.f32.mrf.mxu0
  %v1268 = vadd.f32 %v1196, %v1267
  %v1269 = vpop.f32.mrf.mxu0
  %v1270 = vadd.f32 %v1198, %v1269
  %1271 = vdwg.mxu0
  %1272 = vmatpush.bf16.msra.mxu0 0
  %1273 = vmatpush.bf16.msra.mxu0 0
  %1274 = vmatpush.bf16.msra.mxu0 0
  %1275 = vmatpush.bf16.msra.mxu0 0
  %1276 = vmatpush.bf16.msra.mxu0 0
  %1277 = vmatpush.bf16.msra.mxu0 0
  %1278 = vmatpush.bf16.msra.mxu0 0
  %1279 = vmatpush.bf16.msra.mxu0 %v1240
  %1280 = vmatmul.bf16.gmra.mxu0 %v1234
  %v1281 = vpop.f32.mrf.mxu0
  %v1282 = vadd.f32 %v1210, %v1281
  %v1283 = vpop.f32.mrf.mxu0
  %v1284 = vadd.f32 %v1212, %v1283
  %1285 = vdwg.mxu0
  %1286 = vmatpush.bf16.msra.mxu0 0
  %1287 = vmatpush.bf16.msra.mxu0 0
  %1288 = vmatpush.bf16.msra.mxu0 0
  %1289 = vmatpush.bf16.msra.mxu0 0
  %1290 = vmatpush.bf16.msra.mxu0 0
  %1291 = vmatpush.bf16.msra.mxu0 0
  %1292 = vmatpush.bf16.msra.mxu0 0
  %1293 = vmatpush.bf16.msra.mxu0 %v1242
  %1294 = vmatmul.bf16.gmra.mxu0 %v1234
  %v1295 = vpop.f32.mrf.mxu0
  %v1296 = vadd.f32 %v1224, %v1295
  %v1297 = vpop.f32.mrf.mxu0
  %v1298 = vadd.f32 %v1226, %v1297
  %1299 = vdwg.mxu0
  %v1300 = vld [vmem:[%s1] sm:$0xf]
  %v1301 = vld [vmem:[%s1 + $0x4] sm:$0xf]
  %v1302 = vld [vmem:[%s1118] sm:$0xff]
  %v1303 = vld [vmem:[%s1118 + $0x8] sm:$0x3]
  %v1306 = vunpack.c.l.b16 %v1300
  %v1307 = vunpack.c.l.b16 %v1301
  %v1308 = vpack.c.b16 %v1307, %v1306
  %1309 = vrot.lane.b32.xlu0 %v1308, 120
  %v1310 = vpop.permute.xlu0 %1309
  %1312 = vst [vmem:[#allocation1] ss:$4 sm:$0xff] %v1302
  %s1314 = scalar_lea.vmem [#allocation1], 32
  %1315 = vst [vmem:[%s1314] ss:$4 sm:$0xff] %v1303
  %v1316 = vld.sshfl [vmem:[#allocation1] sm:$0xff pattern:$0x73625140]
  %v1318 = vld.sshfl [vmem:[#allocation1 + $0x8] sm:$0xff pattern:$0x73625140]
  %v1320 = vld.sshfl [vmem:[#allocation1 + $0x10] sm:$0xff pattern:$0x73625140]
  %v1322 = vld.sshfl [vmem:[#allocation1 + $0x18] sm:$0xff pattern:$0x73625140]
  %v1324 = vld.sshfl [vmem:[#allocation1 + $0x20] sm:$0xff pattern:$0x73625140]
  %1326 = vrot.lane.b32.xlu0 %v1316, 126
  %v1327 = vpop.permute.xlu0 %1326
  %1328 = vrot.lane.b32.xlu0 %v1318, 126
  %v1329 = vpop.permute.xlu0 %1328
  %1330 = vrot.lane.b32.xlu0 %v1320, 126
  %v1331 = vpop.permute.xlu0 %1330
  %1332 = vrot.lane.b32.xlu0 %v1322, 126
  %v1333 = vpop.permute.xlu0 %1332
  %1334 = vrot.lane.b32.xlu0 %v1324, 126
  %v1335 = vpop.permute.xlu0 %1334
  %v1336 = vsel %vm250, %v1327, %v1329
  %v1337 = vsel %vm250, %v1329, %v1331
  %v1338 = vsel %vm250, %v1331, %v1333
  %v1339 = vsel %vm250, %v1333, %v1335
  %v1341 = vsel %vm69, %v1310, 0
  %v1344 = vsel %vm73, %v1336, 0
  %v1347 = vsel %vm73, %v1337, 0
  %v1350 = vsel %vm73, %v1338, 0
  %v1353 = vsel %vm73, %v1339, 0
  %1355 = vmatpush.bf16.msra.mxu0 0
  %1356 = vmatpush.bf16.msra.mxu0 0
  %1357 = vmatpush.bf16.msra.mxu0 0
  %1358 = vmatpush.bf16.msra.mxu0 0
  %1359 = vmatpush.bf16.msra.mxu0 0
  %1360 = vmatpush.bf16.msra.mxu0 0
  %1361 = vmatpush.bf16.msra.mxu0 0
  %1362 = vmatpush.bf16.msra.mxu0 %v1344
  %1363 = vmatmul.bf16.gmra.mxu0 %v1341
  %v1364 = vpop.f32.mrf.mxu0
  %v1365 = vadd.f32 0.0, %v1364
  %v1366 = vpop.f32.mrf.mxu0
  %v1367 = vadd.f32 0.0, %v1366
  %1368 = vdwg.mxu0
  %1369 = vmatpush.bf16.msra.mxu0 0
  %1370 = vmatpush.bf16.msra.mxu0 0
  %1371 = vmatpush.bf16.msra.mxu0 0
  %1372 = vmatpush.bf16.msra.mxu0 0
  %1373 = vmatpush.bf16.msra.mxu0 0
  %1374 = vmatpush.bf16.msra.mxu0 0
  %1375 = vmatpush.bf16.msra.mxu0 0
  %1376 = vmatpush.bf16.msra.mxu0 %v1347
  %1377 = vmatmul.bf16.gmra.mxu0 %v1341
  %v1378 = vpop.f32.mrf.mxu0
  %v1379 = vadd.f32 0.0, %v1378
  %v1380 = vpop.f32.mrf.mxu0
  %v1381 = vadd.f32 0.0, %v1380
  %1382 = vdwg.mxu0
  %1383 = vmatpush.bf16.msra.mxu0 0
  %1384 = vmatpush.bf16.msra.mxu0 0
  %1385 = vmatpush.bf16.msra.mxu0 0
  %1386 = vmatpush.bf16.msra.mxu0 0
  %1387 = vmatpush.bf16.msra.mxu0 0
  %1388 = vmatpush.bf16.msra.mxu0 0
  %1389 = vmatpush.bf16.msra.mxu0 0
  %1390 = vmatpush.bf16.msra.mxu0 %v1350
  %1391 = vmatmul.bf16.gmra.mxu0 %v1341
  %v1392 = vpop.f32.mrf.mxu0
  %v1393 = vadd.f32 0.0, %v1392
  %v1394 = vpop.f32.mrf.mxu0
  %v1395 = vadd.f32 0.0, %v1394
  %1396 = vdwg.mxu0
  %1397 = vmatpush.bf16.msra.mxu0 0
  %1398 = vmatpush.bf16.msra.mxu0 0
  %1399 = vmatpush.bf16.msra.mxu0 0
  %1400 = vmatpush.bf16.msra.mxu0 0
  %1401 = vmatpush.bf16.msra.mxu0 0
  %1402 = vmatpush.bf16.msra.mxu0 0
  %1403 = vmatpush.bf16.msra.mxu0 0
  %1404 = vmatpush.bf16.msra.mxu0 %v1353
  %1405 = vmatmul.bf16.gmra.mxu0 %v1341
  %v1406 = vpop.f32.mrf.mxu0
  %v1407 = vadd.f32 0.0, %v1406
  %v1408 = vpop.f32.mrf.mxu0
  %v1409 = vadd.f32 0.0, %v1408
  %1410 = vdwg.mxu0
  %v1411 = vadd.f32 %v1254, %v1365
  %v1412 = vadd.f32 %v1268, %v1379
  %v1413 = vadd.f32 %v1282, %v1393
  %v1414 = vadd.f32 %v1296, %v1407
  %v1415 = vadd.f32 %v1256, %v1367
  %v1416 = vadd.f32 %v1270, %v1381
  %v1417 = vadd.f32 %v1284, %v1395
  %v1418 = vadd.f32 %v1298, %v1409
  %v1419 = vld [vmem:[%s1] sm:$0xf]
  %v1420 = vld [vmem:[%s1 + $0x4] sm:$0xf]
  %v1421 = vld [vmem:[%s1118] sm:$0xff]
  %v1422 = vld [vmem:[%s1118 + $0x8] sm:$0x3]
  %v1425 = vunpack.c.l.b16 %v1419
  %v1426 = vunpack.c.l.b16 %v1420
  %v1427 = vpack.c.b16 %v1426, %v1425
  %1428 = vrot.lane.b32.xlu0 %v1427, 116
  %v1429 = vpop.permute.xlu0 %1428
  %1431 = vst [vmem:[#allocation1] ss:$4 sm:$0xff] %v1421
  %s1433 = scalar_lea.vmem [#allocation1], 32
  %1434 = vst [vmem:[%s1433] ss:$4 sm:$0xff] %v1422
  %v1435 = vld.sshfl [vmem:[#allocation1] sm:$0xff pattern:$0x73625140]
  %v1437 = vld.sshfl [vmem:[#allocation1 + $0x8] sm:$0xff pattern:$0x73625140]
  %v1439 = vld.sshfl [vmem:[#allocation1 + $0x10] sm:$0xff pattern:$0x73625140]
  %v1441 = vld.sshfl [vmem:[#allocation1 + $0x18] sm:$0xff pattern:$0x73625140]
  %v1443 = vld.sshfl [vmem:[#allocation1 + $0x20] sm:$0xff pattern:$0x73625140]
  %1445 = vrot.lane.b32.xlu0 %v1435, 110
  %v1446 = vpop.permute.xlu0 %1445
  %1447 = vrot.lane.b32.xlu0 %v1437, 110
  %v1448 = vpop.permute.xlu0 %1447
  %1449 = vrot.lane.b32.xlu0 %v1439, 110
  %v1450 = vpop.permute.xlu0 %1449
  %1451 = vrot.lane.b32.xlu0 %v1441, 110
  %v1452 = vpop.permute.xlu0 %1451
  %1453 = vrot.lane.b32.xlu0 %v1443, 110
  %v1454 = vpop.permute.xlu0 %1453
  %v1455 = vsel %vm370, %v1446, %v1448
  %v1456 = vsel %vm370, %v1448, %v1450
  %v1457 = vsel %vm370, %v1450, %v1452
  %v1458 = vsel %vm370, %v1452, %v1454
  %v1460 = vsel %vm69, %v1429, 0
  %v1463 = vsel %vm73, %v1455, 0
  %v1466 = vsel %vm73, %v1456, 0
  %v1469 = vsel %vm73, %v1457, 0
  %v1472 = vsel %vm73, %v1458, 0
  %1474 = vmatpush.bf16.msra.mxu0 0
  %1475 = vmatpush.bf16.msra.mxu0 0
  %1476 = vmatpush.bf16.msra.mxu0 0
  %1477 = vmatpush.bf16.msra.mxu0 0
  %1478 = vmatpush.bf16.msra.mxu0 0
  %1479 = vmatpush.bf16.msra.mxu0 0
  %1480 = vmatpush.bf16.msra.mxu0 0
  %1481 = vmatpush.bf16.msra.mxu0 %v1463
  %1482 = vmatmul.bf16.gmra.mxu0 %v1460
  %v1483 = vpop.f32.mrf.mxu0
  %v1484 = vadd.f32 0.0, %v1483
  %v1485 = vpop.f32.mrf.mxu0
  %v1486 = vadd.f32 0.0, %v1485
  %1487 = vdwg.mxu0
  %1488 = vmatpush.bf16.msra.mxu0 0
  %1489 = vmatpush.bf16.msra.mxu0 0
  %1490 = vmatpush.bf16.msra.mxu0 0
  %1491 = vmatpush.bf16.msra.mxu0 0
  %1492 = vmatpush.bf16.msra.mxu0 0
  %1493 = vmatpush.bf16.msra.mxu0 0
  %1494 = vmatpush.bf16.msra.mxu0 0
  %1495 = vmatpush.bf16.msra.mxu0 %v1466
  %1496 = vmatmul.bf16.gmra.mxu0 %v1460
  %v1497 = vpop.f32.mrf.mxu0
  %v1498 = vadd.f32 0.0, %v1497
  %v1499 = vpop.f32.mrf.mxu0
  %v1500 = vadd.f32 0.0, %v1499
  %1501 = vdwg.mxu0
  %1502 = vmatpush.bf16.msra.mxu0 0
  %1503 = vmatpush.bf16.msra.mxu0 0
  %1504 = vmatpush.bf16.msra.mxu0 0
  %1505 = vmatpush.bf16.msra.mxu0 0
  %1506 = vmatpush.bf16.msra.mxu0 0
  %1507 = vmatpush.bf16.msra.mxu0 0
  %1508 = vmatpush.bf16.msra.mxu0 0
  %1509 = vmatpush.bf16.msra.mxu0 %v1469
  %1510 = vmatmul.bf16.gmra.mxu0 %v1460
  %v1511 = vpop.f32.mrf.mxu0
  %v1512 = vadd.f32 0.0, %v1511
  %v1513 = vpop.f32.mrf.mxu0
  %v1514 = vadd.f32 0.0, %v1513
  %1515 = vdwg.mxu0
  %1516 = vmatpush.bf16.msra.mxu0 0
  %1517 = vmatpush.bf16.msra.mxu0 0
  %1518 = vmatpush.bf16.msra.mxu0 0
  %1519 = vmatpush.bf16.msra.mxu0 0
  %1520 = vmatpush.bf16.msra.mxu0 0
  %1521 = vmatpush.bf16.msra.mxu0 0
  %1522 = vmatpush.bf16.msra.mxu0 0
  %1523 = vmatpush.bf16.msra.mxu0 %v1472
  %1524 = vmatmul.bf16.gmra.mxu0 %v1460
  %v1525 = vpop.f32.mrf.mxu0
  %v1526 = vadd.f32 0.0, %v1525
  %v1527 = vpop.f32.mrf.mxu0
  %v1528 = vadd.f32 0.0, %v1527
  %1529 = vdwg.mxu0
  %v1530 = vadd.f32 %v1411, %v1484
  %v1531 = vadd.f32 %v1412, %v1498
  %v1532 = vadd.f32 %v1413, %v1512
  %v1533 = vadd.f32 %v1414, %v1526
  %v1534 = vadd.f32 %v1415, %v1486
  %v1535 = vadd.f32 %v1416, %v1500
  %v1536 = vadd.f32 %v1417, %v1514
  %v1537 = vadd.f32 %v1418, %v1528
  %v1538 = vld [vmem:[%s1] sm:$0xf]
  %v1539 = vld [vmem:[%s1 + $0x4] sm:$0xf]
  %v1540 = vld [vmem:[%s1118] sm:$0xff]
  %v1541 = vld [vmem:[%s1118 + $0x8] sm:$0x3]
  %v1544 = vunpack.c.l.b16 %v1538
  %v1545 = vunpack.c.l.b16 %v1539
  %v1546 = vpack.c.b16 %v1545, %v1544
  %1547 = vrot.lane.b32.xlu0 %v1546, 112
  %v1548 = vpop.permute.xlu0 %1547
  %1550 = vst [vmem:[#allocation1] ss:$4 sm:$0xff] %v1540
  %s1552 = scalar_lea.vmem [#allocation1], 32
  %1553 = vst [vmem:[%s1552] ss:$4 sm:$0xff] %v1541
  %v1554 = vld.sshfl [vmem:[#allocation1] sm:$0xff pattern:$0x73625140]
  %v1556 = vld.sshfl [vmem:[#allocation1 + $0x8] sm:$0xff pattern:$0x73625140]
  %v1558 = vld.sshfl [vmem:[#allocation1 + $0x10] sm:$0xff pattern:$0x73625140]
  %v1560 = vld.sshfl [vmem:[#allocation1 + $0x18] sm:$0xff pattern:$0x73625140]
  %v1562 = vld.sshfl [vmem:[#allocation1 + $0x20] sm:$0xff pattern:$0x73625140]
  %1564 = vrot.lane.b32.xlu0 %v1554, 109
  %v1565 = vpop.permute.xlu0 %1564
  %1566 = vrot.lane.b32.xlu0 %v1556, 109
  %v1567 = vpop.permute.xlu0 %1566
  %1568 = vrot.lane.b32.xlu0 %v1558, 109
  %v1569 = vpop.permute.xlu0 %1568
  %1570 = vrot.lane.b32.xlu0 %v1560, 109
  %v1571 = vpop.permute.xlu0 %1570
  %1572 = vrot.lane.b32.xlu0 %v1562, 109
  %v1573 = vpop.permute.xlu0 %1572
  %v1574 = vsel %vm490, %v1565, %v1567
  %v1575 = vsel %vm490, %v1567, %v1569
  %v1576 = vsel %vm490, %v1569, %v1571
  %v1577 = vsel %vm490, %v1571, %v1573
  %v1579 = vsel %vm69, %v1548, 0
  %v1582 = vsel %vm73, %v1574, 0
  %v1585 = vsel %vm73, %v1575, 0
  %v1588 = vsel %vm73, %v1576, 0
  %v1591 = vsel %vm73, %v1577, 0
  %1593 = vmatpush.bf16.msra.mxu0 0
  %1594 = vmatpush.bf16.msra.mxu0 0
  %1595 = vmatpush.bf16.msra.mxu0 0
  %1596 = vmatpush.bf16.msra.mxu0 0
  %1597 = vmatpush.bf16.msra.mxu0 0
  %1598 = vmatpush.bf16.msra.mxu0 0
  %1599 = vmatpush.bf16.msra.mxu0 0
  %1600 = vmatpush.bf16.msra.mxu0 %v1582
  %1601 = vmatmul.bf16.gmra.mxu0 %v1579
  %v1602 = vpop.f32.mrf.mxu0
  %v1603 = vadd.f32 0.0, %v1602
  %v1604 = vpop.f32.mrf.mxu0
  %v1605 = vadd.f32 0.0, %v1604
  %1606 = vdwg.mxu0
  %1607 = vmatpush.bf16.msra.mxu0 0
  %1608 = vmatpush.bf16.msra.mxu0 0
  %1609 = vmatpush.bf16.msra.mxu0 0
  %1610 = vmatpush.bf16.msra.mxu0 0
  %1611 = vmatpush.bf16.msra.mxu0 0
  %1612 = vmatpush.bf16.msra.mxu0 0
  %1613 = vmatpush.bf16.msra.mxu0 0
  %1614 = vmatpush.bf16.msra.mxu0 %v1585
  %1615 = vmatmul.bf16.gmra.mxu0 %v1579
  %v1616 = vpop.f32.mrf.mxu0
  %v1617 = vadd.f32 0.0, %v1616
  %v1618 = vpop.f32.mrf.mxu0
  %v1619 = vadd.f32 0.0, %v1618
  %1620 = vdwg.mxu0
  %1621 = vmatpush.bf16.msra.mxu0 0
  %1622 = vmatpush.bf16.msra.mxu0 0
  %1623 = vmatpush.bf16.msra.mxu0 0
  %1624 = vmatpush.bf16.msra.mxu0 0
  %1625 = vmatpush.bf16.msra.mxu0 0
  %1626 = vmatpush.bf16.msra.mxu0 0
  %1627 = vmatpush.bf16.msra.mxu0 0
  %1628 = vmatpush.bf16.msra.mxu0 %v1588
  %1629 = vmatmul.bf16.gmra.mxu0 %v1579
  %v1630 = vpop.f32.mrf.mxu0
  %v1631 = vadd.f32 0.0, %v1630
  %v1632 = vpop.f32.mrf.mxu0
  %v1633 = vadd.f32 0.0, %v1632
  %1634 = vdwg.mxu0
  %1635 = vmatpush.bf16.msra.mxu0 0
  %1636 = vmatpush.bf16.msra.mxu0 0
  %1637 = vmatpush.bf16.msra.mxu0 0
  %1638 = vmatpush.bf16.msra.mxu0 0
  %1639 = vmatpush.bf16.msra.mxu0 0
  %1640 = vmatpush.bf16.msra.mxu0 0
  %1641 = vmatpush.bf16.msra.mxu0 0
  %1642 = vmatpush.bf16.msra.mxu0 %v1591
  %1643 = vmatmul.bf16.gmra.mxu0 %v1579
  %v1644 = vpop.f32.mrf.mxu0
  %v1645 = vadd.f32 0.0, %v1644
  %v1646 = vpop.f32.mrf.mxu0
  %v1647 = vadd.f32 0.0, %v1646
  %1648 = vdwg.mxu0
  %v1649 = vadd.f32 %v1530, %v1603
  %v1650 = vadd.f32 %v1531, %v1617
  %v1651 = vadd.f32 %v1532, %v1631
  %v1652 = vadd.f32 %v1533, %v1645
  %v1653 = vadd.f32 %v1534, %v1605
  %v1654 = vadd.f32 %v1535, %v1619
  %v1655 = vadd.f32 %v1536, %v1633
  %v1656 = vadd.f32 %v1537, %v1647
  %v1657 = vld [vmem:[%s1] sm:$0xf]
  %v1658 = vld [vmem:[%s1 + $0x4] sm:$0xf]
  %v1659 = vld [vmem:[%s1118] sm:$0xff]
  %v1660 = vld [vmem:[%s1118 + $0x8] sm:$0x3]
  %v1663 = vunpack.c.l.b16 %v1657
  %v1664 = vunpack.c.l.b16 %v1658
  %v1665 = vpack.c.b16 %v1664, %v1663
  %1666 = vrot.lane.b32.xlu0 %v1665, 108
  %v1667 = vpop.permute.xlu0 %1666
  %1669 = vst [vmem:[#allocation1] ss:$4 sm:$0xff] %v1659
  %s1671 = scalar_lea.vmem [#allocation1], 32
  %1672 = vst [vmem:[%s1671] ss:$4 sm:$0xff] %v1660
  %v1673 = vld.sshfl [vmem:[#allocation1] sm:$0xff pattern:$0x73625140]
  %v1675 = vld.sshfl [vmem:[#allocation1 + $0x8] sm:$0xff pattern:$0x73625140]
  %v1677 = vld.sshfl [vmem:[#allocation1 + $0x10] sm:$0xff pattern:$0x73625140]
  %v1679 = vld.sshfl [vmem:[#allocation1 + $0x18] sm:$0xff pattern:$0x73625140]
  %v1681 = vld.sshfl [vmem:[#allocation1 + $0x20] sm:$0xff pattern:$0x73625140]
  %1683 = vrot.lane.b32.xlu0 %v1673, 108
  %v1684 = vpop.permute.xlu0 %1683
  %1685 = vrot.lane.b32.xlu0 %v1675, 108
  %v1686 = vpop.permute.xlu0 %1685
  %1687 = vrot.lane.b32.xlu0 %v1677, 108
  %v1688 = vpop.permute.xlu0 %1687
  %1689 = vrot.lane.b32.xlu0 %v1679, 108
  %v1690 = vpop.permute.xlu0 %1689
  %1691 = vrot.lane.b32.xlu0 %v1681, 108
  %v1692 = vpop.permute.xlu0 %1691
  %v1693 = vsel %vm610, %v1684, %v1686
  %v1694 = vsel %vm610, %v1686, %v1688
  %v1695 = vsel %vm610, %v1688, %v1690
  %v1696 = vsel %vm610, %v1690, %v1692
  %v1698 = vsel %vm69, %v1667, 0
  %v1701 = vsel %vm73, %v1693, 0
  %v1704 = vsel %vm73, %v1694, 0
  %v1707 = vsel %vm73, %v1695, 0
  %v1710 = vsel %vm73, %v1696, 0
  %1712 = vmatpush.bf16.msra.mxu0 0
  %1713 = vmatpush.bf16.msra.mxu0 0
  %1714 = vmatpush.bf16.msra.mxu0 0
  %1715 = vmatpush.bf16.msra.mxu0 0
  %1716 = vmatpush.bf16.msra.mxu0 0
  %1717 = vmatpush.bf16.msra.mxu0 0
  %1718 = vmatpush.bf16.msra.mxu0 0
  %1719 = vmatpush.bf16.msra.mxu0 %v1701
  %1720 = vmatmul.bf16.gmra.mxu0 %v1698
  %v1721 = vpop.f32.mrf.mxu0
  %v1722 = vadd.f32 0.0, %v1721
  %v1723 = vpop.f32.mrf.mxu0
  %v1724 = vadd.f32 0.0, %v1723
  %1725 = vdwg.mxu0
  %1726 = vmatpush.bf16.msra.mxu0 0
  %1727 = vmatpush.bf16.msra.mxu0 0
  %1728 = vmatpush.bf16.msra.mxu0 0
  %1729 = vmatpush.bf16.msra.mxu0 0
  %1730 = vmatpush.bf16.msra.mxu0 0
  %1731 = vmatpush.bf16.msra.mxu0 0
  %1732 = vmatpush.bf16.msra.mxu0 0
  %1733 = vmatpush.bf16.msra.mxu0 %v1704
  %1734 = vmatmul.bf16.gmra.mxu0 %v1698
  %v1735 = vpop.f32.mrf.mxu0
  %v1736 = vadd.f32 0.0, %v1735
  %v1737 = vpop.f32.mrf.mxu0
  %v1738 = vadd.f32 0.0, %v1737
  %1739 = vdwg.mxu0
  %1740 = vmatpush.bf16.msra.mxu0 0
  %1741 = vmatpush.bf16.msra.mxu0 0
  %1742 = vmatpush.bf16.msra.mxu0 0
  %1743 = vmatpush.bf16.msra.mxu0 0
  %1744 = vmatpush.bf16.msra.mxu0 0
  %1745 = vmatpush.bf16.msra.mxu0 0
  %1746 = vmatpush.bf16.msra.mxu0 0
  %1747 = vmatpush.bf16.msra.mxu0 %v1707
  %1748 = vmatmul.bf16.gmra.mxu0 %v1698
  %v1749 = vpop.f32.mrf.mxu0
  %v1750 = vadd.f32 0.0, %v1749
  %v1751 = vpop.f32.mrf.mxu0
  %v1752 = vadd.f32 0.0, %v1751
  %1753 = vdwg.mxu0
  %1754 = vmatpush.bf16.msra.mxu0 0
  %1755 = vmatpush.bf16.msra.mxu0 0
  %1756 = vmatpush.bf16.msra.mxu0 0
  %1757 = vmatpush.bf16.msra.mxu0 0
  %1758 = vmatpush.bf16.msra.mxu0 0
  %1759 = vmatpush.bf16.msra.mxu0 0
  %1760 = vmatpush.bf16.msra.mxu0 0
  %1761 = vmatpush.bf16.msra.mxu0 %v1710
  %1762 = vmatmul.bf16.gmra.mxu0 %v1698
  %v1763 = vpop.f32.mrf.mxu0
  %v1764 = vadd.f32 0.0, %v1763
  %v1765 = vpop.f32.mrf.mxu0
  %v1766 = vadd.f32 0.0, %v1765
  %1767 = vdwg.mxu0
  %v1768 = vadd.f32 %v1649, %v1722
  %v1769 = vadd.f32 %v1650, %v1736
  %v1770 = vadd.f32 %v1651, %v1750
  %v1771 = vadd.f32 %v1652, %v1764
  %v1772 = vadd.f32 %v1653, %v1724
  %v1773 = vadd.f32 %v1654, %v1738
  %v1774 = vadd.f32 %v1655, %v1752
  %v1775 = vadd.f32 %v1656, %v1766
  %v1776 = vld [vmem:[%s1] sm:$0xf]
  %v1777 = vld [vmem:[%s1 + $0x4] sm:$0xf]
  %v1778 = vld [vmem:[%s1118] sm:$0xff]
  %v1779 = vld [vmem:[%s1118 + $0x8] sm:$0x3]
  %v1782 = vunpack.c.l.b16 %v1776
  %v1783 = vunpack.c.l.b16 %v1777
  %v1784 = vpack.c.b16 %v1783, %v1782
  %1785 = vrot.lane.b32.xlu0 %v1784, 104
  %v1786 = vpop.permute.xlu0 %1785
  %1788 = vst [vmem:[#allocation1] ss:$4 sm:$0xff] %v1778
  %s1790 = scalar_lea.vmem [#allocation1], 32
  %1791 = vst [vmem:[%s1790] ss:$4 sm:$0xff] %v1779
  %v1792 = vld.sshfl [vmem:[#allocation1] sm:$0xff pattern:$0x73625140]
  %v1794 = vld.sshfl [vmem:[#allocation1 + $0x8] sm:$0xff pattern:$0x73625140]
  %v1796 = vld.sshfl [vmem:[#allocation1 + $0x10] sm:$0xff pattern:$0x73625140]
  %v1798 = vld.sshfl [vmem:[#allocation1 + $0x18] sm:$0xff pattern:$0x73625140]
  %v1800 = vld.sshfl [vmem:[#allocation1 + $0x20] sm:$0xff pattern:$0x73625140]
  %1802 = vrot.lane.b32.xlu0 %v1792, 92
  %v1803 = vpop.permute.xlu0 %1802
  %1804 = vrot.lane.b32.xlu0 %v1794, 92
  %v1805 = vpop.permute.xlu0 %1804
  %1806 = vrot.lane.b32.xlu0 %v1796, 92
  %v1807 = vpop.permute.xlu0 %1806
  %1808 = vrot.lane.b32.xlu0 %v1798, 92
  %v1809 = vpop.permute.xlu0 %1808
  %1810 = vrot.lane.b32.xlu0 %v1800, 92
  %v1811 = vpop.permute.xlu0 %1810
  %v1812 = vsel %vm730, %v1803, %v1805
  %v1813 = vsel %vm730, %v1805, %v1807
  %v1814 = vsel %vm730, %v1807, %v1809
  %v1815 = vsel %vm730, %v1809, %v1811
  %v1817 = vsel %vm69, %v1786, 0
  %v1820 = vsel %vm73, %v1812, 0
  %v1823 = vsel %vm73, %v1813, 0
  %v1826 = vsel %vm73, %v1814, 0
  %v1829 = vsel %vm73, %v1815, 0
  %1831 = vmatpush.bf16.msra.mxu0 0
  %1832 = vmatpush.bf16.msra.mxu0 0
  %1833 = vmatpush.bf16.msra.mxu0 0
  %1834 = vmatpush.bf16.msra.mxu0 0
  %1835 = vmatpush.bf16.msra.mxu0 0
  %1836 = vmatpush.bf16.msra.mxu0 0
  %1837 = vmatpush.bf16.msra.mxu0 0
  %1838 = vmatpush.bf16.msra.mxu0 %v1820
  %1839 = vmatmul.bf16.gmra.mxu0 %v1817
  %v1840 = vpop.f32.mrf.mxu0
  %v1841 = vadd.f32 0.0, %v1840
  %v1842 = vpop.f32.mrf.mxu0
  %v1843 = vadd.f32 0.0, %v1842
  %1844 = vdwg.mxu0
  %1845 = vmatpush.bf16.msra.mxu0 0
  %1846 = vmatpush.bf16.msra.mxu0 0
  %1847 = vmatpush.bf16.msra.mxu0 0
  %1848 = vmatpush.bf16.msra.mxu0 0
  %1849 = vmatpush.bf16.msra.mxu0 0
  %1850 = vmatpush.bf16.msra.mxu0 0
  %1851 = vmatpush.bf16.msra.mxu0 0
  %1852 = vmatpush.bf16.msra.mxu0 %v1823
  %1853 = vmatmul.bf16.gmra.mxu0 %v1817
  %v1854 = vpop.f32.mrf.mxu0
  %v1855 = vadd.f32 0.0, %v1854
  %v1856 = vpop.f32.mrf.mxu0
  %v1857 = vadd.f32 0.0, %v1856
  %1858 = vdwg.mxu0
  %1859 = vmatpush.bf16.msra.mxu0 0
  %1860 = vmatpush.bf16.msra.mxu0 0
  %1861 = vmatpush.bf16.msra.mxu0 0
  %1862 = vmatpush.bf16.msra.mxu0 0
  %1863 = vmatpush.bf16.msra.mxu0 0
  %1864 = vmatpush.bf16.msra.mxu0 0
  %1865 = vmatpush.bf16.msra.mxu0 0
  %1866 = vmatpush.bf16.msra.mxu0 %v1826
  %1867 = vmatmul.bf16.gmra.mxu0 %v1817
  %v1868 = vpop.f32.mrf.mxu0
  %v1869 = vadd.f32 0.0, %v1868
  %v1870 = vpop.f32.mrf.mxu0
  %v1871 = vadd.f32 0.0, %v1870
  %1872 = vdwg.mxu0
  %1873 = vmatpush.bf16.msra.mxu0 0
  %1874 = vmatpush.bf16.msra.mxu0 0
  %1875 = vmatpush.bf16.msra.mxu0 0
  %1876 = vmatpush.bf16.msra.mxu0 0
  %1877 = vmatpush.bf16.msra.mxu0 0
  %1878 = vmatpush.bf16.msra.mxu0 0
  %1879 = vmatpush.bf16.msra.mxu0 0
  %1880 = vmatpush.bf16.msra.mxu0 %v1829
  %1881 = vmatmul.bf16.gmra.mxu0 %v1817
  %v1882 = vpop.f32.mrf.mxu0
  %v1883 = vadd.f32 0.0, %v1882
  %v1884 = vpop.f32.mrf.mxu0
  %v1885 = vadd.f32 0.0, %v1884
  %1886 = vdwg.mxu0
  %v1887 = vadd.f32 %v1768, %v1841
  %v1888 = vadd.f32 %v1769, %v1855
  %v1889 = vadd.f32 %v1770, %v1869
  %v1890 = vadd.f32 %v1771, %v1883
  %v1891 = vadd.f32 %v1772, %v1843
  %v1892 = vadd.f32 %v1773, %v1857
  %v1893 = vadd.f32 %v1774, %v1871
  %v1894 = vadd.f32 %v1775, %v1885
  %v1895 = vld [vmem:[%s1] sm:$0xf]
  %v1896 = vld [vmem:[%s1 + $0x4] sm:$0xf]
  %v1897 = vld [vmem:[%s1118] sm:$0xff]
  %v1898 = vld [vmem:[%s1118 + $0x8] sm:$0x3]
  %v1901 = vunpack.c.l.b16 %v1895
  %v1902 = vunpack.c.l.b16 %v1896
  %v1903 = vpack.c.b16 %v1902, %v1901
  %1904 = vrot.lane.b32.xlu0 %v1903, 100
  %v1905 = vpop.permute.xlu0 %1904
  %1907 = vst [vmem:[#allocation1] ss:$4 sm:$0xff] %v1897
  %s1909 = scalar_lea.vmem [#allocation1], 32
  %1910 = vst [vmem:[%s1909] ss:$4 sm:$0xff] %v1898
  %v1911 = vld.sshfl [vmem:[#allocation1] sm:$0xff pattern:$0x73625140]
  %v1913 = vld.sshfl [vmem:[#allocation1 + $0x8] sm:$0xff pattern:$0x73625140]
  %v1915 = vld.sshfl [vmem:[#allocation1 + $0x10] sm:$0xff pattern:$0x73625140]
  %v1917 = vld.sshfl [vmem:[#allocation1 + $0x18] sm:$0xff pattern:$0x73625140]
  %v1919 = vld.sshfl [vmem:[#allocation1 + $0x20] sm:$0xff pattern:$0x73625140]
  %1921 = vrot.lane.b32.xlu0 %v1911, 91
  %v1922 = vpop.permute.xlu0 %1921
  %1923 = vrot.lane.b32.xlu0 %v1913, 91
  %v1924 = vpop.permute.xlu0 %1923
  %1925 = vrot.lane.b32.xlu0 %v1915, 91
  %v1926 = vpop.permute.xlu0 %1925
  %1927 = vrot.lane.b32.xlu0 %v1917, 91
  %v1928 = vpop.permute.xlu0 %1927
  %1929 = vrot.lane.b32.xlu0 %v1919, 91
  %v1930 = vpop.permute.xlu0 %1929
  %v1931 = vsel %vm850, %v1922, %v1924
  %v1932 = vsel %vm850, %v1924, %v1926
  %v1933 = vsel %vm850, %v1926, %v1928
  %v1934 = vsel %vm850, %v1928, %v1930
  %v1936 = vsel %vm69, %v1905, 0
  %v1939 = vsel %vm73, %v1931, 0
  %v1942 = vsel %vm73, %v1932, 0
  %v1945 = vsel %vm73, %v1933, 0
  %v1948 = vsel %vm73, %v1934, 0
  %1950 = vmatpush.bf16.msra.mxu0 0
  %1951 = vmatpush.bf16.msra.mxu0 0
  %1952 = vmatpush.bf16.msra.mxu0 0
  %1953 = vmatpush.bf16.msra.mxu0 0
  %1954 = vmatpush.bf16.msra.mxu0 0
  %1955 = vmatpush.bf16.msra.mxu0 0
  %1956 = vmatpush.bf16.msra.mxu0 0
  %1957 = vmatpush.bf16.msra.mxu0 %v1939
  %1958 = vmatmul.bf16.gmra.mxu0 %v1936
  %v1959 = vpop.f32.mrf.mxu0
  %v1960 = vadd.f32 0.0, %v1959
  %v1961 = vpop.f32.mrf.mxu0
  %v1962 = vadd.f32 0.0, %v1961
  %1963 = vdwg.mxu0
  %1964 = vmatpush.bf16.msra.mxu0 0
  %1965 = vmatpush.bf16.msra.mxu0 0
  %1966 = vmatpush.bf16.msra.mxu0 0
  %1967 = vmatpush.bf16.msra.mxu0 0
  %1968 = vmatpush.bf16.msra.mxu0 0
  %1969 = vmatpush.bf16.msra.mxu0 0
  %1970 = vmatpush.bf16.msra.mxu0 0
  %1971 = vmatpush.bf16.msra.mxu0 %v1942
  %1972 = vmatmul.bf16.gmra.mxu0 %v1936
  %v1973 = vpop.f32.mrf.mxu0
  %v1974 = vadd.f32 0.0, %v1973
  %v1975 = vpop.f32.mrf.mxu0
  %v1976 = vadd.f32 0.0, %v1975
  %1977 = vdwg.mxu0
  %1978 = vmatpush.bf16.msra.mxu0 0
  %1979 = vmatpush.bf16.msra.mxu0 0
  %1980 = vmatpush.bf16.msra.mxu0 0
  %1981 = vmatpush.bf16.msra.mxu0 0
  %1982 = vmatpush.bf16.msra.mxu0 0
  %1983 = vmatpush.bf16.msra.mxu0 0
  %1984 = vmatpush.bf16.msra.mxu0 0
  %1985 = vmatpush.bf16.msra.mxu0 %v1945
  %1986 = vmatmul.bf16.gmra.mxu0 %v1936
  %v1987 = vpop.f32.mrf.mxu0
  %v1988 = vadd.f32 0.0, %v1987
  %v1989 = vpop.f32.mrf.mxu0
  %v1990 = vadd.f32 0.0, %v1989
  %1991 = vdwg.mxu0
  %1992 = vmatpush.bf16.msra.mxu0 0
  %1993 = vmatpush.bf16.msra.mxu0 0
  %1994 = vmatpush.bf16.msra.mxu0 0
  %1995 = vmatpush.bf16.msra.mxu0 0
  %1996 = vmatpush.bf16.msra.mxu0 0
  %1997 = vmatpush.bf16.msra.mxu0 0
  %1998 = vmatpush.bf16.msra.mxu0 0
  %1999 = vmatpush.bf16.msra.mxu0 %v1948
  %2000 = vmatmul.bf16.gmra.mxu0 %v1936
  %v2001 = vpop.f32.mrf.mxu0
  %v2002 = vadd.f32 0.0, %v2001
  %v2003 = vpop.f32.mrf.mxu0
  %v2004 = vadd.f32 0.0, %v2003
  %2005 = vdwg.mxu0
  %v2006 = vadd.f32 %v1887, %v1960
  %v2007 = vadd.f32 %v1888, %v1974
  %v2008 = vadd.f32 %v1889, %v1988
  %v2009 = vadd.f32 %v1890, %v2002
  %v2010 = vadd.f32 %v1891, %v1962
  %v2011 = vadd.f32 %v1892, %v1976
  %v2012 = vadd.f32 %v1893, %v1990
  %v2013 = vadd.f32 %v1894, %v2004
  %v2014 = vld [vmem:[%s1] sm:$0xf]
  %v2015 = vld [vmem:[%s1 + $0x4] sm:$0xf]
  %v2016 = vld [vmem:[%s1118] sm:$0xff]
  %v2017 = vld [vmem:[%s1118 + $0x8] sm:$0x3]
  %v2020 = vunpack.c.l.b16 %v2014
  %v2021 = vunpack.c.l.b16 %v2015
  %v2022 = vpack.c.b16 %v2021, %v2020
  %2023 = vrot.lane.b32.xlu0 %v2022, 96
  %v2024 = vpop.permute.xlu0 %2023
  %2026 = vst [vmem:[#allocation1] ss:$4 sm:$0xff] %v2016
  %s2028 = scalar_lea.vmem [#allocation1], 32
  %2029 = vst [vmem:[%s2028] ss:$4 sm:$0xff] %v2017
  %v2030 = vld.sshfl [vmem:[#allocation1] sm:$0xff pattern:$0x73625140]
  %v2032 = vld.sshfl [vmem:[#allocation1 + $0x8] sm:$0xff pattern:$0x73625140]
  %v2034 = vld.sshfl [vmem:[#allocation1 + $0x10] sm:$0xff pattern:$0x73625140]
  %v2036 = vld.sshfl [vmem:[#allocation1 + $0x18] sm:$0xff pattern:$0x73625140]
  %v2038 = vld.sshfl [vmem:[#allocation1 + $0x20] sm:$0xff pattern:$0x73625140]
  %2040 = vrot.lane.b32.xlu0 %v2030, 90
  %v2041 = vpop.permute.xlu0 %2040
  %2042 = vrot.lane.b32.xlu0 %v2032, 90
  %v2043 = vpop.permute.xlu0 %2042
  %2044 = vrot.lane.b32.xlu0 %v2034, 90
  %v2045 = vpop.permute.xlu0 %2044
  %2046 = vrot.lane.b32.xlu0 %v2036, 90
  %v2047 = vpop.permute.xlu0 %2046
  %2048 = vrot.lane.b32.xlu0 %v2038, 90
  %v2049 = vpop.permute.xlu0 %2048
  %v2050 = vsel %vm970, %v2041, %v2043
  %v2051 = vsel %vm970, %v2043, %v2045
  %v2052 = vsel %vm970, %v2045, %v2047
  %v2053 = vsel %vm970, %v2047, %v2049
  %v2055 = vsel %vm69, %v2024, 0
  %v2058 = vsel %vm73, %v2050, 0
  %v2061 = vsel %vm73, %v2051, 0
  %v2064 = vsel %vm73, %v2052, 0
  %v2067 = vsel %vm73, %v2053, 0
  %2069 = vmatpush.bf16.msra.mxu0 0
  %2070 = vmatpush.bf16.msra.mxu0 0
  %2071 = vmatpush.bf16.msra.mxu0 0
  %2072 = vmatpush.bf16.msra.mxu0 0
  %2073 = vmatpush.bf16.msra.mxu0 0
  %2074 = vmatpush.bf16.msra.mxu0 0
  %2075 = vmatpush.bf16.msra.mxu0 0
  %2076 = vmatpush.bf16.msra.mxu0 %v2058
  %2077 = vmatmul.bf16.gmra.mxu0 %v2055
  %v2078 = vpop.f32.mrf.mxu0
  %v2079 = vadd.f32 0.0, %v2078
  %v2080 = vpop.f32.mrf.mxu0
  %v2081 = vadd.f32 0.0, %v2080
  %2082 = vdwg.mxu0
  %2083 = vmatpush.bf16.msra.mxu0 0
  %2084 = vmatpush.bf16.msra.mxu0 0
  %2085 = vmatpush.bf16.msra.mxu0 0
  %2086 = vmatpush.bf16.msra.mxu0 0
  %2087 = vmatpush.bf16.msra.mxu0 0
  %2088 = vmatpush.bf16.msra.mxu0 0
  %2089 = vmatpush.bf16.msra.mxu0 0
  %2090 = vmatpush.bf16.msra.mxu0 %v2061
  %2091 = vmatmul.bf16.gmra.mxu0 %v2055
  %v2092 = vpop.f32.mrf.mxu0
  %v2093 = vadd.f32 0.0, %v2092
  %v2094 = vpop.f32.mrf.mxu0
  %v2095 = vadd.f32 0.0, %v2094
  %2096 = vdwg.mxu0
  %2097 = vmatpush.bf16.msra.mxu0 0
  %2098 = vmatpush.bf16.msra.mxu0 0
  %2099 = vmatpush.bf16.msra.mxu0 0
  %2100 = vmatpush.bf16.msra.mxu0 0
  %2101 = vmatpush.bf16.msra.mxu0 0
  %2102 = vmatpush.bf16.msra.mxu0 0
  %2103 = vmatpush.bf16.msra.mxu0 0
  %2104 = vmatpush.bf16.msra.mxu0 %v2064
  %2105 = vmatmul.bf16.gmra.mxu0 %v2055
  %v2106 = vpop.f32.mrf.mxu0
  %v2107 = vadd.f32 0.0, %v2106
  %v2108 = vpop.f32.mrf.mxu0
  %v2109 = vadd.f32 0.0, %v2108
  %2110 = vdwg.mxu0
  %2111 = vmatpush.bf16.msra.mxu0 0
  %2112 = vmatpush.bf16.msra.mxu0 0
  %2113 = vmatpush.bf16.msra.mxu0 0
  %2114 = vmatpush.bf16.msra.mxu0 0
  %2115 = vmatpush.bf16.msra.mxu0 0
  %2116 = vmatpush.bf16.msra.mxu0 0
  %2117 = vmatpush.bf16.msra.mxu0 0
  %2118 = vmatpush.bf16.msra.mxu0 %v2067
  %2119 = vmatmul.bf16.gmra.mxu0 %v2055
  %v2120 = vpop.f32.mrf.mxu0
  %v2121 = vadd.f32 0.0, %v2120
  %v2122 = vpop.f32.mrf.mxu0
  %v2123 = vadd.f32 0.0, %v2122
  %2124 = vdwg.mxu0
  %v2125 = vadd.f32 %v2006, %v2079
  %v2126 = vadd.f32 %v2007, %v2093
  %v2127 = vadd.f32 %v2008, %v2107
  %v2128 = vadd.f32 %v2009, %v2121
  %v2129 = vadd.f32 %v2010, %v2081
  %v2130 = vadd.f32 %v2011, %v2095
  %v2131 = vadd.f32 %v2012, %v2109
  %v2132 = vadd.f32 %v2013, %v2123
  %v2133 = vmul.f32 %v2125, %v1055
  %v2134 = vmul.f32 %v2126, %v1056
  %v2135 = vmul.f32 %v2127, %v1057
  %v2136 = vmul.f32 %v2128, %v1058
  %v2137 = vmul.f32 %v2129, %v1055
  %v2138 = vmul.f32 %v2130, %v1056
  %v2139 = vmul.f32 %v2131, %v1057
  %v2140 = vmul.f32 %v2132, %v1058
  %v2141 = vld [vmem:[%s4] sm:$0xff]
  %v2142 = vld [vmem:[%s4 + $0x8] sm:$0xff]
  %v2143 = vadd.f32 %v2133, %v2134
  %v2144 = vadd.f32 %v2143, %v2135
  %v2145 = vadd.f32 %v2144, %v2136
  %2146 = vadd.xlane.f32.xlu0 %v2145
  %v2147 = vpop.xlane.xlu0 %2146
  %v2148 = vadd.f32 %v2137, %v2138
  %v2149 = vadd.f32 %v2148, %v2139
  %v2150 = vadd.f32 %v2149, %v2140
  %2151 = vadd.xlane.f32.xlu0 %v2150
  %v2152 = vpop.xlane.xlu0 %2151
  %v2153 = vadd.f32 %v2141, %v2147
  %v2154 = vadd.f32 %v2142, %v2152
  %2155 = vst.msk [vmem:[%s4] sm:$0xff] %vm1085, %v2153
  %2156 = vst.msk [vmem:[%s4 + $0x8] sm:$0xff] %vm1085, %v2154
  %v2157 = vld [vmem:[%s5] sm:$0xff]
  %v2158 = vld [vmem:[%s5 + $0x8] sm:$0xff]
  %v2159 = vmul.f32 %v2133, %v2125
  %v2160 = vmul.f32 %v2134, %v2126
  %v2161 = vmul.f32 %v2135, %v2127
  %v2162 = vmul.f32 %v2136, %v2128
  %v2163 = vmul.f32 %v2137, %v2129
  %v2164 = vmul.f32 %v2138, %v2130
  %v2165 = vmul.f32 %v2139, %v2131
  %v2166 = vmul.f32 %v2140, %v2132
  %v2167 = vadd.f32 %v2159, %v2160
  %v2168 = vadd.f32 %v2167, %v2161
  %v2169 = vadd.f32 %v2168, %v2162
  %2170 = vadd.xlane.f32.xlu0 %v2169
  %v2171 = vpop.xlane.xlu0 %2170
  %v2172 = vadd.f32 %v2163, %v2164
  %v2173 = vadd.f32 %v2172, %v2165
  %v2174 = vadd.f32 %v2173, %v2166
  %2175 = vadd.xlane.f32.xlu0 %v2174
  %v2176 = vpop.xlane.xlu0 %2175
  %v2177 = vadd.f32 %v2157, %v2171
  %v2178 = vadd.f32 %v2158, %v2176
  %2179 = vst.msk [vmem:[%s5] sm:$0xff] %vm1085, %v2177
  %2180 = vst.msk [vmem:[%s5 + $0x8] sm:$0xff] %vm1085, %v2178
  %v2181 = vpack.c.bf16 %v2126, %v2125
  %v2182 = vpack.c.bf16 %v2128, %v2127
  %s2183 = scalar_lea.vmem %s3, 16
  %2184 = vst [vmem:[%s2183] sm:$0xff] %v2181
  %2185 = vst [vmem:[%s2183 + $0x8] sm:$0xff] %v2182
  // Predicated region
  $region18: #{basic_block_forward.3} parent=0 // pred_check
    _
  $region19: #{basic_block_forward.3} parent=0 // pred_check_branch
    %2187 = sbr.rel (0) target = $region21
  $region20: #{basic_block_forward.3} parent=0 // pred_region
    _
  $region21: #{basic_block_forward.3} parent=0 // pred_fallthru
    _
  // Predicated region
  $region22: #{basic_block_forward.3} parent=0 // pred_check
    _
  $region23: #{basic_block_forward.3} parent=0 // pred_check_branch
    %2189 = sbr.rel (0) target = $region25
  $region24: #{basic_block_forward.3} parent=0 // pred_region
    _
  $region25: #{basic_block_forward.3} parent=0 // pred_fallthru
    _
  // Predicated region
  $region26: #{basic_block_forward.3} parent=0 // pred_check
    _
  $region27: #{basic_block_forward.3} parent=0 // pred_check_branch
    %2191 = sbr.rel (0) target = $region29
  $region28: #{basic_block_forward.3} parent=0 // pred_region
    _
  $region29: #{basic_block_forward.3} parent=0 // pred_fallthru
    _
  // Predicated region
  $region30: #{basic_block_forward.3} parent=0 // pred_check
    _
  $region31: #{basic_block_forward.3} parent=0 // pred_check_branch
    %2193 = sbr.rel (0) target = $region33
  $region32: #{basic_block_forward.3} parent=0 // pred_region
    _
  $region33: #{basic_block_forward.3} parent=0 // pred_fallthru
    _
  // Predicated region
  $region34: #{basic_block_forward.3} parent=0 // pred_check
    _
  $region35: #{basic_block_forward.3} parent=0 // pred_check_branch
    %2195 = sbr.rel (0) target = $region37
  $region36: #{basic_block_forward.3} parent=0 // pred_region
    _
  $region37: #{basic_block_forward.3} parent=0 // pred_fallthru
    _
  // Predicated region
  $region38: #{basic_block_forward.3} parent=0 // pred_check
    _
  $region39: #{basic_block_forward.3} parent=0 // pred_check_branch
    %2197 = sbr.rel (0) target = $region41
  $region40: #{basic_block_forward.3} parent=0 // pred_region
    _
  $region41: #{basic_block_forward.3} parent=0 // pred_fallthru
    _

</llo_original>
